<compile_context>
chip_gen: v6e
topology: v6e:2x2x1
jax: 0.10.0
libtpu: 0.0.40
codegen_flags: <defaults>
</compile_context>

<pallas_src>
import functools

import jax
import jax.numpy as jnp
from jax import lax
from jax.experimental import pallas as pl
from jax.experimental.pallas import tpu as pltpu

C_IN = 128          # fixed by the module definition
C_HID = 128
C_OBJ = 2           # objectness_loss_type == 'cross_entropy'
C_BOX = 6
C_CEN = 1
C_OUT = C_OBJ + C_BOX + C_CEN   # 9 real output rows
C_OUT_PAD = 16                  # padded to a sublane multiple -> unmasked vst
USE_EXP = False     # cfg.MODEL.RPN.USE_EXP


def is_v5e():
    """Best-effort generation check: v5e's 128x128 MXUs prefer split layer 2."""
    try:
        kind = jax.devices()[0].device_kind.lower()
        return ("v5 lite" in kind) or ("v5e" in kind) or ("v5litepod" in kind)
    except Exception:
        return False


# ------------------------------- kernel -----------------------------------

def _rpn_head_kernel(x_ref, w1_ref, b1_ref, w2_ref, b2_ref, wp_ref, bp_ref,
                     out_ref, *, use_exp: bool, split_layer2: bool):
    # (C_IN, TL) tile, lanes = L. Cast to bf16 so matmuls take the bf16 MXU path.
    x = x_ref[0].astype(jnp.bfloat16)

    def mm(w, a):  # (Cout, Cin) @ (Cin, TL) -> (Cout, TL), f32 accumulate
        return lax.dot_general(w, a, (((1,), (0,)), ((), ())),
                               preferred_element_type=jnp.float32)

    # Fused layer 1 (cls rows 0:128, reg rows 128:256) + folded BN + ReLU.
    a1 = jnp.maximum(mm(w1_ref[...], x) + b1_ref[...], 0.0)          # (256,TL) f32
    a1 = a1.astype(jnp.bfloat16)

    wp = wp_ref[...]
    bp = bp_ref[...]
    if split_layer2:
        # v5e: two independent K=128 matmuls (zero blocks of the block-diagonal
        # weight would be real passes through the 128x128 MXUs).
        b2 = b2_ref[...]
        hc = jnp.maximum(mm(w2_ref[0], a1[:C_HID]) + b2[:C_HID], 0.0)
        hr = jnp.maximum(mm(w2_ref[1], a1[C_HID:]) + b2[C_HID:], 0.0)
        hc = hc.astype(jnp.bfloat16)
        hr = hr.astype(jnp.bfloat16)
        # obj reads cls features, box/cen read reg features (block structure of wp).
        p = mm(wp[:, :C_HID], hc) + mm(wp[:, C_HID:], hr) + bp        # (16,TL) f32
    else:
        # v6e/v7x: one 256-wide block-diagonal matmul fills the 256x256 MXU.
        a2 = jnp.maximum(mm(w2_ref[...], a1) + b2_ref[...], 0.0)      # (256,TL) f32
        a2 = a2.astype(jnp.bfloat16)
        p = mm(wp, a2) + bp                                           # (16,TL) f32

    if use_exp:
        # Row-masked exp (EUP slot) + select (VPU): no concatenate/relayout.
        rows = lax.broadcasted_iota(jnp.int32, p.shape, 0)
        box_rows = (rows >= C_OBJ) & (rows < C_OBJ + C_BOX)
        p = jnp.where(box_rows, jnp.exp(p), p)

    out_ref[0] = p


# ------------------------------- wrapper -----------------------------------

def rpn_head_forward(xyz, features_ncl, packed_params, *, l_tile=2048):
    """
    xyz          : (N, L, 3) -- unused (fuse_xyz == 0), kept for parity.
    features_ncl : (N, 128, L) in PyTorch NCL layout, any float dtype
                   (kept as-is; the kernel casts tiles to bf16 for the MXU).
    Returns (pred_objectness_logits, pred_box_reg, None, None, pred_centerness)
    with shapes ((N, L, 2), (N, L, 6), None, None, (N, L)).
    """
    del xyz
    x = features_ncl                                      # native dtype, NCL
    N, cin, L = x.shape
    assert cin == C_IN
    assert l_tile % 128 == 0, "l_tile must be a multiple of 128"

    # Tile selection: as large as possible (amortize per-step overhead), but
    # keep >= 2 grid steps when N == 1 so both v7x TensorCores get work.
    Lp = -(-L // 128) * 128
    tl = min(l_tile, Lp)
    if N == 1 and (Lp // tl) < 2 and Lp >= 256:
        tl = max(128, (Lp // 2) // 128 * 128)
    Lp = -(-L // tl) * tl
    if Lp != L:
        x = jnp.pad(x, ((0, 0), (0, 0), (0, Lp - L)))

    w1, b1, w2, b2, wp, bp = packed_params
    split_layer2 = (w2.ndim == 3)
    kernel = functools.partial(_rpn_head_kernel, use_exp=USE_EXP,
                               split_layer2=split_layer2)

    def rep(shape):  # small parameter replicated across the whole grid
        nd = len(shape)
        return pl.BlockSpec(shape, lambda n, l: (0,) * nd)

    in_bytes = jnp.dtype(x.dtype).itemsize
    param_bytes = sum(int(a.size) * jnp.dtype(a.dtype).itemsize
                      for a in packed_params)
    cost = pl.CostEstimate(
        flops=2 * N * Lp * (2 * C_HID * C_IN + 2 * C_HID * 2 * C_HID
                            + C_OUT_PAD * 2 * C_HID),
        transcendentals=0,
        bytes_accessed=N * Lp * (C_IN * in_bytes + C_OUT_PAD * 4) + param_bytes,
    )

    out = pl.pallas_call(
        kernel,
        out_shape=jax.ShapeDtypeStruct((N, C_OUT_PAD, Lp), jnp.float32),
        grid_spec=pltpu.PrefetchScalarGridSpec(
            num_scalar_prefetch=0,
            grid=(N, Lp // tl),
            in_specs=[pl.BlockSpec((1, C_IN, tl), lambda n, l: (n, 0, l)),
                      rep(w1.shape), rep(b1.shape),
                      rep(w2.shape), rep(b2.shape),
                      rep(wp.shape), rep(bp.shape)],
            out_specs=pl.BlockSpec((1, C_OUT_PAD, tl), lambda n, l: (n, 0, l)),
        ),
        compiler_params=pltpu.CompilerParams(
            dimension_semantics=("parallel", "parallel")),
        cost_estimate=cost,
    )(x, w1, b1, w2, b2, wp, bp)

    out = out[:, :, :L]                                            # drop pad
    obj = jnp.transpose(out[:, :C_OBJ, :], (0, 2, 1))              # (N, L, 2)
    box = jnp.transpose(out[:, C_OBJ:C_OBJ + C_BOX, :], (0, 2, 1)) # (N, L, 6)
    cen = out[:, C_OBJ + C_BOX, :]                                 # (N, L)
    return obj, box, None, None, cen


# ------------------------- parameter construction --------------------------

def _fold_bn(w, b, gamma, beta, mean, var, eps=1e-5):
    """Fold inference-mode BatchNorm1d into the preceding 1x1 Conv1d."""
    scale = gamma / jnp.sqrt(var + eps)
    return w * scale[:, None], (b - mean) * scale + beta


def make_raw_params(key):
    """Deterministic synthetic weights mirroring the module's __init__ shapes."""
    ks = jax.random.split(key, 16)

    def conv(k, cout, cin, std=0.05):
        return jax.random.normal(k, (cout, cin), jnp.float32) * std

    def bias(k, cout, std=0.05):
        return jax.random.normal(k, (cout,), jnp.float32) * std

    def bn(k, c):
        kg, kb, km, kv = jax.random.split(k, 4)
        gamma = 1.0 + 0.1 * jax.random.normal(kg, (c,), jnp.float32)
        beta = 0.1 * jax.random.normal(kb, (c,), jnp.float32)
        mean = 0.1 * jax.random.normal(km, (c,), jnp.float32)
        var = 1.0 + 0.1 * jax.random.uniform(kv, (c,), jnp.float32)
        return gamma, beta, mean, var

    w1c, b1c = _fold_bn(conv(ks[0], C_HID, C_IN), bias(ks[1], C_HID), *bn(ks[2], C_HID))
    w2c, b2c = _fold_bn(conv(ks[3], C_HID, C_HID), bias(ks[4], C_HID), *bn(ks[5], C_HID))
    w1r, b1r = _fold_bn(conv(ks[6], C_HID, C_IN), bias(ks[7], C_HID), *bn(ks[8], C_HID))
    w2r, b2r = _fold_bn(conv(ks[9], C_HID, C_HID), bias(ks[10], C_HID), *bn(ks[11], C_HID))
    wobj = jax.random.normal(ks[12], (C_OBJ, C_HID), jnp.float32) * 0.001
    wbox = jax.random.normal(ks[13], (C_BOX, C_HID), jnp.float32) * 0.001
    wcen = jax.random.normal(ks[14], (C_CEN, C_HID), jnp.float32) * 0.001
    return dict(w1c=w1c, b1c=b1c, w2c=w2c, b2c=b2c,
                w1r=w1r, b1r=b1r, w2r=w2r, b2r=b2r,
                wobj=wobj, bobj=jnp.zeros((C_OBJ,), jnp.float32),
                wbox=wbox, bbox=jnp.zeros((C_BOX,), jnp.float32),
                wcen=wcen, bcen=jnp.zeros((C_CEN,), jnp.float32))


def pack_params(raw, *, split_layer2=False):
    """Fuse per-layer weights into the kernel's NCL-friendly bf16 layout."""
    bf16, f32 = jnp.bfloat16, jnp.float32
    # Layer 1: stack cls/reg along Cout.
    w1 = jnp.concatenate([raw['w1c'], raw['w1r']], axis=0).astype(bf16)   # (256,128)
    b1 = jnp.concatenate([raw['b1c'], raw['b1r']], axis=0).reshape(-1, 1).astype(f32)
    # Layer 2: block-diagonal (v6e/v7x) or stacked per-branch (v5e).
    if split_layer2:
        w2 = jnp.stack([raw['w2c'], raw['w2r']], axis=0).astype(bf16)     # (2,128,128)
    else:
        w2 = jnp.zeros((2 * C_HID, 2 * C_HID), f32)
        w2 = w2.at[:C_HID, :C_HID].set(raw['w2c'])
        w2 = w2.at[C_HID:, C_HID:].set(raw['w2r'])
        w2 = w2.astype(bf16)                                              # (256,256)
    b2 = jnp.concatenate([raw['b2c'], raw['b2r']], axis=0).reshape(-1, 1).astype(f32)
    # Predictors: obj reads cls features (cols 0:128), box/cen read reg
    # features (cols 128:256); rows padded 9 -> 16 for aligned stores.
    wp = jnp.zeros((C_OUT_PAD, 2 * C_HID), f32)
    wp = wp.at[:C_OBJ, :C_HID].set(raw['wobj'])
    wp = wp.at[C_OBJ:C_OBJ + C_BOX, C_HID:].set(raw['wbox'])
    wp = wp.at[C_OBJ + C_BOX:C_OUT, C_HID:].set(raw['wcen'])
    wp = wp.astype(bf16)
    bp = jnp.zeros((C_OUT_PAD, 1), f32)
    bp = bp.at[:C_OUT, 0].set(
        jnp.concatenate([raw['bobj'], raw['bbox'], raw['bcen']], axis=0))
    return (w1, b1, w2, b2, wp, bp)


# ------------------------------- reference ---------------------------------

def reference_forward(features_ncl, raw):
    """Plain-JAX (unfused) reference using the same bf16-rounded weights."""
    def q(w):  # match the kernel's bf16 weight quantization
        return w.astype(jnp.bfloat16).astype(jnp.float32)

    x = jnp.transpose(features_ncl, (0, 2, 1)).astype(jnp.float32)   # (N,L,128)
    hi = jax.lax.Precision.HIGHEST

    def dense(a, w, b):
        return jnp.einsum('nlc,oc->nlo', a, q(w), precision=hi) + b

    h = jnp.maximum(dense(x, raw['w1c'], raw['b1c']), 0.0)
    h = jnp.maximum(dense(h, raw['w2c'], raw['b2c']), 0.0)
    obj = dense(h, raw['wobj'], raw['bobj'])
    g = jnp.maximum(dense(x, raw['w1r'], raw['b1r']), 0.0)
    g = jnp.maximum(dense(g, raw['w2r'], raw['b2r']), 0.0)
    box = dense(g, raw['wbox'], raw['bbox'])
    if USE_EXP:
        box = jnp.exp(box)
    cen = dense(g, raw['wcen'], raw['bcen'])[..., 0]
    return obj, box, cen


if __name__ == "__main__":
    key = jax.random.PRNGKey(0)
    k_xyz, k_feat, k_param = jax.random.split(key, 3)

    # Small shapes: N=2 scenes, 768 points, 128-channel bf16 features (NCL).
    N, L = 2, 768
    xyz = jax.random.normal(k_xyz, (N, L, 3), jnp.float32)
    features = jax.random.normal(
        k_feat, (N, C_IN, L), jnp.float32).astype(jnp.bfloat16)       # NCL, bf16

    raw = make_raw_params(k_param)
    ref_obj, ref_box, ref_cen = reference_forward(features, raw)

    def run_and_check(packed, l_tile):
        obj, box, _, _, cen = rpn_head_forward(xyz, features, packed, l_tile=l_tile)
        jax.block_until_ready((obj, box, cen))
        assert obj.shape == (N, L, C_OBJ)
        assert box.shape == (N, L, C_BOX)
        assert cen.shape == (N, L)
        assert jnp.allclose(obj, ref_obj, atol=2e-3, rtol=3e-2)
        assert jnp.allclose(box, ref_box, atol=2e-3, rtol=3e-2)
        assert jnp.allclose(cen, ref_cen, atol=2e-3, rtol=3e-2)

    split_default = is_v5e()
    # Generation-appropriate layer-2 form, big tile (grid (2,1)).
    run_and_check(pack_params(raw, split_layer2=split_default), l_tile=2048)
    # Other layer-2 codegen path (correctness coverage on any generation).
    run_and_check(pack_params(raw, split_layer2=not split_default), l_tile=2048)
    # Multi-tile + ragged-L padding path (768 -> 1024, grid (2,2)).
    run_and_check(pack_params(raw, split_layer2=split_default), l_tile=512)

    print("KERNEL_OK")
</pallas_src>

<mosaic_0001>
module attributes {stable_mosaic.version = 11 : i64} {
  func.func @_rpn_head_kernel(%arg0: i32, %arg1: i32, %arg2: memref<1x128x768xbf16, #tpu.memory_space<vmem>>, %arg3: memref<256x128xbf16, #tpu.memory_space<vmem>>, %arg4: memref<256x1xf32, #tpu.memory_space<vmem>>, %arg5: memref<256x256xbf16, #tpu.memory_space<vmem>>, %arg6: memref<256x1xf32, #tpu.memory_space<vmem>>, %arg7: memref<16x256xbf16, #tpu.memory_space<vmem>>, %arg8: memref<16x1xf32, #tpu.memory_space<vmem>>, %arg9: memref<1x16x768xf32, #tpu.memory_space<vmem>>) attributes {dimension_semantics = [#tpu.dimension_semantics<parallel>, #tpu.dimension_semantics<parallel>], iteration_bounds = array<i64: 2, 1>, scalar_prefetch = 0 : i64, scratch_operands = 0 : i64, tpu.core_type = #tpu.core_type<tc>, window_params = [{transform_indices = @transform_0, window_bounds = array<i64: 1, 128, 768>}, {pipeline_mode = #tpu.pipeline_mode<synchronous>, transform_indices = @transform_1, window_bounds = array<i64: 256, 128>}, {pipeline_mode = #tpu.pipeline_mode<synchronous>, transform_indices = @transform_2, window_bounds = array<i64: 256, 1>}, {pipeline_mode = #tpu.pipeline_mode<synchronous>, transform_indices = @transform_3, window_bounds = array<i64: 256, 256>}, {pipeline_mode = #tpu.pipeline_mode<synchronous>, transform_indices = @transform_4, window_bounds = array<i64: 256, 1>}, {pipeline_mode = #tpu.pipeline_mode<synchronous>, transform_indices = @transform_5, window_bounds = array<i64: 16, 256>}, {pipeline_mode = #tpu.pipeline_mode<synchronous>, transform_indices = @transform_6, window_bounds = array<i64: 16, 1>}, {transform_indices = @transform_7, window_bounds = array<i64: 1, 16, 768>}]} {
    %c0 = arith.constant 0 : index
    %c0_0 = arith.constant 0 : index
    %c0_1 = arith.constant 0 : index
    %0 = vector.load %arg2[%c0, %c0_0, %c0_1] : memref<1x128x768xbf16, #tpu.memory_space<vmem>>, vector<1x128x768xbf16>
    %1 = vector.shape_cast %0 : vector<1x128x768xbf16> to vector<128x768xbf16>
    %c0_2 = arith.constant 0 : index
    %c0_3 = arith.constant 0 : index
    %2 = vector.load %arg3[%c0_2, %c0_3] : memref<256x128xbf16, #tpu.memory_space<vmem>>, vector<256x128xbf16>
    %cst = arith.constant dense<0.000000e+00> : vector<256x768xf32>
    %3 = tpu.matmul %2, %1, %cst {dimension_numbers = #tpu.dot_dimension_numbers<[1], [0], [0], [1], [0, 0, 1, 1], [], []>} : vector<256x128xbf16>, vector<128x768xbf16>, vector<256x768xf32> -> vector<256x768xf32>
    %c0_4 = arith.constant 0 : index
    %c0_5 = arith.constant 0 : index
    %4 = vector.load %arg4[%c0_4, %c0_5] : memref<256x1xf32, #tpu.memory_space<vmem>>, vector<256x1xf32>
    %5 = vector.broadcast %4 : vector<256x1xf32> to vector<256x768xf32>
    %6 = arith.addf %3, %5 : vector<256x768xf32>
    %cst_6 = arith.constant 0.000000e+00 : f32
    %7 = vector.broadcast %cst_6 : f32 to vector<256x768xf32>
    %8 = arith.maximumf %6, %7 : vector<256x768xf32>
    %9 = arith.truncf %8 : vector<256x768xf32> to vector<256x768xbf16>
    %c0_7 = arith.constant 0 : index
    %c0_8 = arith.constant 0 : index
    %10 = vector.load %arg7[%c0_7, %c0_8] : memref<16x256xbf16, #tpu.memory_space<vmem>>, vector<16x256xbf16>
    %c0_9 = arith.constant 0 : index
    %c0_10 = arith.constant 0 : index
    %11 = vector.load %arg8[%c0_9, %c0_10] : memref<16x1xf32, #tpu.memory_space<vmem>>, vector<16x1xf32>
    %c0_11 = arith.constant 0 : index
    %c0_12 = arith.constant 0 : index
    %12 = vector.load %arg5[%c0_11, %c0_12] : memref<256x256xbf16, #tpu.memory_space<vmem>>, vector<256x256xbf16>
    %cst_13 = arith.constant dense<0.000000e+00> : vector<256x768xf32>
    %13 = tpu.matmul %12, %9, %cst_13 {dimension_numbers = #tpu.dot_dimension_numbers<[1], [0], [0], [1], [0, 0, 1, 1], [], []>} : vector<256x256xbf16>, vector<256x768xbf16>, vector<256x768xf32> -> vector<256x768xf32>
    %c0_14 = arith.constant 0 : index
    %c0_15 = arith.constant 0 : index
    %14 = vector.load %arg6[%c0_14, %c0_15] : memref<256x1xf32, #tpu.memory_space<vmem>>, vector<256x1xf32>
    %15 = vector.broadcast %14 : vector<256x1xf32> to vector<256x768xf32>
    %16 = arith.addf %13, %15 : vector<256x768xf32>
    %cst_16 = arith.constant 0.000000e+00 : f32
    %17 = vector.broadcast %cst_16 : f32 to vector<256x768xf32>
    %18 = arith.maximumf %16, %17 : vector<256x768xf32>
    %19 = arith.truncf %18 : vector<256x768xf32> to vector<256x768xbf16>
    %cst_17 = arith.constant dense<0.000000e+00> : vector<16x768xf32>
    %20 = tpu.matmul %10, %19, %cst_17 {dimension_numbers = #tpu.dot_dimension_numbers<[1], [0], [0], [1], [0, 0, 1, 1], [], []>} : vector<16x256xbf16>, vector<256x768xbf16>, vector<16x768xf32> -> vector<16x768xf32>
    %21 = vector.broadcast %11 : vector<16x1xf32> to vector<16x768xf32>
    %22 = arith.addf %20, %21 : vector<16x768xf32>
    %c0_18 = arith.constant 0 : index
    %c0_19 = arith.constant 0 : index
    %c0_20 = arith.constant 0 : index
    %23 = vector.load %arg9[%c0_18, %c0_19, %c0_20] : memref<1x16x768xf32, #tpu.memory_space<vmem>>, vector<1x16x768xf32>
    %24 = vector.shape_cast %23 : vector<1x16x768xf32> to vector<16x768xf32>
    %25 = vector.shape_cast %22 : vector<16x768xf32> to vector<1x16x768xf32>
    tpu.vector_store %arg9[%c0_18, %c0_19, %c0_20], %25 {strides = array<i32>} : memref<1x16x768xf32, #tpu.memory_space<vmem>>, vector<1x16x768xf32>,
    return
  }
  func.func @transform_0(%arg0: i32, %arg1: i32) -> (i32, i32, i32) {
    %c0_i32 = arith.constant 0 : i32
    %c0_i32_0 = arith.constant 0 : i32
    return %arg0, %c0_i32, %arg1 : i32, i32, i32
  }
  func.func @transform_1(%arg0: i32, %arg1: i32) -> (i32, i32) {
    %c0_i32 = arith.constant 0 : i32
    %c0_i32_0 = arith.constant 0 : i32
    %c0_i32_1 = arith.constant 0 : i32
    return %c0_i32, %c0_i32_0 : i32, i32
  }
  func.func @transform_2(%arg0: i32, %arg1: i32) -> (i32, i32) {
    %c0_i32 = arith.constant 0 : i32
    %c0_i32_0 = arith.constant 0 : i32
    %c0_i32_1 = arith.constant 0 : i32
    return %c0_i32, %c0_i32_0 : i32, i32
  }
  func.func @transform_3(%arg0: i32, %arg1: i32) -> (i32, i32) {
    %c0_i32 = arith.constant 0 : i32
    %c0_i32_0 = arith.constant 0 : i32
    %c0_i32_1 = arith.constant 0 : i32
    return %c0_i32, %c0_i32_0 : i32, i32
  }
  func.func @transform_4(%arg0: i32, %arg1: i32) -> (i32, i32) {
    %c0_i32 = arith.constant 0 : i32
    %c0_i32_0 = arith.constant 0 : i32
    %c0_i32_1 = arith.constant 0 : i32
    return %c0_i32, %c0_i32_0 : i32, i32
  }
  func.func @transform_5(%arg0: i32, %arg1: i32) -> (i32, i32) {
    %c0_i32 = arith.constant 0 : i32
    %c0_i32_0 = arith.constant 0 : i32
    %c0_i32_1 = arith.constant 0 : i32
    return %c0_i32, %c0_i32_0 : i32, i32
  }
  func.func @transform_6(%arg0: i32, %arg1: i32) -> (i32, i32) {
    %c0_i32 = arith.constant 0 : i32
    %c0_i32_0 = arith.constant 0 : i32
    %c0_i32_1 = arith.constant 0 : i32
    return %c0_i32, %c0_i32_0 : i32, i32
  }
  func.func @transform_7(%arg0: i32, %arg1: i32) -> (i32, i32, i32) {
    %c0_i32 = arith.constant 0 : i32
    %c0_i32_0 = arith.constant 0 : i32
    return %arg0, %c0_i32, %arg1 : i32, i32, i32
  }
}

</mosaic_0001>

<llo_original>
// kernel: tpu_custom_call.1
$region0: #{tpu_custom_call.1}
  #allocation0 [shape = 'u32[]', space=smem, size = 0x4, offset = 0x4, fixed_abs, tag = 'smem constant byte address 0x4 - core index']
  #allocation1 [shape = 'u32[144,128]{1,0:T(1,128)}', space=vmem, size = 0x12000, scoped, tag = 'internal scratch']
  %s0 = inlined_call_operand.hbm [shape: bf16[2,128,768], index: 0, kind: input, shape index: {}]
  %s1 = inlined_call_operand.vmem [shape: bf16[256,128], index: 1, kind: input, shape index: {}]
  %s2 = inlined_call_operand.vmem [shape: f32[256,1], index: 2, kind: input, shape index: {}]
  %s3 = inlined_call_operand.vmem [shape: bf16[256,256], index: 3, kind: input, shape index: {}]
  %s4 = inlined_call_operand.vmem [shape: f32[256,1], index: 4, kind: input, shape index: {}]
  %s5 = inlined_call_operand.vmem [shape: bf16[16,256], index: 5, kind: input, shape index: {}]
  %s6 = inlined_call_operand.vmem [shape: f32[16,1], index: 6, kind: input, shape index: {}]
  %s7 = inlined_call_operand.hbm [shape: f32[2,16,768], index: 7, kind: output, shape index: {}]
  %s8 = sld [smem:[#allocation0]]
  $region65: #{tpu_custom_call.1} parent=0
    _
  %s10 = ssub.s32 1, %s8
  %s11 = scalar_select 0, %s10, %s8
  $region1: #{tpu_custom_call.1} parent=0
    #allocation2 [shape = 'u8[393216]{0}', space=vmem, size = 0x60000, scoped, tag = 'input window, operand 0']
    #allocation3 [shape = 's32[2]{0}', space=sflag, size = 0x8, scoped, tag = 'scoped memory for tpu_custom_call.1']
    #allocation4 [shape = 's32[2]{0}', space=sflag, size = 0x8, scoped, tag = 'scoped memory for tpu_custom_call.1']
    #allocation5 [shape = 'u8[98304]{0}', space=vmem, size = 0x18000, scoped, tag = 'output window, operand 0']
    %12 = vsyncpa [#allocation3], 0
    %s13 = scalar_lea.sflag [#allocation3], 1
    %14 = vsyncpa %s13, 0
    %15 = vsyncpa [#allocation4], 0
    %s16 = scalar_lea.sflag [#allocation4], 1
    %17 = vsyncpa %s16, 0
    loop: start=0, step=1, limit=4
    $region2: #{tpu_custom_call.1} parent=1 // loop_pre_header
      _
    $region3: #{tpu_custom_call.1} parent=1 // loop_header
      %s19 = sphi 0, %s23
      %p20 = scmp.ge.s32.totalorder %s19, 4
      %s26 = sphi 0, %s38
      %s27 = sphi 0, %s34
      %s28 = sphi 0, %s26
      %s29 = sphi 0, %s27
      %s30 = sphi 0, %s28
      %s31 = sphi 0, %s29
      %s43 = sphi 0, %s45
      %s46 = sphi 0, %s43
      %s47 = sphi 0, %s46
      %s63 = sphi 0, %s47
      %s67 = sphi 0, %s67
      %s69 = sphi 0, %s67
      %s70 = sphi 0, %s69
      %s84 = sphi 0, %s70
      %s88 = sphi 0, %s88
      %s90 = sphi 0, %s88
      %s91 = sphi 0, %s90
      %s105 = sphi 0, %s91
      %s109 = sphi 0, %s109
      %s111 = sphi 0, %s109
      %s112 = sphi 0, %s111
      %s126 = sphi 0, %s112
      %s130 = sphi 0, %s130
      %s132 = sphi 0, %s130
      %s133 = sphi 0, %s132
      %s147 = sphi 0, %s133
      %s151 = sphi 0, %s151
      %s153 = sphi 0, %s151
      %s154 = sphi 0, %s153
      %s168 = sphi 0, %s154
      %s172 = sphi 0, %s172
      %s174 = sphi 0, %s172
      %s175 = sphi 0, %s174
      %s189 = sphi 0, %s175
      %s197 = sphi 0, %s199
      %s200 = sphi 0, %s197
      %s201 = sphi 0, %s200
      %s217 = sphi 0, %s201
    $region4: #{tpu_custom_call.1} parent=1 // loop_header_branch
      %22 = sbr.rel (%p20) target = $region8
    $region5: #{tpu_custom_call.1} parent=1 // loop_body
      %s24 = ssub.s32 %s19, 1
      %s25 = ssub.s32 %s19, 2
      %s32 = sadd.s32 1, %s27
      %p33 = scmp.ge.s32.totalorder %s32, 1
      %s34 = scalar_select %p33, 0, %s32
      %s35 = sadd.s32 1, %s26
      %s36 = scalar_select %p33, %s35, %s26
      %p37 = scmp.ge.s32.totalorder %s36, 2
      %s38 = scalar_select %p37, 0, %s36
      %s39 = ssub.s32 %s26, %s38
      %s40 = ssub.s32 %s27, %s34
      %s41 = sor.u32 %s39, %s40
      %p42 = scmp.eq.s32.totalorder %s41, 0
      %s44 = sadd.s32 %s43, 1
      %s45 = scalar_select %p42, %s43, %s44
      %p48 = pneg %p42
      %p49 = scmp.eq.s32.totalorder %s19, 1
      %p50 = por %p48, %p49
      %p51 = scmp.ne.s32.totalorder %s43, %s46
      %p52 = scmp.eq.s32.totalorder %s19, 0
      %p53 = por %p51, %p52
      %p54 = scmp.ne.s32.totalorder %s43, %s46
      %p55 = scmp.eq.s32.totalorder %s24, 1
      %p56 = por %p54, %p55
      %p57 = scmp.ne.s32.totalorder %s46, %s47
      %p58 = scmp.eq.s32.totalorder %s24, 0
      %p59 = por %p57, %p58
      %p60 = scmp.ne.s32.totalorder %s46, %s47
      %p61 = scmp.eq.s32.totalorder %s25, 1
      %p62 = por %p60, %p61
      %p64 = scmp.ne.s32.totalorder %s47, %s63
      %p65 = scmp.eq.s32.totalorder %s25, 0
      %p66 = por %p64, %p65
      %s68 = sadd.s32 %s67, 1
      %p71 = scmp.eq.s32.totalorder %s19, 1
      %p72 = scmp.ne.s32.totalorder %s67, %s69
      %p73 = scmp.eq.s32.totalorder %s19, 0
      %p74 = por %p72, %p73
      %p75 = scmp.ne.s32.totalorder %s67, %s69
      %p76 = scmp.eq.s32.totalorder %s24, 1
      %p77 = por %p75, %p76
      %p78 = scmp.ne.s32.totalorder %s69, %s70
      %p79 = scmp.eq.s32.totalorder %s24, 0
      %p80 = por %p78, %p79
      %p81 = scmp.ne.s32.totalorder %s69, %s70
      %p82 = scmp.eq.s32.totalorder %s25, 1
      %p83 = por %p81, %p82
      %p85 = scmp.ne.s32.totalorder %s70, %s84
      %p86 = scmp.eq.s32.totalorder %s25, 0
      %p87 = por %p85, %p86
      %s89 = sadd.s32 %s88, 1
      %p92 = scmp.eq.s32.totalorder %s19, 1
      %p93 = scmp.ne.s32.totalorder %s88, %s90
      %p94 = scmp.eq.s32.totalorder %s19, 0
      %p95 = por %p93, %p94
      %p96 = scmp.ne.s32.totalorder %s88, %s90
      %p97 = scmp.eq.s32.totalorder %s24, 1
      %p98 = por %p96, %p97
      %p99 = scmp.ne.s32.totalorder %s90, %s91
      %p100 = scmp.eq.s32.totalorder %s24, 0
      %p101 = por %p99, %p100
      %p102 = scmp.ne.s32.totalorder %s90, %s91
      %p103 = scmp.eq.s32.totalorder %s25, 1
      %p104 = por %p102, %p103
      %p106 = scmp.ne.s32.totalorder %s91, %s105
      %p107 = scmp.eq.s32.totalorder %s25, 0
      %p108 = por %p106, %p107
      %s110 = sadd.s32 %s109, 1
      %p113 = scmp.eq.s32.totalorder %s19, 1
      %p114 = scmp.ne.s32.totalorder %s109, %s111
      %p115 = scmp.eq.s32.totalorder %s19, 0
      %p116 = por %p114, %p115
      %p117 = scmp.ne.s32.totalorder %s109, %s111
      %p118 = scmp.eq.s32.totalorder %s24, 1
      %p119 = por %p117, %p118
      %p120 = scmp.ne.s32.totalorder %s111, %s112
      %p121 = scmp.eq.s32.totalorder %s24, 0
      %p122 = por %p120, %p121
      %p123 = scmp.ne.s32.totalorder %s111, %s112
      %p124 = scmp.eq.s32.totalorder %s25, 1
      %p125 = por %p123, %p124
      %p127 = scmp.ne.s32.totalorder %s112, %s126
      %p128 = scmp.eq.s32.totalorder %s25, 0
      %p129 = por %p127, %p128
      %s131 = sadd.s32 %s130, 1
      %p134 = scmp.eq.s32.totalorder %s19, 1
      %p135 = scmp.ne.s32.totalorder %s130, %s132
      %p136 = scmp.eq.s32.totalorder %s19, 0
      %p137 = por %p135, %p136
      %p138 = scmp.ne.s32.totalorder %s130, %s132
      %p139 = scmp.eq.s32.totalorder %s24, 1
      %p140 = por %p138, %p139
      %p141 = scmp.ne.s32.totalorder %s132, %s133
      %p142 = scmp.eq.s32.totalorder %s24, 0
      %p143 = por %p141, %p142
      %p144 = scmp.ne.s32.totalorder %s132, %s133
      %p145 = scmp.eq.s32.totalorder %s25, 1
      %p146 = por %p144, %p145
      %p148 = scmp.ne.s32.totalorder %s133, %s147
      %p149 = scmp.eq.s32.totalorder %s25, 0
      %p150 = por %p148, %p149
      %s152 = sadd.s32 %s151, 1
      %p155 = scmp.eq.s32.totalorder %s19, 1
      %p156 = scmp.ne.s32.totalorder %s151, %s153
      %p157 = scmp.eq.s32.totalorder %s19, 0
      %p158 = por %p156, %p157
      %p159 = scmp.ne.s32.totalorder %s151, %s153
      %p160 = scmp.eq.s32.totalorder %s24, 1
      %p161 = por %p159, %p160
      %p162 = scmp.ne.s32.totalorder %s153, %s154
      %p163 = scmp.eq.s32.totalorder %s24, 0
      %p164 = por %p162, %p163
      %p165 = scmp.ne.s32.totalorder %s153, %s154
      %p166 = scmp.eq.s32.totalorder %s25, 1
      %p167 = por %p165, %p166
      %p169 = scmp.ne.s32.totalorder %s154, %s168
      %p170 = scmp.eq.s32.totalorder %s25, 0
      %p171 = por %p169, %p170
      %s173 = sadd.s32 %s172, 1
      %p176 = scmp.eq.s32.totalorder %s19, 1
      %p177 = scmp.ne.s32.totalorder %s172, %s174
      %p178 = scmp.eq.s32.totalorder %s19, 0
      %p179 = por %p177, %p178
      %p180 = scmp.ne.s32.totalorder %s172, %s174
      %p181 = scmp.eq.s32.totalorder %s24, 1
      %p182 = por %p180, %p181
      %p183 = scmp.ne.s32.totalorder %s174, %s175
      %p184 = scmp.eq.s32.totalorder %s24, 0
      %p185 = por %p183, %p184
      %p186 = scmp.ne.s32.totalorder %s174, %s175
      %p187 = scmp.eq.s32.totalorder %s25, 1
      %p188 = por %p186, %p187
      %p190 = scmp.ne.s32.totalorder %s175, %s189
      %p191 = scmp.eq.s32.totalorder %s25, 0
      %p192 = por %p190, %p191
      %s193 = ssub.s32 %s26, %s38
      %s194 = ssub.s32 %s27, %s34
      %s195 = sor.u32 %s193, %s194
      %p196 = scmp.eq.s32.totalorder %s195, 0
      %s198 = sadd.s32 %s197, 1
      %s199 = scalar_select %p196, %s197, %s198
      %p202 = pneg %p196
      %p203 = scmp.eq.s32.totalorder %s19, 1
      %p204 = por %p202, %p203
      %p205 = scmp.ne.s32.totalorder %s197, %s200
      %p206 = scmp.eq.s32.totalorder %s19, 0
      %p207 = por %p205, %p206
      %p208 = scmp.ne.s32.totalorder %s197, %s200
      %p209 = scmp.eq.s32.totalorder %s24, 1
      %p210 = por %p208, %p209
      %p211 = scmp.ne.s32.totalorder %s200, %s201
      %p212 = scmp.eq.s32.totalorder %s24, 0
      %p213 = por %p211, %p212
      %p214 = scmp.ne.s32.totalorder %s200, %s201
      %p215 = scmp.eq.s32.totalorder %s25, 1
      %p216 = por %p214, %p215
      %p218 = scmp.ne.s32.totalorder %s201, %s217
      %p219 = scmp.eq.s32.totalorder %s25, 0
      %p220 = por %p218, %p219
      %p221 = scmp.le.s32.totalorder 1, %s19
      %p222 = scmp.lt.s32.totalorder %s19, 3
      %p223 = pnand %p221, %p222
      %p224 = pneg %p223
      // Predicated region
      $region9: #{tpu_custom_call.1} parent=5 // pred_check
        _
      $region10: #{tpu_custom_call.1} parent=5 // pred_check_branch
        %226 = sbr.rel (%p223) target = $region12
      $region11: #{tpu_custom_call.1} parent=5 // pred_region
        %s227 = ssub.s32 %s19, 1
        // Predicated region
        $region13: #{tpu_custom_call.1} parent=11 // pred_check
          %p228 = pneg %p80
        $region14: #{tpu_custom_call.1} parent=11 // pred_check_branch
          %230 = sbr.rel (%p228) target = $region16
        $region15: #{tpu_custom_call.1} parent=11 // pred_region
          _
        $region16: #{tpu_custom_call.1} parent=11 // pred_fallthru
          _
        // Predicated region
        $region17: #{tpu_custom_call.1} parent=11 // pred_check
          %p231 = pneg %p101
        $region18: #{tpu_custom_call.1} parent=11 // pred_check_branch
          %233 = sbr.rel (%p231) target = $region20
        $region19: #{tpu_custom_call.1} parent=11 // pred_region
          _
        $region20: #{tpu_custom_call.1} parent=11 // pred_fallthru
          _
        // Predicated region
        $region21: #{tpu_custom_call.1} parent=11 // pred_check
          %p234 = pneg %p122
        $region22: #{tpu_custom_call.1} parent=11 // pred_check_branch
          %236 = sbr.rel (%p234) target = $region24
        $region23: #{tpu_custom_call.1} parent=11 // pred_region
          _
        $region24: #{tpu_custom_call.1} parent=11 // pred_fallthru
          _
        // Predicated region
        $region25: #{tpu_custom_call.1} parent=11 // pred_check
          %p237 = pneg %p143
        $region26: #{tpu_custom_call.1} parent=11 // pred_check_branch
          %239 = sbr.rel (%p237) target = $region28
        $region27: #{tpu_custom_call.1} parent=11 // pred_region
          _
        $region28: #{tpu_custom_call.1} parent=11 // pred_fallthru
          _
        // Predicated region
        $region29: #{tpu_custom_call.1} parent=11 // pred_check
          %p240 = pneg %p164
        $region30: #{tpu_custom_call.1} parent=11 // pred_check_branch
          %242 = sbr.rel (%p240) target = $region32
        $region31: #{tpu_custom_call.1} parent=11 // pred_region
          _
        $region32: #{tpu_custom_call.1} parent=11 // pred_fallthru
          _
        // Predicated region
        $region33: #{tpu_custom_call.1} parent=11 // pred_check
          %p243 = pneg %p185
        $region34: #{tpu_custom_call.1} parent=11 // pred_check_branch
          %245 = sbr.rel (%p243) target = $region36
        $region35: #{tpu_custom_call.1} parent=11 // pred_region
          _
        $region36: #{tpu_custom_call.1} parent=11 // pred_fallthru
          _
      $region12: #{tpu_custom_call.1} parent=5 // pred_fallthru
        _
      %p246 = scmp.lt.s32.totalorder %s19, 2
      // Predicated region
      $region37: #{tpu_custom_call.1} parent=5 // pred_check
        %p247 = pneg %p246
      $region38: #{tpu_custom_call.1} parent=5 // pred_check_branch
        %249 = sbr.rel (%p247) target = $region40
      $region39: #{tpu_custom_call.1} parent=5 // pred_region
        // Predicated region
        $region41: #{tpu_custom_call.1} parent=39 // pred_check
          %p250 = pneg %p53
        $region42: #{tpu_custom_call.1} parent=39 // pred_check_branch
          %252 = sbr.rel (%p250) target = $region44
        $region43: #{tpu_custom_call.1} parent=39 // pred_region
          %s253 = sand.u32 %s43, 1
          %s254 = scalar_lea.sflag [#allocation3], %s253
          %s255 = sand.u32 %s43, 1
          %s256 = smul.addr %s255, 384
          %s257 = scalar_lea.vmem [#allocation2], %s256
          %s258 = smul.u32 6, %s27
          %s260 = ssub.s32 6144, 6144
          %261 = vsyncadd %s254, %s260
          %s262 = smul.addr %s26, 96
          %s263 = sadd.s32 %s258, %s262
          %s264 = smul.addr %s263, 64
          %s265 = scalar_lea.hbm %s0, %s264
          %s266 = sshll.u32 %s257, 4
          %s267 = int_to_ptr.vmem [resolvable:$true] %s266
          %272 = dma.hbm_to_vmem [thread:$0]  %s265, 6144, %s267, %s254, 384, 384, 24
        $region44: #{tpu_custom_call.1} parent=39 // pred_fallthru
          _
      $region40: #{tpu_custom_call.1} parent=5 // pred_fallthru
        _
      %p273 = scmp.le.s32.totalorder 1, %s19
      %p274 = scmp.lt.s32.totalorder %s19, 3
      %p275 = pnand %p273, %p274
      %p276 = pneg %p275
      // Predicated region
      $region45: #{tpu_custom_call.1} parent=5 // pred_check
        _
      $region46: #{tpu_custom_call.1} parent=5 // pred_check_branch
        %278 = sbr.rel (%p275) target = $region48
      $region47: #{tpu_custom_call.1} parent=5 // pred_region
        %s279 = ssub.s32 %s19, 1
        %s280 = sand.u32 %s46, 1
        %s281 = scalar_lea.sflag [#allocation3], %s280
        %s282 = sand.u32 %s46, 1
        %s283 = smul.addr %s282, 384
        %s284 = scalar_lea.vmem [#allocation2], %s283
        // Predicated region
        $region49: #{tpu_custom_call.1} parent=47 // pred_check
          %p285 = pneg %p59
        $region50: #{tpu_custom_call.1} parent=47 // pred_check_branch
          %287 = sbr.rel (%p285) target = $region52
        $region51: #{tpu_custom_call.1} parent=47 // pred_region
          %288 = dma.done %s281, 6144
        $region52: #{tpu_custom_call.1} parent=47 // pred_fallthru
          _
        %s289 = sand.u32 %s46, 1
        %s290 = scalar_lea.sflag [#allocation3], %s289
        %s291 = sand.u32 %s46, 1
        %s292 = smul.addr %s291, 384
        %s293 = scalar_lea.vmem [#allocation2], %s292
        %p294 = pneg %p59
        %p295 = pneg %p56
        %p296 = pneg %p80
        %p297 = pneg %p77
        %p298 = pneg %p101
        %p299 = pneg %p98
        %p300 = pneg %p122
        %p301 = pneg %p119
        %p302 = pneg %p143
        %p303 = pneg %p140
        %p304 = pneg %p164
        %p305 = pneg %p161
        %p306 = pneg %p185
        %p307 = pneg %p182
        %p308 = pneg %p213
        %p309 = pneg %p210
        %s310 = sand.u32 %s200, 1
        %s311 = scalar_lea.sflag [#allocation4], %s310
        %s312 = sand.u32 %s200, 1
        %s313 = smul.addr %s312, 96
        %s314 = scalar_lea.vmem [#allocation5], %s313
        %s315 = smul.u32 6, %s29
        %s316 = smul.u32 6, %s29
        %v318 = vld [vmem:[%s284] sm:$0xff]
        %v319 = vld [vmem:[%s284 + $0x8] sm:$0xff]
        %v320 = vld [vmem:[%s284 + $0x10] sm:$0xff]
        %v321 = vld [vmem:[%s284 + $0x18] sm:$0xff]
        %v322 = vld [vmem:[%s284 + $0x20] sm:$0xff]
        %v323 = vld [vmem:[%s284 + $0x28] sm:$0xff]
        %v324 = vld [vmem:[%s284 + $0x30] sm:$0xff]
        %v325 = vld [vmem:[%s284 + $0x38] sm:$0xff]
        %v326 = vld [vmem:[%s284 + $0x40] sm:$0xff]
        %v327 = vld [vmem:[%s284 + $0x48] sm:$0xff]
        %v328 = vld [vmem:[%s284 + $0x50] sm:$0xff]
        %v329 = vld [vmem:[%s284 + $0x58] sm:$0xff]
        %v330 = vld [vmem:[%s284 + $0x60] sm:$0xff]
        %v331 = vld [vmem:[%s284 + $0x68] sm:$0xff]
        %v332 = vld [vmem:[%s284 + $0x70] sm:$0xff]
        %v333 = vld [vmem:[%s284 + $0x78] sm:$0xff]
        %v334 = vld [vmem:[%s284 + $0x80] sm:$0xff]
        %v335 = vld [vmem:[%s284 + $0x88] sm:$0xff]
        %v336 = vld [vmem:[%s284 + $0x90] sm:$0xff]
        %v337 = vld [vmem:[%s284 + $0x98] sm:$0xff]
        %v338 = vld [vmem:[%s284 + $0xa0] sm:$0xff]
        %v339 = vld [vmem:[%s284 + $0xa8] sm:$0xff]
        %v340 = vld [vmem:[%s284 + $0xb0] sm:$0xff]
        %v341 = vld [vmem:[%s284 + $0xb8] sm:$0xff]
        %v342 = vld [vmem:[%s284 + $0xc0] sm:$0xff]
        %v343 = vld [vmem:[%s284 + $0xc8] sm:$0xff]
        %v344 = vld [vmem:[%s284 + $0xd0] sm:$0xff]
        %v345 = vld [vmem:[%s284 + $0xd8] sm:$0xff]
        %v346 = vld [vmem:[%s284 + $0xe0] sm:$0xff]
        %v347 = vld [vmem:[%s284 + $0xe8] sm:$0xff]
        %v348 = vld [vmem:[%s284 + $0xf0] sm:$0xff]
        %v349 = vld [vmem:[%s284 + $0xf8] sm:$0xff]
        %v350 = vld [vmem:[%s284 + $0x100] sm:$0xff]
        %v351 = vld [vmem:[%s284 + $0x108] sm:$0xff]
        %v352 = vld [vmem:[%s284 + $0x110] sm:$0xff]
        %v353 = vld [vmem:[%s284 + $0x118] sm:$0xff]
        %v354 = vld [vmem:[%s284 + $0x120] sm:$0xff]
        %v355 = vld [vmem:[%s284 + $0x128] sm:$0xff]
        %v356 = vld [vmem:[%s284 + $0x130] sm:$0xff]
        %v357 = vld [vmem:[%s284 + $0x138] sm:$0xff]
        %v358 = vld [vmem:[%s284 + $0x140] sm:$0xff]
        %v359 = vld [vmem:[%s284 + $0x148] sm:$0xff]
        %v360 = vld [vmem:[%s284 + $0x150] sm:$0xff]
        %v361 = vld [vmem:[%s284 + $0x158] sm:$0xff]
        %v362 = vld [vmem:[%s284 + $0x160] sm:$0xff]
        %v363 = vld [vmem:[%s284 + $0x168] sm:$0xff]
        %v364 = vld [vmem:[%s284 + $0x170] sm:$0xff]
        %v365 = vld [vmem:[%s284 + $0x178] sm:$0xff]
        %v366 = vld [vmem:[%s1] sm:$0xf]
        %v367 = vld [vmem:[%s1 + $0x4] sm:$0xf]
        %v368 = vld [vmem:[%s1 + $0x8] sm:$0xf]
        %v369 = vld [vmem:[%s1 + $0xc] sm:$0xf]
        %v370 = vld [vmem:[%s1 + $0x10] sm:$0xf]
        %v371 = vld [vmem:[%s1 + $0x14] sm:$0xf]
        %v372 = vld [vmem:[%s1 + $0x18] sm:$0xf]
        %v373 = vld [vmem:[%s1 + $0x1c] sm:$0xf]
        %v374 = vld [vmem:[%s1 + $0x20] sm:$0xf]
        %v375 = vld [vmem:[%s1 + $0x24] sm:$0xf]
        %v376 = vld [vmem:[%s1 + $0x28] sm:$0xf]
        %v377 = vld [vmem:[%s1 + $0x2c] sm:$0xf]
        %v378 = vld [vmem:[%s1 + $0x30] sm:$0xf]
        %v379 = vld [vmem:[%s1 + $0x34] sm:$0xf]
        %v380 = vld [vmem:[%s1 + $0x38] sm:$0xf]
        %v381 = vld [vmem:[%s1 + $0x3c] sm:$0xf]
        %v382 = vld [vmem:[%s1 + $0x40] sm:$0xf]
        %v383 = vld [vmem:[%s1 + $0x44] sm:$0xf]
        %v384 = vld [vmem:[%s1 + $0x48] sm:$0xf]
        %v385 = vld [vmem:[%s1 + $0x4c] sm:$0xf]
        %v386 = vld [vmem:[%s1 + $0x50] sm:$0xf]
        %v387 = vld [vmem:[%s1 + $0x54] sm:$0xf]
        %v388 = vld [vmem:[%s1 + $0x58] sm:$0xf]
        %v389 = vld [vmem:[%s1 + $0x5c] sm:$0xf]
        %v390 = vld [vmem:[%s1 + $0x60] sm:$0xf]
        %v391 = vld [vmem:[%s1 + $0x64] sm:$0xf]
        %v392 = vld [vmem:[%s1 + $0x68] sm:$0xf]
        %v393 = vld [vmem:[%s1 + $0x6c] sm:$0xf]
        %v394 = vld [vmem:[%s1 + $0x70] sm:$0xf]
        %v395 = vld [vmem:[%s1 + $0x74] sm:$0xf]
        %v396 = vld [vmem:[%s1 + $0x78] sm:$0xf]
        %v397 = vld [vmem:[%s1 + $0x7c] sm:$0xf]
        %v398 = vld [vmem:[%s2] sm:$0xff]
        %v399 = vld [vmem:[%s2 + $0x8] sm:$0xff]
        %v400 = vld [vmem:[%s2 + $0x10] sm:$0xff]
        %v401 = vld [vmem:[%s2 + $0x18] sm:$0xff]
        %v402 = vld [vmem:[%s2 + $0x20] sm:$0xff]
        %v403 = vld [vmem:[%s2 + $0x28] sm:$0xff]
        %v404 = vld [vmem:[%s2 + $0x30] sm:$0xff]
        %v405 = vld [vmem:[%s2 + $0x38] sm:$0xff]
        %v406 = vld [vmem:[%s2 + $0x40] sm:$0xff]
        %v407 = vld [vmem:[%s2 + $0x48] sm:$0xff]
        %v408 = vld [vmem:[%s2 + $0x50] sm:$0xff]
        %v409 = vld [vmem:[%s2 + $0x58] sm:$0xff]
        %v410 = vld [vmem:[%s2 + $0x60] sm:$0xff]
        %v411 = vld [vmem:[%s2 + $0x68] sm:$0xff]
        %v412 = vld [vmem:[%s2 + $0x70] sm:$0xff]
        %v413 = vld [vmem:[%s2 + $0x78] sm:$0xff]
        %v414 = vld [vmem:[%s2 + $0x80] sm:$0xff]
        %v415 = vld [vmem:[%s2 + $0x88] sm:$0xff]
        %v416 = vld [vmem:[%s2 + $0x90] sm:$0xff]
        %v417 = vld [vmem:[%s2 + $0x98] sm:$0xff]
        %v418 = vld [vmem:[%s2 + $0xa0] sm:$0xff]
        %v419 = vld [vmem:[%s2 + $0xa8] sm:$0xff]
        %v420 = vld [vmem:[%s2 + $0xb0] sm:$0xff]
        %v421 = vld [vmem:[%s2 + $0xb8] sm:$0xff]
        %v422 = vld [vmem:[%s2 + $0xc0] sm:$0xff]
        %v423 = vld [vmem:[%s2 + $0xc8] sm:$0xff]
        %v424 = vld [vmem:[%s2 + $0xd0] sm:$0xff]
        %v425 = vld [vmem:[%s2 + $0xd8] sm:$0xff]
        %v426 = vld [vmem:[%s2 + $0xe0] sm:$0xff]
        %v427 = vld [vmem:[%s2 + $0xe8] sm:$0xff]
        %v428 = vld [vmem:[%s2 + $0xf0] sm:$0xff]
        %v429 = vld [vmem:[%s2 + $0xf8] sm:$0xff]
        %431 = vset.pattern.permute.xlu0 0
        %432 = vperm.xlu0 %431, %v398
        %v433 = vpop.permute.xlu0 %432
        %436 = vset.pattern.permute.xlu0 0
        %437 = vperm.xlu0 %436, %v399
        %v438 = vpop.permute.xlu0 %437
        %441 = vset.pattern.permute.xlu0 0
        %442 = vperm.xlu0 %441, %v400
        %v443 = vpop.permute.xlu0 %442
        %446 = vset.pattern.permute.xlu0 0
        %447 = vperm.xlu0 %446, %v401
        %v448 = vpop.permute.xlu0 %447
        %451 = vset.pattern.permute.xlu0 0
        %452 = vperm.xlu0 %451, %v402
        %v453 = vpop.permute.xlu0 %452
        %456 = vset.pattern.permute.xlu0 0
        %457 = vperm.xlu0 %456, %v403
        %v458 = vpop.permute.xlu0 %457
        %461 = vset.pattern.permute.xlu0 0
        %462 = vperm.xlu0 %461, %v404
        %v463 = vpop.permute.xlu0 %462
        %466 = vset.pattern.permute.xlu0 0
        %467 = vperm.xlu0 %466, %v405
        %v468 = vpop.permute.xlu0 %467
        %471 = vset.pattern.permute.xlu0 0
        %472 = vperm.xlu0 %471, %v406
        %v473 = vpop.permute.xlu0 %472
        %476 = vset.pattern.permute.xlu0 0
        %477 = vperm.xlu0 %476, %v407
        %v478 = vpop.permute.xlu0 %477
        %481 = vset.pattern.permute.xlu0 0
        %482 = vperm.xlu0 %481, %v408
        %v483 = vpop.permute.xlu0 %482
        %486 = vset.pattern.permute.xlu0 0
        %487 = vperm.xlu0 %486, %v409
        %v488 = vpop.permute.xlu0 %487
        %491 = vset.pattern.permute.xlu0 0
        %492 = vperm.xlu0 %491, %v410
        %v493 = vpop.permute.xlu0 %492
        %496 = vset.pattern.permute.xlu0 0
        %497 = vperm.xlu0 %496, %v411
        %v498 = vpop.permute.xlu0 %497
        %501 = vset.pattern.permute.xlu0 0
        %502 = vperm.xlu0 %501, %v412
        %v503 = vpop.permute.xlu0 %502
        %506 = vset.pattern.permute.xlu0 0
        %507 = vperm.xlu0 %506, %v413
        %v508 = vpop.permute.xlu0 %507
        %511 = vset.pattern.permute.xlu0 0
        %512 = vperm.xlu0 %511, %v414
        %v513 = vpop.permute.xlu0 %512
        %516 = vset.pattern.permute.xlu0 0
        %517 = vperm.xlu0 %516, %v415
        %v518 = vpop.permute.xlu0 %517
        %521 = vset.pattern.permute.xlu0 0
        %522 = vperm.xlu0 %521, %v416
        %v523 = vpop.permute.xlu0 %522
        %526 = vset.pattern.permute.xlu0 0
        %527 = vperm.xlu0 %526, %v417
        %v528 = vpop.permute.xlu0 %527
        %531 = vset.pattern.permute.xlu0 0
        %532 = vperm.xlu0 %531, %v418
        %v533 = vpop.permute.xlu0 %532
        %536 = vset.pattern.permute.xlu0 0
        %537 = vperm.xlu0 %536, %v419
        %v538 = vpop.permute.xlu0 %537
        %541 = vset.pattern.permute.xlu0 0
        %542 = vperm.xlu0 %541, %v420
        %v543 = vpop.permute.xlu0 %542
        %546 = vset.pattern.permute.xlu0 0
        %547 = vperm.xlu0 %546, %v421
        %v548 = vpop.permute.xlu0 %547
        %551 = vset.pattern.permute.xlu0 0
        %552 = vperm.xlu0 %551, %v422
        %v553 = vpop.permute.xlu0 %552
        %556 = vset.pattern.permute.xlu0 0
        %557 = vperm.xlu0 %556, %v423
        %v558 = vpop.permute.xlu0 %557
        %561 = vset.pattern.permute.xlu0 0
        %562 = vperm.xlu0 %561, %v424
        %v563 = vpop.permute.xlu0 %562
        %566 = vset.pattern.permute.xlu0 0
        %567 = vperm.xlu0 %566, %v425
        %v568 = vpop.permute.xlu0 %567
        %571 = vset.pattern.permute.xlu0 0
        %572 = vperm.xlu0 %571, %v426
        %v573 = vpop.permute.xlu0 %572
        %576 = vset.pattern.permute.xlu0 0
        %577 = vperm.xlu0 %576, %v427
        %v578 = vpop.permute.xlu0 %577
        %581 = vset.pattern.permute.xlu0 0
        %582 = vperm.xlu0 %581, %v428
        %v583 = vpop.permute.xlu0 %582
        %586 = vset.pattern.permute.xlu0 0
        %587 = vperm.xlu0 %586, %v429
        %v588 = vpop.permute.xlu0 %587
        %v622 = vunpack.c.l.b16 %v366
        %v623 = vunpack.c.l.b16 %v367
        %v624 = vunpack.c.l.b16 %v368
        %v625 = vunpack.c.l.b16 %v369
        %v626 = vunpack.c.l.b16 %v370
        %v627 = vunpack.c.l.b16 %v371
        %v628 = vunpack.c.l.b16 %v372
        %v629 = vunpack.c.l.b16 %v373
        %v630 = vunpack.c.l.b16 %v374
        %v631 = vunpack.c.l.b16 %v375
        %v632 = vunpack.c.l.b16 %v376
        %v633 = vunpack.c.l.b16 %v377
        %v634 = vunpack.c.l.b16 %v378
        %v635 = vunpack.c.l.b16 %v379
        %v636 = vunpack.c.l.b16 %v380
        %v637 = vunpack.c.l.b16 %v381
        %v638 = vunpack.c.l.b16 %v382
        %v639 = vunpack.c.l.b16 %v383
        %v640 = vunpack.c.l.b16 %v384
        %v641 = vunpack.c.l.b16 %v385
        %v642 = vunpack.c.l.b16 %v386
        %v643 = vunpack.c.l.b16 %v387
        %v644 = vunpack.c.l.b16 %v388
        %v645 = vunpack.c.l.b16 %v389
        %v646 = vunpack.c.l.b16 %v390
        %v647 = vunpack.c.l.b16 %v391
        %v648 = vunpack.c.l.b16 %v392
        %v649 = vunpack.c.l.b16 %v393
        %v650 = vunpack.c.l.b16 %v394
        %v651 = vunpack.c.l.b16 %v395
        %v652 = vunpack.c.l.b16 %v396
        %v653 = vunpack.c.l.b16 %v397
        %v654 = vpack.c.b16 %v623, %v622
        %v655 = vpack.c.b16 %v625, %v624
        %v656 = vpack.c.b16 %v627, %v626
        %v657 = vpack.c.b16 %v629, %v628
        %v658 = vpack.c.b16 %v631, %v630
        %v659 = vpack.c.b16 %v633, %v632
        %v660 = vpack.c.b16 %v635, %v634
        %v661 = vpack.c.b16 %v637, %v636
        %v662 = vpack.c.b16 %v639, %v638
        %v663 = vpack.c.b16 %v641, %v640
        %v664 = vpack.c.b16 %v643, %v642
        %v665 = vpack.c.b16 %v645, %v644
        %v666 = vpack.c.b16 %v647, %v646
        %v667 = vpack.c.b16 %v649, %v648
        %v668 = vpack.c.b16 %v651, %v650
        %v669 = vpack.c.b16 %v653, %v652
        %v734 = vunpack.c.l.b16 %v318
        %v735 = vunpack.c.h.b16 %v318
        %v736 = vunpack.c.l.b16 %v319
        %v737 = vunpack.c.h.b16 %v319
        %v738 = vunpack.c.l.b16 %v320
        %v739 = vunpack.c.h.b16 %v320
        %v740 = vunpack.c.l.b16 %v321
        %v741 = vunpack.c.h.b16 %v321
        %v742 = vunpack.c.l.b16 %v322
        %v743 = vunpack.c.h.b16 %v322
        %v744 = vunpack.c.l.b16 %v323
        %v745 = vunpack.c.h.b16 %v323
        %v746 = vunpack.c.l.b16 %v324
        %v747 = vunpack.c.h.b16 %v324
        %v748 = vunpack.c.l.b16 %v325
        %v749 = vunpack.c.h.b16 %v325
        %v750 = vunpack.c.l.b16 %v326
        %v751 = vunpack.c.h.b16 %v326
        %v752 = vunpack.c.l.b16 %v327
        %v753 = vunpack.c.h.b16 %v327
        %v754 = vunpack.c.l.b16 %v328
        %v755 = vunpack.c.h.b16 %v328
        %v756 = vunpack.c.l.b16 %v329
        %v757 = vunpack.c.h.b16 %v329
        %v758 = vunpack.c.l.b16 %v330
        %v759 = vunpack.c.h.b16 %v330
        %v760 = vunpack.c.l.b16 %v331
        %v761 = vunpack.c.h.b16 %v331
        %v762 = vunpack.c.l.b16 %v332
        %v763 = vunpack.c.h.b16 %v332
        %v764 = vunpack.c.l.b16 %v333
        %v765 = vunpack.c.h.b16 %v333
        %v766 = vunpack.c.l.b16 %v334
        %v767 = vunpack.c.h.b16 %v334
        %v768 = vunpack.c.l.b16 %v335
        %v769 = vunpack.c.h.b16 %v335
        %v770 = vunpack.c.l.b16 %v336
        %v771 = vunpack.c.h.b16 %v336
        %v772 = vunpack.c.l.b16 %v337
        %v773 = vunpack.c.h.b16 %v337
        %v774 = vunpack.c.l.b16 %v338
        %v775 = vunpack.c.h.b16 %v338
        %v776 = vunpack.c.l.b16 %v339
        %v777 = vunpack.c.h.b16 %v339
        %v778 = vunpack.c.l.b16 %v340
        %v779 = vunpack.c.h.b16 %v340
        %v780 = vunpack.c.l.b16 %v341
        %v781 = vunpack.c.h.b16 %v341
        %v782 = vunpack.c.l.b16 %v342
        %v783 = vunpack.c.h.b16 %v342
        %v784 = vunpack.c.l.b16 %v343
        %v785 = vunpack.c.h.b16 %v343
        %v786 = vunpack.c.l.b16 %v344
        %v787 = vunpack.c.h.b16 %v344
        %v788 = vunpack.c.l.b16 %v345
        %v789 = vunpack.c.h.b16 %v345
        %v790 = vunpack.c.l.b16 %v346
        %v791 = vunpack.c.h.b16 %v346
        %v792 = vunpack.c.l.b16 %v347
        %v793 = vunpack.c.h.b16 %v347
        %v794 = vunpack.c.l.b16 %v348
        %v795 = vunpack.c.h.b16 %v348
        %v796 = vunpack.c.l.b16 %v349
        %v797 = vunpack.c.h.b16 %v349
        %v798 = vunpack.c.l.b16 %v350
        %v799 = vunpack.c.h.b16 %v350
        %v800 = vunpack.c.l.b16 %v351
        %v801 = vunpack.c.h.b16 %v351
        %v802 = vunpack.c.l.b16 %v352
        %v803 = vunpack.c.h.b16 %v352
        %v804 = vunpack.c.l.b16 %v353
        %v805 = vunpack.c.h.b16 %v353
        %v806 = vunpack.c.l.b16 %v354
        %v807 = vunpack.c.h.b16 %v354
        %v808 = vunpack.c.l.b16 %v355
        %v809 = vunpack.c.h.b16 %v355
        %v810 = vunpack.c.l.b16 %v356
        %v811 = vunpack.c.h.b16 %v356
        %v812 = vunpack.c.l.b16 %v357
        %v813 = vunpack.c.h.b16 %v357
        %v814 = vunpack.c.l.b16 %v358
        %v815 = vunpack.c.h.b16 %v358
        %v816 = vunpack.c.l.b16 %v359
        %v817 = vunpack.c.h.b16 %v359
        %v818 = vunpack.c.l.b16 %v360
        %v819 = vunpack.c.h.b16 %v360
        %v820 = vunpack.c.l.b16 %v361
        %v821 = vunpack.c.h.b16 %v361
        %v822 = vunpack.c.l.b16 %v362
        %v823 = vunpack.c.h.b16 %v362
        %v824 = vunpack.c.l.b16 %v363
        %v825 = vunpack.c.h.b16 %v363
        %v826 = vunpack.c.l.b16 %v364
        %v827 = vunpack.c.h.b16 %v364
        %v828 = vunpack.c.l.b16 %v365
        %v829 = vunpack.c.h.b16 %v365
        %v830 = vpack.c.b16 %v740, %v734
        %v831 = vpack.c.b16 %v741, %v735
        %v832 = vpack.c.b16 %v742, %v736
        %v833 = vpack.c.b16 %v743, %v737
        %v834 = vpack.c.b16 %v744, %v738
        %v835 = vpack.c.b16 %v745, %v739
        %v836 = vpack.c.b16 %v752, %v746
        %v837 = vpack.c.b16 %v753, %v747
        %v838 = vpack.c.b16 %v754, %v748
        %v839 = vpack.c.b16 %v755, %v749
        %v840 = vpack.c.b16 %v756, %v750
        %v841 = vpack.c.b16 %v757, %v751
        %v842 = vpack.c.b16 %v764, %v758
        %v843 = vpack.c.b16 %v765, %v759
        %v844 = vpack.c.b16 %v766, %v760
        %v845 = vpack.c.b16 %v767, %v761
        %v846 = vpack.c.b16 %v768, %v762
        %v847 = vpack.c.b16 %v769, %v763
        %v848 = vpack.c.b16 %v776, %v770
        %v849 = vpack.c.b16 %v777, %v771
        %v850 = vpack.c.b16 %v778, %v772
        %v851 = vpack.c.b16 %v779, %v773
        %v852 = vpack.c.b16 %v780, %v774
        %v853 = vpack.c.b16 %v781, %v775
        %v854 = vpack.c.b16 %v788, %v782
        %v855 = vpack.c.b16 %v789, %v783
        %v856 = vpack.c.b16 %v790, %v784
        %v857 = vpack.c.b16 %v791, %v785
        %v858 = vpack.c.b16 %v792, %v786
        %v859 = vpack.c.b16 %v793, %v787
        %v860 = vpack.c.b16 %v800, %v794
        %v861 = vpack.c.b16 %v801, %v795
        %v862 = vpack.c.b16 %v802, %v796
        %v863 = vpack.c.b16 %v803, %v797
        %v864 = vpack.c.b16 %v804, %v798
        %v865 = vpack.c.b16 %v805, %v799
        %v866 = vpack.c.b16 %v812, %v806
        %v867 = vpack.c.b16 %v813, %v807
        %v868 = vpack.c.b16 %v814, %v808
        %v869 = vpack.c.b16 %v815, %v809
        %v870 = vpack.c.b16 %v816, %v810
        %v871 = vpack.c.b16 %v817, %v811
        %v872 = vpack.c.b16 %v824, %v818
        %v873 = vpack.c.b16 %v825, %v819
        %v874 = vpack.c.b16 %v826, %v820
        %v875 = vpack.c.b16 %v827, %v821
        %v876 = vpack.c.b16 %v828, %v822
        %v877 = vpack.c.b16 %v829, %v823
        %926 = vmatprep.subr.bf16.mxu0 %v873
        %927 = vmatpush1.bf16.msra.mxu0 %v872
        %928 = vmatprep.subr.bf16.mxu0 %v867
        %929 = vmatpush1.bf16.msra.mxu0 %v866
        %930 = vmatprep.subr.bf16.mxu0 %v861
        %931 = vmatpush1.bf16.msra.mxu0 %v860
        %932 = vmatprep.subr.bf16.mxu0 %v855
        %933 = vmatpush1.bf16.msra.mxu0 %v854
        %934 = vmatprep.subr.bf16.mxu0 %v849
        %935 = vmatpush1.bf16.msra.mxu0 %v848
        %936 = vmatprep.subr.bf16.mxu0 %v843
        %937 = vmatpush1.bf16.msra.mxu0 %v842
        %938 = vmatprep.subr.bf16.mxu0 %v837
        %939 = vmatpush1.bf16.msra.mxu0 %v836
        %940 = vmatprep.subr.bf16.mxu0 %v831
        %941 = vmatpush1.bf16.msra.mxu0 %v830
        %942 = vmatprep.subr.bf16.mxu0 0
        %943 = vmatpush2.bf16.msra.mxu0 0
        %944 = vmatprep.subr.bf16.mxu0 0
        %945 = vmatpush2.bf16.msra.mxu0 0
        %946 = vmatprep.subr.bf16.mxu0 0
        %947 = vmatpush2.bf16.msra.mxu0 0
        %948 = vmatprep.subr.bf16.mxu0 0
        %949 = vmatpush2.bf16.msra.mxu0 0
        %950 = vmatprep.subr.bf16.mxu0 0
        %951 = vmatpush2.bf16.msra.mxu0 0
        %952 = vmatprep.subr.bf16.mxu0 0
        %953 = vmatpush2.bf16.msra.mxu0 0
        %954 = vmatprep.subr.bf16.mxu0 0
        %955 = vmatpush2.bf16.msra.mxu0 0
        %956 = vmatprep.subr.bf16.mxu0 0
        %957 = vmatpush2.bf16.msra.mxu0 0
        %958 = vmatprep.mubr.bf16.mxu0 0
        %959 = vmatmul.mubr.bf16.gmra.mxu0 %v654
        %v960 = vpop.f32.mrf.mxu0
        %v961 = vadd.f32 %v433, %v960
        %v962 = vpop.f32.mrf.mxu0
        %v963 = vadd.f32 %v433, %v962
        %v964 = vpop.f32.mrf.mxu0
        %v965 = vadd.f32 %v438, %v964
        %v966 = vpop.f32.mrf.mxu0
        %v967 = vadd.f32 %v438, %v966
        %968 = vmatprep.mubr.bf16.mxu0 0
        %969 = vmatmul.mubr.bf16.gmra.mxu0 %v655
        %v970 = vpop.f32.mrf.mxu0
        %v971 = vadd.f32 %v443, %v970
        %v972 = vpop.f32.mrf.mxu0
        %v973 = vadd.f32 %v443, %v972
        %v974 = vpop.f32.mrf.mxu0
        %v975 = vadd.f32 %v448, %v974
        %v976 = vpop.f32.mrf.mxu0
        %v977 = vadd.f32 %v448, %v976
        %978 = vmatprep.mubr.bf16.mxu0 0
        %979 = vmatmul.mubr.bf16.gmra.mxu0 %v656
        %v980 = vpop.f32.mrf.mxu0
        %v981 = vadd.f32 %v453, %v980
        %v982 = vpop.f32.mrf.mxu0
        %v983 = vadd.f32 %v453, %v982
        %v984 = vpop.f32.mrf.mxu0
        %v985 = vadd.f32 %v458, %v984
        %v986 = vpop.f32.mrf.mxu0
        %v987 = vadd.f32 %v458, %v986
        %988 = vmatprep.mubr.bf16.mxu0 0
        %989 = vmatmul.mubr.bf16.gmra.mxu0 %v657
        %v990 = vpop.f32.mrf.mxu0
        %v991 = vadd.f32 %v463, %v990
        %v992 = vpop.f32.mrf.mxu0
        %v993 = vadd.f32 %v463, %v992
        %v994 = vpop.f32.mrf.mxu0
        %v995 = vadd.f32 %v468, %v994
        %v996 = vpop.f32.mrf.mxu0
        %v997 = vadd.f32 %v468, %v996
        %998 = vmatprep.mubr.bf16.mxu0 0
        %999 = vmatmul.mubr.bf16.gmra.mxu0 %v658
        %v1000 = vpop.f32.mrf.mxu0
        %v1001 = vadd.f32 %v473, %v1000
        %v1002 = vpop.f32.mrf.mxu0
        %v1003 = vadd.f32 %v473, %v1002
        %v1004 = vpop.f32.mrf.mxu0
        %v1005 = vadd.f32 %v478, %v1004
        %v1006 = vpop.f32.mrf.mxu0
        %v1007 = vadd.f32 %v478, %v1006
        %1008 = vmatprep.mubr.bf16.mxu0 0
        %1009 = vmatmul.mubr.bf16.gmra.mxu0 %v659
        %v1010 = vpop.f32.mrf.mxu0
        %v1011 = vadd.f32 %v483, %v1010
        %v1012 = vpop.f32.mrf.mxu0
        %v1013 = vadd.f32 %v483, %v1012
        %v1014 = vpop.f32.mrf.mxu0
        %v1015 = vadd.f32 %v488, %v1014
        %v1016 = vpop.f32.mrf.mxu0
        %v1017 = vadd.f32 %v488, %v1016
        %1018 = vmatprep.mubr.bf16.mxu0 0
        %1019 = vmatmul.mubr.bf16.gmra.mxu0 %v660
        %v1020 = vpop.f32.mrf.mxu0
        %v1021 = vadd.f32 %v493, %v1020
        %v1022 = vpop.f32.mrf.mxu0
        %v1023 = vadd.f32 %v493, %v1022
        %v1024 = vpop.f32.mrf.mxu0
        %v1025 = vadd.f32 %v498, %v1024
        %v1026 = vpop.f32.mrf.mxu0
        %v1027 = vadd.f32 %v498, %v1026
        %1028 = vmatprep.mubr.bf16.mxu0 0
        %1029 = vmatmul.mubr.bf16.gmra.mxu0 %v661
        %v1030 = vpop.f32.mrf.mxu0
        %v1031 = vadd.f32 %v503, %v1030
        %v1032 = vpop.f32.mrf.mxu0
        %v1033 = vadd.f32 %v503, %v1032
        %v1034 = vpop.f32.mrf.mxu0
        %v1035 = vadd.f32 %v508, %v1034
        %v1036 = vpop.f32.mrf.mxu0
        %v1037 = vadd.f32 %v508, %v1036
        %1038 = vmatprep.mubr.bf16.mxu0 0
        %1039 = vmatmul.mubr.bf16.gmra.mxu0 %v662
        %v1040 = vpop.f32.mrf.mxu0
        %v1041 = vadd.f32 %v513, %v1040
        %v1042 = vpop.f32.mrf.mxu0
        %v1043 = vadd.f32 %v513, %v1042
        %v1044 = vpop.f32.mrf.mxu0
        %v1045 = vadd.f32 %v518, %v1044
        %v1046 = vpop.f32.mrf.mxu0
        %v1047 = vadd.f32 %v518, %v1046
        %1048 = vmatprep.mubr.bf16.mxu0 0
        %1049 = vmatmul.mubr.bf16.gmra.mxu0 %v663
        %v1050 = vpop.f32.mrf.mxu0
        %v1051 = vadd.f32 %v523, %v1050
        %v1052 = vpop.f32.mrf.mxu0
        %v1053 = vadd.f32 %v523, %v1052
        %v1054 = vpop.f32.mrf.mxu0
        %v1055 = vadd.f32 %v528, %v1054
        %v1056 = vpop.f32.mrf.mxu0
        %v1057 = vadd.f32 %v528, %v1056
        %1058 = vmatprep.mubr.bf16.mxu0 0
        %1059 = vmatmul.mubr.bf16.gmra.mxu0 %v664
        %v1060 = vpop.f32.mrf.mxu0
        %v1061 = vadd.f32 %v533, %v1060
        %v1062 = vpop.f32.mrf.mxu0
        %v1063 = vadd.f32 %v533, %v1062
        %v1064 = vpop.f32.mrf.mxu0
        %v1065 = vadd.f32 %v538, %v1064
        %v1066 = vpop.f32.mrf.mxu0
        %v1067 = vadd.f32 %v538, %v1066
        %1068 = vmatprep.mubr.bf16.mxu0 0
        %1069 = vmatmul.mubr.bf16.gmra.mxu0 %v665
        %v1070 = vpop.f32.mrf.mxu0
        %v1071 = vadd.f32 %v543, %v1070
        %v1072 = vpop.f32.mrf.mxu0
        %v1073 = vadd.f32 %v543, %v1072
        %v1074 = vpop.f32.mrf.mxu0
        %v1075 = vadd.f32 %v548, %v1074
        %v1076 = vpop.f32.mrf.mxu0
        %v1077 = vadd.f32 %v548, %v1076
        %1078 = vmatprep.mubr.bf16.mxu0 0
        %1079 = vmatmul.mubr.bf16.gmra.mxu0 %v666
        %v1080 = vpop.f32.mrf.mxu0
        %v1081 = vadd.f32 %v553, %v1080
        %v1082 = vpop.f32.mrf.mxu0
        %v1083 = vadd.f32 %v553, %v1082
        %v1084 = vpop.f32.mrf.mxu0
        %v1085 = vadd.f32 %v558, %v1084
        %v1086 = vpop.f32.mrf.mxu0
        %v1087 = vadd.f32 %v558, %v1086
        %1088 = vmatprep.mubr.bf16.mxu0 0
        %1089 = vmatmul.mubr.bf16.gmra.mxu0 %v667
        %v1090 = vpop.f32.mrf.mxu0
        %v1091 = vadd.f32 %v563, %v1090
        %v1092 = vpop.f32.mrf.mxu0
        %v1093 = vadd.f32 %v563, %v1092
        %v1094 = vpop.f32.mrf.mxu0
        %v1095 = vadd.f32 %v568, %v1094
        %v1096 = vpop.f32.mrf.mxu0
        %v1097 = vadd.f32 %v568, %v1096
        %1098 = vmatprep.mubr.bf16.mxu0 0
        %1099 = vmatmul.mubr.bf16.gmra.mxu0 %v668
        %v1100 = vpop.f32.mrf.mxu0
        %v1101 = vadd.f32 %v573, %v1100
        %v1102 = vpop.f32.mrf.mxu0
        %v1103 = vadd.f32 %v573, %v1102
        %v1104 = vpop.f32.mrf.mxu0
        %v1105 = vadd.f32 %v578, %v1104
        %v1106 = vpop.f32.mrf.mxu0
        %v1107 = vadd.f32 %v578, %v1106
        %1108 = vmatprep.mubr.bf16.mxu0 0
        %1109 = vmatmul.mubr.bf16.gmra.mxu0 %v669
        %v1110 = vpop.f32.mrf.mxu0
        %v1111 = vadd.f32 %v583, %v1110
        %v1112 = vpop.f32.mrf.mxu0
        %v1113 = vadd.f32 %v583, %v1112
        %v1114 = vpop.f32.mrf.mxu0
        %v1115 = vadd.f32 %v588, %v1114
        %v1116 = vpop.f32.mrf.mxu0
        %v1117 = vadd.f32 %v588, %v1116
        %1118 = vdwg.mxu0
        %1119 = vmatprep.subr.bf16.mxu0 %v875
        %1120 = vmatpush1.bf16.msra.mxu0 %v874
        %1121 = vmatprep.subr.bf16.mxu0 %v869
        %1122 = vmatpush1.bf16.msra.mxu0 %v868
        %1123 = vmatprep.subr.bf16.mxu0 %v863
        %1124 = vmatpush1.bf16.msra.mxu0 %v862
        %1125 = vmatprep.subr.bf16.mxu0 %v857
        %1126 = vmatpush1.bf16.msra.mxu0 %v856
        %1127 = vmatprep.subr.bf16.mxu0 %v851
        %1128 = vmatpush1.bf16.msra.mxu0 %v850
        %1129 = vmatprep.subr.bf16.mxu0 %v845
        %1130 = vmatpush1.bf16.msra.mxu0 %v844
        %1131 = vmatprep.subr.bf16.mxu0 %v839
        %1132 = vmatpush1.bf16.msra.mxu0 %v838
        %1133 = vmatprep.subr.bf16.mxu0 %v833
        %1134 = vmatpush1.bf16.msra.mxu0 %v832
        %1135 = vmatprep.subr.bf16.mxu0 0
        %1136 = vmatpush2.bf16.msra.mxu0 0
        %1137 = vmatprep.subr.bf16.mxu0 0
        %1138 = vmatpush2.bf16.msra.mxu0 0
        %1139 = vmatprep.subr.bf16.mxu0 0
        %1140 = vmatpush2.bf16.msra.mxu0 0
        %1141 = vmatprep.subr.bf16.mxu0 0
        %1142 = vmatpush2.bf16.msra.mxu0 0
        %1143 = vmatprep.subr.bf16.mxu0 0
        %1144 = vmatpush2.bf16.msra.mxu0 0
        %1145 = vmatprep.subr.bf16.mxu0 0
        %1146 = vmatpush2.bf16.msra.mxu0 0
        %1147 = vmatprep.subr.bf16.mxu0 0
        %1148 = vmatpush2.bf16.msra.mxu0 0
        %1149 = vmatprep.subr.bf16.mxu0 0
        %1150 = vmatpush2.bf16.msra.mxu0 0
        %1151 = vmatprep.mubr.bf16.mxu0 0
        %1152 = vmatmul.mubr.bf16.gmra.mxu0 %v654
        %v1153 = vpop.f32.mrf.mxu0
        %v1154 = vadd.f32 %v433, %v1153
        %v1155 = vpop.f32.mrf.mxu0
        %v1156 = vadd.f32 %v433, %v1155
        %v1157 = vpop.f32.mrf.mxu0
        %v1158 = vadd.f32 %v438, %v1157
        %v1159 = vpop.f32.mrf.mxu0
        %v1160 = vadd.f32 %v438, %v1159
        %1161 = vmatprep.mubr.bf16.mxu0 0
        %1162 = vmatmul.mubr.bf16.gmra.mxu0 %v655
        %v1163 = vpop.f32.mrf.mxu0
        %v1164 = vadd.f32 %v443, %v1163
        %v1165 = vpop.f32.mrf.mxu0
        %v1166 = vadd.f32 %v443, %v1165
        %v1167 = vpop.f32.mrf.mxu0
        %v1168 = vadd.f32 %v448, %v1167
        %v1169 = vpop.f32.mrf.mxu0
        %v1170 = vadd.f32 %v448, %v1169
        %1171 = vmatprep.mubr.bf16.mxu0 0
        %1172 = vmatmul.mubr.bf16.gmra.mxu0 %v656
        %v1173 = vpop.f32.mrf.mxu0
        %v1174 = vadd.f32 %v453, %v1173
        %v1175 = vpop.f32.mrf.mxu0
        %v1176 = vadd.f32 %v453, %v1175
        %v1177 = vpop.f32.mrf.mxu0
        %v1178 = vadd.f32 %v458, %v1177
        %v1179 = vpop.f32.mrf.mxu0
        %v1180 = vadd.f32 %v458, %v1179
        %1181 = vmatprep.mubr.bf16.mxu0 0
        %1182 = vmatmul.mubr.bf16.gmra.mxu0 %v657
        %v1183 = vpop.f32.mrf.mxu0
        %v1184 = vadd.f32 %v463, %v1183
        %v1185 = vpop.f32.mrf.mxu0
        %v1186 = vadd.f32 %v463, %v1185
        %v1187 = vpop.f32.mrf.mxu0
        %v1188 = vadd.f32 %v468, %v1187
        %v1189 = vpop.f32.mrf.mxu0
        %v1190 = vadd.f32 %v468, %v1189
        %1191 = vmatprep.mubr.bf16.mxu0 0
        %1192 = vmatmul.mubr.bf16.gmra.mxu0 %v658
        %v1193 = vpop.f32.mrf.mxu0
        %v1194 = vadd.f32 %v473, %v1193
        %v1195 = vpop.f32.mrf.mxu0
        %v1196 = vadd.f32 %v473, %v1195
        %v1197 = vpop.f32.mrf.mxu0
        %v1198 = vadd.f32 %v478, %v1197
        %v1199 = vpop.f32.mrf.mxu0
        %v1200 = vadd.f32 %v478, %v1199
        %1201 = vmatprep.mubr.bf16.mxu0 0
        %1202 = vmatmul.mubr.bf16.gmra.mxu0 %v659
        %v1203 = vpop.f32.mrf.mxu0
        %v1204 = vadd.f32 %v483, %v1203
        %v1205 = vpop.f32.mrf.mxu0
        %v1206 = vadd.f32 %v483, %v1205
        %v1207 = vpop.f32.mrf.mxu0
        %v1208 = vadd.f32 %v488, %v1207
        %v1209 = vpop.f32.mrf.mxu0
        %v1210 = vadd.f32 %v488, %v1209
        %1211 = vmatprep.mubr.bf16.mxu0 0
        %1212 = vmatmul.mubr.bf16.gmra.mxu0 %v660
        %v1213 = vpop.f32.mrf.mxu0
        %v1214 = vadd.f32 %v493, %v1213
        %v1215 = vpop.f32.mrf.mxu0
        %v1216 = vadd.f32 %v493, %v1215
        %v1217 = vpop.f32.mrf.mxu0
        %v1218 = vadd.f32 %v498, %v1217
        %v1219 = vpop.f32.mrf.mxu0
        %v1220 = vadd.f32 %v498, %v1219
        %1221 = vmatprep.mubr.bf16.mxu0 0
        %1222 = vmatmul.mubr.bf16.gmra.mxu0 %v661
        %v1223 = vpop.f32.mrf.mxu0
        %v1224 = vadd.f32 %v503, %v1223
        %v1225 = vpop.f32.mrf.mxu0
        %v1226 = vadd.f32 %v503, %v1225
        %v1227 = vpop.f32.mrf.mxu0
        %v1228 = vadd.f32 %v508, %v1227
        %v1229 = vpop.f32.mrf.mxu0
        %v1230 = vadd.f32 %v508, %v1229
        %1231 = vmatprep.mubr.bf16.mxu0 0
        %1232 = vmatmul.mubr.bf16.gmra.mxu0 %v662
        %v1233 = vpop.f32.mrf.mxu0
        %v1234 = vadd.f32 %v513, %v1233
        %v1235 = vpop.f32.mrf.mxu0
        %v1236 = vadd.f32 %v513, %v1235
        %v1237 = vpop.f32.mrf.mxu0
        %v1238 = vadd.f32 %v518, %v1237
        %v1239 = vpop.f32.mrf.mxu0
        %v1240 = vadd.f32 %v518, %v1239
        %1241 = vmatprep.mubr.bf16.mxu0 0
        %1242 = vmatmul.mubr.bf16.gmra.mxu0 %v663
        %v1243 = vpop.f32.mrf.mxu0
        %v1244 = vadd.f32 %v523, %v1243
        %v1245 = vpop.f32.mrf.mxu0
        %v1246 = vadd.f32 %v523, %v1245
        %v1247 = vpop.f32.mrf.mxu0
        %v1248 = vadd.f32 %v528, %v1247
        %v1249 = vpop.f32.mrf.mxu0
        %v1250 = vadd.f32 %v528, %v1249
        %1251 = vmatprep.mubr.bf16.mxu0 0
        %1252 = vmatmul.mubr.bf16.gmra.mxu0 %v664
        %v1253 = vpop.f32.mrf.mxu0
        %v1254 = vadd.f32 %v533, %v1253
        %v1255 = vpop.f32.mrf.mxu0
        %v1256 = vadd.f32 %v533, %v1255
        %v1257 = vpop.f32.mrf.mxu0
        %v1258 = vadd.f32 %v538, %v1257
        %v1259 = vpop.f32.mrf.mxu0
        %v1260 = vadd.f32 %v538, %v1259
        %1261 = vmatprep.mubr.bf16.mxu0 0
        %1262 = vmatmul.mubr.bf16.gmra.mxu0 %v665
        %v1263 = vpop.f32.mrf.mxu0
        %v1264 = vadd.f32 %v543, %v1263
        %v1265 = vpop.f32.mrf.mxu0
        %v1266 = vadd.f32 %v543, %v1265
        %v1267 = vpop.f32.mrf.mxu0
        %v1268 = vadd.f32 %v548, %v1267
        %v1269 = vpop.f32.mrf.mxu0
        %v1270 = vadd.f32 %v548, %v1269
        %1271 = vmatprep.mubr.bf16.mxu0 0
        %1272 = vmatmul.mubr.bf16.gmra.mxu0 %v666
        %v1273 = vpop.f32.mrf.mxu0
        %v1274 = vadd.f32 %v553, %v1273
        %v1275 = vpop.f32.mrf.mxu0
        %v1276 = vadd.f32 %v553, %v1275
        %v1277 = vpop.f32.mrf.mxu0
        %v1278 = vadd.f32 %v558, %v1277
        %v1279 = vpop.f32.mrf.mxu0
        %v1280 = vadd.f32 %v558, %v1279
        %1281 = vmatprep.mubr.bf16.mxu0 0
        %1282 = vmatmul.mubr.bf16.gmra.mxu0 %v667
        %v1283 = vpop.f32.mrf.mxu0
        %v1284 = vadd.f32 %v563, %v1283
        %v1285 = vpop.f32.mrf.mxu0
        %v1286 = vadd.f32 %v563, %v1285
        %v1287 = vpop.f32.mrf.mxu0
        %v1288 = vadd.f32 %v568, %v1287
        %v1289 = vpop.f32.mrf.mxu0
        %v1290 = vadd.f32 %v568, %v1289
        %1291 = vmatprep.mubr.bf16.mxu0 0
        %1292 = vmatmul.mubr.bf16.gmra.mxu0 %v668
        %v1293 = vpop.f32.mrf.mxu0
        %v1294 = vadd.f32 %v573, %v1293
        %v1295 = vpop.f32.mrf.mxu0
        %v1296 = vadd.f32 %v573, %v1295
        %v1297 = vpop.f32.mrf.mxu0
        %v1298 = vadd.f32 %v578, %v1297
        %v1299 = vpop.f32.mrf.mxu0
        %v1300 = vadd.f32 %v578, %v1299
        %1301 = vmatprep.mubr.bf16.mxu0 0
        %1302 = vmatmul.mubr.bf16.gmra.mxu0 %v669
        %v1303 = vpop.f32.mrf.mxu0
        %v1304 = vadd.f32 %v583, %v1303
        %v1305 = vpop.f32.mrf.mxu0
        %v1306 = vadd.f32 %v583, %v1305
        %v1307 = vpop.f32.mrf.mxu0
        %v1308 = vadd.f32 %v588, %v1307
        %v1309 = vpop.f32.mrf.mxu0
        %v1310 = vadd.f32 %v588, %v1309
        %1311 = vdwg.mxu0
        %1312 = vmatprep.subr.bf16.mxu0 %v877
        %1313 = vmatpush1.bf16.msra.mxu0 %v876
        %1314 = vmatprep.subr.bf16.mxu0 %v871
        %1315 = vmatpush1.bf16.msra.mxu0 %v870
        %1316 = vmatprep.subr.bf16.mxu0 %v865
        %1317 = vmatpush1.bf16.msra.mxu0 %v864
        %1318 = vmatprep.subr.bf16.mxu0 %v859
        %1319 = vmatpush1.bf16.msra.mxu0 %v858
        %1320 = vmatprep.subr.bf16.mxu0 %v853
        %1321 = vmatpush1.bf16.msra.mxu0 %v852
        %1322 = vmatprep.subr.bf16.mxu0 %v847
        %1323 = vmatpush1.bf16.msra.mxu0 %v846
        %1324 = vmatprep.subr.bf16.mxu0 %v841
        %1325 = vmatpush1.bf16.msra.mxu0 %v840
        %1326 = vmatprep.subr.bf16.mxu0 %v835
        %1327 = vmatpush1.bf16.msra.mxu0 %v834
        %1328 = vmatprep.subr.bf16.mxu0 0
        %1329 = vmatpush2.bf16.msra.mxu0 0
        %1330 = vmatprep.subr.bf16.mxu0 0
        %1331 = vmatpush2.bf16.msra.mxu0 0
        %1332 = vmatprep.subr.bf16.mxu0 0
        %1333 = vmatpush2.bf16.msra.mxu0 0
        %1334 = vmatprep.subr.bf16.mxu0 0
        %1335 = vmatpush2.bf16.msra.mxu0 0
        %1336 = vmatprep.subr.bf16.mxu0 0
        %1337 = vmatpush2.bf16.msra.mxu0 0
        %1338 = vmatprep.subr.bf16.mxu0 0
        %1339 = vmatpush2.bf16.msra.mxu0 0
        %1340 = vmatprep.subr.bf16.mxu0 0
        %1341 = vmatpush2.bf16.msra.mxu0 0
        %1342 = vmatprep.subr.bf16.mxu0 0
        %1343 = vmatpush2.bf16.msra.mxu0 0
        %1344 = vmatprep.mubr.bf16.mxu0 0
        %1345 = vmatmul.mubr.bf16.gmra.mxu0 %v654
        %v1346 = vpop.f32.mrf.mxu0
        %v1347 = vadd.f32 %v433, %v1346
        %v1348 = vpop.f32.mrf.mxu0
        %v1349 = vadd.f32 %v433, %v1348
        %v1350 = vpop.f32.mrf.mxu0
        %v1351 = vadd.f32 %v438, %v1350
        %v1352 = vpop.f32.mrf.mxu0
        %v1353 = vadd.f32 %v438, %v1352
        %1354 = vmatprep.mubr.bf16.mxu0 0
        %1355 = vmatmul.mubr.bf16.gmra.mxu0 %v655
        %v1356 = vpop.f32.mrf.mxu0
        %v1357 = vadd.f32 %v443, %v1356
        %v1358 = vpop.f32.mrf.mxu0
        %v1359 = vadd.f32 %v443, %v1358
        %v1360 = vpop.f32.mrf.mxu0
        %v1361 = vadd.f32 %v448, %v1360
        %v1362 = vpop.f32.mrf.mxu0
        %v1363 = vadd.f32 %v448, %v1362
        %1364 = vmatprep.mubr.bf16.mxu0 0
        %1365 = vmatmul.mubr.bf16.gmra.mxu0 %v656
        %v1366 = vpop.f32.mrf.mxu0
        %v1367 = vadd.f32 %v453, %v1366
        %v1368 = vpop.f32.mrf.mxu0
        %v1369 = vadd.f32 %v453, %v1368
        %v1370 = vpop.f32.mrf.mxu0
        %v1371 = vadd.f32 %v458, %v1370
        %v1372 = vpop.f32.mrf.mxu0
        %v1373 = vadd.f32 %v458, %v1372
        %1374 = vmatprep.mubr.bf16.mxu0 0
        %1375 = vmatmul.mubr.bf16.gmra.mxu0 %v657
        %v1376 = vpop.f32.mrf.mxu0
        %v1377 = vadd.f32 %v463, %v1376
        %v1378 = vpop.f32.mrf.mxu0
        %v1379 = vadd.f32 %v463, %v1378
        %v1380 = vpop.f32.mrf.mxu0
        %v1381 = vadd.f32 %v468, %v1380
        %v1382 = vpop.f32.mrf.mxu0
        %v1383 = vadd.f32 %v468, %v1382
        %1384 = vmatprep.mubr.bf16.mxu0 0
        %1385 = vmatmul.mubr.bf16.gmra.mxu0 %v658
        %v1386 = vpop.f32.mrf.mxu0
        %v1387 = vadd.f32 %v473, %v1386
        %v1388 = vpop.f32.mrf.mxu0
        %v1389 = vadd.f32 %v473, %v1388
        %v1390 = vpop.f32.mrf.mxu0
        %v1391 = vadd.f32 %v478, %v1390
        %v1392 = vpop.f32.mrf.mxu0
        %v1393 = vadd.f32 %v478, %v1392
        %1394 = vmatprep.mubr.bf16.mxu0 0
        %1395 = vmatmul.mubr.bf16.gmra.mxu0 %v659
        %v1396 = vpop.f32.mrf.mxu0
        %v1397 = vadd.f32 %v483, %v1396
        %v1398 = vpop.f32.mrf.mxu0
        %v1399 = vadd.f32 %v483, %v1398
        %v1400 = vpop.f32.mrf.mxu0
        %v1401 = vadd.f32 %v488, %v1400
        %v1402 = vpop.f32.mrf.mxu0
        %v1403 = vadd.f32 %v488, %v1402
        %1404 = vmatprep.mubr.bf16.mxu0 0
        %1405 = vmatmul.mubr.bf16.gmra.mxu0 %v660
        %v1406 = vpop.f32.mrf.mxu0
        %v1407 = vadd.f32 %v493, %v1406
        %v1408 = vpop.f32.mrf.mxu0
        %v1409 = vadd.f32 %v493, %v1408
        %v1410 = vpop.f32.mrf.mxu0
        %v1411 = vadd.f32 %v498, %v1410
        %v1412 = vpop.f32.mrf.mxu0
        %v1413 = vadd.f32 %v498, %v1412
        %1414 = vmatprep.mubr.bf16.mxu0 0
        %1415 = vmatmul.mubr.bf16.gmra.mxu0 %v661
        %v1416 = vpop.f32.mrf.mxu0
        %v1417 = vadd.f32 %v503, %v1416
        %v1418 = vpop.f32.mrf.mxu0
        %v1419 = vadd.f32 %v503, %v1418
        %v1420 = vpop.f32.mrf.mxu0
        %v1421 = vadd.f32 %v508, %v1420
        %v1422 = vpop.f32.mrf.mxu0
        %v1423 = vadd.f32 %v508, %v1422
        %1424 = vmatprep.mubr.bf16.mxu0 0
        %1425 = vmatmul.mubr.bf16.gmra.mxu0 %v662
        %v1426 = vpop.f32.mrf.mxu0
        %v1427 = vadd.f32 %v513, %v1426
        %v1428 = vpop.f32.mrf.mxu0
        %v1429 = vadd.f32 %v513, %v1428
        %v1430 = vpop.f32.mrf.mxu0
        %v1431 = vadd.f32 %v518, %v1430
        %v1432 = vpop.f32.mrf.mxu0
        %v1433 = vadd.f32 %v518, %v1432
        %1434 = vmatprep.mubr.bf16.mxu0 0
        %1435 = vmatmul.mubr.bf16.gmra.mxu0 %v663
        %v1436 = vpop.f32.mrf.mxu0
        %v1437 = vadd.f32 %v523, %v1436
        %v1438 = vpop.f32.mrf.mxu0
        %v1439 = vadd.f32 %v523, %v1438
        %v1440 = vpop.f32.mrf.mxu0
        %v1441 = vadd.f32 %v528, %v1440
        %v1442 = vpop.f32.mrf.mxu0
        %v1443 = vadd.f32 %v528, %v1442
        %1444 = vmatprep.mubr.bf16.mxu0 0
        %1445 = vmatmul.mubr.bf16.gmra.mxu0 %v664
        %v1446 = vpop.f32.mrf.mxu0
        %v1447 = vadd.f32 %v533, %v1446
        %v1448 = vpop.f32.mrf.mxu0
        %v1449 = vadd.f32 %v533, %v1448
        %v1450 = vpop.f32.mrf.mxu0
        %v1451 = vadd.f32 %v538, %v1450
        %v1452 = vpop.f32.mrf.mxu0
        %v1453 = vadd.f32 %v538, %v1452
        %1454 = vmatprep.mubr.bf16.mxu0 0
        %1455 = vmatmul.mubr.bf16.gmra.mxu0 %v665
        %v1456 = vpop.f32.mrf.mxu0
        %v1457 = vadd.f32 %v543, %v1456
        %v1458 = vpop.f32.mrf.mxu0
        %v1459 = vadd.f32 %v543, %v1458
        %v1460 = vpop.f32.mrf.mxu0
        %v1461 = vadd.f32 %v548, %v1460
        %v1462 = vpop.f32.mrf.mxu0
        %v1463 = vadd.f32 %v548, %v1462
        %1464 = vmatprep.mubr.bf16.mxu0 0
        %1465 = vmatmul.mubr.bf16.gmra.mxu0 %v666
        %v1466 = vpop.f32.mrf.mxu0
        %v1467 = vadd.f32 %v553, %v1466
        %v1468 = vpop.f32.mrf.mxu0
        %v1469 = vadd.f32 %v553, %v1468
        %v1470 = vpop.f32.mrf.mxu0
        %v1471 = vadd.f32 %v558, %v1470
        %v1472 = vpop.f32.mrf.mxu0
        %v1473 = vadd.f32 %v558, %v1472
        %1474 = vmatprep.mubr.bf16.mxu0 0
        %1475 = vmatmul.mubr.bf16.gmra.mxu0 %v667
        %v1476 = vpop.f32.mrf.mxu0
        %v1477 = vadd.f32 %v563, %v1476
        %v1478 = vpop.f32.mrf.mxu0
        %v1479 = vadd.f32 %v563, %v1478
        %v1480 = vpop.f32.mrf.mxu0
        %v1481 = vadd.f32 %v568, %v1480
        %v1482 = vpop.f32.mrf.mxu0
        %v1483 = vadd.f32 %v568, %v1482
        %1484 = vmatprep.mubr.bf16.mxu0 0
        %1485 = vmatmul.mubr.bf16.gmra.mxu0 %v668
        %v1486 = vpop.f32.mrf.mxu0
        %v1487 = vadd.f32 %v573, %v1486
        %v1488 = vpop.f32.mrf.mxu0
        %v1489 = vadd.f32 %v573, %v1488
        %v1490 = vpop.f32.mrf.mxu0
        %v1491 = vadd.f32 %v578, %v1490
        %v1492 = vpop.f32.mrf.mxu0
        %v1493 = vadd.f32 %v578, %v1492
        %1494 = vmatprep.mubr.bf16.mxu0 0
        %1495 = vmatmul.mubr.bf16.gmra.mxu0 %v669
        %v1496 = vpop.f32.mrf.mxu0
        %v1497 = vadd.f32 %v583, %v1496
        %v1498 = vpop.f32.mrf.mxu0
        %v1499 = vadd.f32 %v583, %v1498
        %v1500 = vpop.f32.mrf.mxu0
        %v1501 = vadd.f32 %v588, %v1500
        %v1502 = vpop.f32.mrf.mxu0
        %v1503 = vadd.f32 %v588, %v1502
        %1504 = vdwg.mxu0
        %v1505 = vmax.f32 %v961, 0.0
        %v1506 = vmax.f32 %v963, 0.0
        %v1507 = vmax.f32 %v1154, 0.0
        %v1508 = vmax.f32 %v1156, 0.0
        %v1509 = vmax.f32 %v1347, 0.0
        %v1510 = vmax.f32 %v1349, 0.0
        %v1511 = vmax.f32 %v965, 0.0
        %v1512 = vmax.f32 %v967, 0.0
        %v1513 = vmax.f32 %v1158, 0.0
        %v1514 = vmax.f32 %v1160, 0.0
        %v1515 = vmax.f32 %v1351, 0.0
        %v1516 = vmax.f32 %v1353, 0.0
        %v1517 = vmax.f32 %v971, 0.0
        %v1518 = vmax.f32 %v973, 0.0
        %v1519 = vmax.f32 %v1164, 0.0
        %v1520 = vmax.f32 %v1166, 0.0
        %v1521 = vmax.f32 %v1357, 0.0
        %v1522 = vmax.f32 %v1359, 0.0
        %v1523 = vmax.f32 %v975, 0.0
        %v1524 = vmax.f32 %v977, 0.0
        %v1525 = vmax.f32 %v1168, 0.0
        %v1526 = vmax.f32 %v1170, 0.0
        %v1527 = vmax.f32 %v1361, 0.0
        %v1528 = vmax.f32 %v1363, 0.0
        %v1529 = vmax.f32 %v981, 0.0
        %v1530 = vmax.f32 %v983, 0.0
        %v1531 = vmax.f32 %v1174, 0.0
        %v1532 = vmax.f32 %v1176, 0.0
        %v1533 = vmax.f32 %v1367, 0.0
        %v1534 = vmax.f32 %v1369, 0.0
        %v1535 = vmax.f32 %v985, 0.0
        %v1536 = vmax.f32 %v987, 0.0
        %v1537 = vmax.f32 %v1178, 0.0
        %v1538 = vmax.f32 %v1180, 0.0
        %v1539 = vmax.f32 %v1371, 0.0
        %v1540 = vmax.f32 %v1373, 0.0
        %v1541 = vmax.f32 %v991, 0.0
        %v1542 = vmax.f32 %v993, 0.0
        %v1543 = vmax.f32 %v1184, 0.0
        %v1544 = vmax.f32 %v1186, 0.0
        %v1545 = vmax.f32 %v1377, 0.0
        %v1546 = vmax.f32 %v1379, 0.0
        %v1547 = vmax.f32 %v995, 0.0
        %v1548 = vmax.f32 %v997, 0.0
        %v1549 = vmax.f32 %v1188, 0.0
        %v1550 = vmax.f32 %v1190, 0.0
        %v1551 = vmax.f32 %v1381, 0.0
        %v1552 = vmax.f32 %v1383, 0.0
        %v1553 = vmax.f32 %v1001, 0.0
        %v1554 = vmax.f32 %v1003, 0.0
        %v1555 = vmax.f32 %v1194, 0.0
        %v1556 = vmax.f32 %v1196, 0.0
        %v1557 = vmax.f32 %v1387, 0.0
        %v1558 = vmax.f32 %v1389, 0.0
        %v1559 = vmax.f32 %v1005, 0.0
        %v1560 = vmax.f32 %v1007, 0.0
        %v1561 = vmax.f32 %v1198, 0.0
        %v1562 = vmax.f32 %v1200, 0.0
        %v1563 = vmax.f32 %v1391, 0.0
        %v1564 = vmax.f32 %v1393, 0.0
        %v1565 = vmax.f32 %v1011, 0.0
        %v1566 = vmax.f32 %v1013, 0.0
        %v1567 = vmax.f32 %v1204, 0.0
        %v1568 = vmax.f32 %v1206, 0.0
        %v1569 = vmax.f32 %v1397, 0.0
        %v1570 = vmax.f32 %v1399, 0.0
        %v1571 = vmax.f32 %v1015, 0.0
        %v1572 = vmax.f32 %v1017, 0.0
        %v1573 = vmax.f32 %v1208, 0.0
        %v1574 = vmax.f32 %v1210, 0.0
        %v1575 = vmax.f32 %v1401, 0.0
        %v1576 = vmax.f32 %v1403, 0.0
        %v1577 = vmax.f32 %v1021, 0.0
        %v1578 = vmax.f32 %v1023, 0.0
        %v1579 = vmax.f32 %v1214, 0.0
        %v1580 = vmax.f32 %v1216, 0.0
        %v1581 = vmax.f32 %v1407, 0.0
        %v1582 = vmax.f32 %v1409, 0.0
        %v1583 = vmax.f32 %v1025, 0.0
        %v1584 = vmax.f32 %v1027, 0.0
        %v1585 = vmax.f32 %v1218, 0.0
        %v1586 = vmax.f32 %v1220, 0.0
        %v1587 = vmax.f32 %v1411, 0.0
        %v1588 = vmax.f32 %v1413, 0.0
        %v1589 = vmax.f32 %v1031, 0.0
        %v1590 = vmax.f32 %v1033, 0.0
        %v1591 = vmax.f32 %v1224, 0.0
        %v1592 = vmax.f32 %v1226, 0.0
        %v1593 = vmax.f32 %v1417, 0.0
        %v1594 = vmax.f32 %v1419, 0.0
        %v1595 = vmax.f32 %v1035, 0.0
        %v1596 = vmax.f32 %v1037, 0.0
        %v1597 = vmax.f32 %v1228, 0.0
        %v1598 = vmax.f32 %v1230, 0.0
        %v1599 = vmax.f32 %v1421, 0.0
        %v1600 = vmax.f32 %v1423, 0.0
        %v1601 = vmax.f32 %v1041, 0.0
        %v1602 = vmax.f32 %v1043, 0.0
        %v1603 = vmax.f32 %v1234, 0.0
        %v1604 = vmax.f32 %v1236, 0.0
        %v1605 = vmax.f32 %v1427, 0.0
        %v1606 = vmax.f32 %v1429, 0.0
        %v1607 = vmax.f32 %v1045, 0.0
        %v1608 = vmax.f32 %v1047, 0.0
        %v1609 = vmax.f32 %v1238, 0.0
        %v1610 = vmax.f32 %v1240, 0.0
        %v1611 = vmax.f32 %v1431, 0.0
        %v1612 = vmax.f32 %v1433, 0.0
        %v1613 = vmax.f32 %v1051, 0.0
        %v1614 = vmax.f32 %v1053, 0.0
        %v1615 = vmax.f32 %v1244, 0.0
        %v1616 = vmax.f32 %v1246, 0.0
        %v1617 = vmax.f32 %v1437, 0.0
        %v1618 = vmax.f32 %v1439, 0.0
        %v1619 = vmax.f32 %v1055, 0.0
        %v1620 = vmax.f32 %v1057, 0.0
        %v1621 = vmax.f32 %v1248, 0.0
        %v1622 = vmax.f32 %v1250, 0.0
        %v1623 = vmax.f32 %v1441, 0.0
        %v1624 = vmax.f32 %v1443, 0.0
        %v1625 = vmax.f32 %v1061, 0.0
        %v1626 = vmax.f32 %v1063, 0.0
        %v1627 = vmax.f32 %v1254, 0.0
        %v1628 = vmax.f32 %v1256, 0.0
        %v1629 = vmax.f32 %v1447, 0.0
        %v1630 = vmax.f32 %v1449, 0.0
        %v1631 = vmax.f32 %v1065, 0.0
        %v1632 = vmax.f32 %v1067, 0.0
        %v1633 = vmax.f32 %v1258, 0.0
        %v1634 = vmax.f32 %v1260, 0.0
        %v1635 = vmax.f32 %v1451, 0.0
        %v1636 = vmax.f32 %v1453, 0.0
        %v1637 = vmax.f32 %v1071, 0.0
        %v1638 = vmax.f32 %v1073, 0.0
        %v1639 = vmax.f32 %v1264, 0.0
        %v1640 = vmax.f32 %v1266, 0.0
        %v1641 = vmax.f32 %v1457, 0.0
        %v1642 = vmax.f32 %v1459, 0.0
        %v1643 = vmax.f32 %v1075, 0.0
        %v1644 = vmax.f32 %v1077, 0.0
        %v1645 = vmax.f32 %v1268, 0.0
        %v1646 = vmax.f32 %v1270, 0.0
        %v1647 = vmax.f32 %v1461, 0.0
        %v1648 = vmax.f32 %v1463, 0.0
        %v1649 = vmax.f32 %v1081, 0.0
        %v1650 = vmax.f32 %v1083, 0.0
        %v1651 = vmax.f32 %v1274, 0.0
        %v1652 = vmax.f32 %v1276, 0.0
        %v1653 = vmax.f32 %v1467, 0.0
        %v1654 = vmax.f32 %v1469, 0.0
        %v1655 = vmax.f32 %v1085, 0.0
        %v1656 = vmax.f32 %v1087, 0.0
        %v1657 = vmax.f32 %v1278, 0.0
        %v1658 = vmax.f32 %v1280, 0.0
        %v1659 = vmax.f32 %v1471, 0.0
        %v1660 = vmax.f32 %v1473, 0.0
        %v1661 = vmax.f32 %v1091, 0.0
        %v1662 = vmax.f32 %v1093, 0.0
        %v1663 = vmax.f32 %v1284, 0.0
        %v1664 = vmax.f32 %v1286, 0.0
        %v1665 = vmax.f32 %v1477, 0.0
        %v1666 = vmax.f32 %v1479, 0.0
        %v1667 = vmax.f32 %v1095, 0.0
        %v1668 = vmax.f32 %v1097, 0.0
        %v1669 = vmax.f32 %v1288, 0.0
        %v1670 = vmax.f32 %v1290, 0.0
        %v1671 = vmax.f32 %v1481, 0.0
        %v1672 = vmax.f32 %v1483, 0.0
        %v1673 = vmax.f32 %v1101, 0.0
        %v1674 = vmax.f32 %v1103, 0.0
        %v1675 = vmax.f32 %v1294, 0.0
        %v1676 = vmax.f32 %v1296, 0.0
        %v1677 = vmax.f32 %v1487, 0.0
        %v1678 = vmax.f32 %v1489, 0.0
        %v1679 = vmax.f32 %v1105, 0.0
        %v1680 = vmax.f32 %v1107, 0.0
        %v1681 = vmax.f32 %v1298, 0.0
        %v1682 = vmax.f32 %v1300, 0.0
        %v1683 = vmax.f32 %v1491, 0.0
        %v1684 = vmax.f32 %v1493, 0.0
        %v1685 = vmax.f32 %v1111, 0.0
        %v1686 = vmax.f32 %v1113, 0.0
        %v1687 = vmax.f32 %v1304, 0.0
        %v1688 = vmax.f32 %v1306, 0.0
        %v1689 = vmax.f32 %v1497, 0.0
        %v1690 = vmax.f32 %v1499, 0.0
        %v1691 = vmax.f32 %v1115, 0.0
        %v1692 = vmax.f32 %v1117, 0.0
        %v1693 = vmax.f32 %v1308, 0.0
        %v1694 = vmax.f32 %v1310, 0.0
        %v1695 = vmax.f32 %v1501, 0.0
        %v1696 = vmax.f32 %v1503, 0.0
        %v1697 = vpack.c.bf16 %v1511, %v1505
        %v1698 = vpack.c.bf16 %v1512, %v1506
        %v1699 = vpack.c.bf16 %v1513, %v1507
        %v1700 = vpack.c.bf16 %v1514, %v1508
        %v1701 = vpack.c.bf16 %v1515, %v1509
        %v1702 = vpack.c.bf16 %v1516, %v1510
        %v1703 = vpack.c.bf16 %v1523, %v1517
        %v1704 = vpack.c.bf16 %v1524, %v1518
        %v1705 = vpack.c.bf16 %v1525, %v1519
        %v1706 = vpack.c.bf16 %v1526, %v1520
        %v1707 = vpack.c.bf16 %v1527, %v1521
        %v1708 = vpack.c.bf16 %v1528, %v1522
        %v1709 = vpack.c.bf16 %v1535, %v1529
        %v1710 = vpack.c.bf16 %v1536, %v1530
        %v1711 = vpack.c.bf16 %v1537, %v1531
        %v1712 = vpack.c.bf16 %v1538, %v1532
        %v1713 = vpack.c.bf16 %v1539, %v1533
        %v1714 = vpack.c.bf16 %v1540, %v1534
        %v1715 = vpack.c.bf16 %v1547, %v1541
        %v1716 = vpack.c.bf16 %v1548, %v1542
        %v1717 = vpack.c.bf16 %v1549, %v1543
        %v1718 = vpack.c.bf16 %v1550, %v1544
        %v1719 = vpack.c.bf16 %v1551, %v1545
        %v1720 = vpack.c.bf16 %v1552, %v1546
        %v1721 = vpack.c.bf16 %v1559, %v1553
        %v1722 = vpack.c.bf16 %v1560, %v1554
        %v1723 = vpack.c.bf16 %v1561, %v1555
        %v1724 = vpack.c.bf16 %v1562, %v1556
        %v1725 = vpack.c.bf16 %v1563, %v1557
        %v1726 = vpack.c.bf16 %v1564, %v1558
        %v1727 = vpack.c.bf16 %v1571, %v1565
        %v1728 = vpack.c.bf16 %v1572, %v1566
        %v1729 = vpack.c.bf16 %v1573, %v1567
        %v1730 = vpack.c.bf16 %v1574, %v1568
        %v1731 = vpack.c.bf16 %v1575, %v1569
        %v1732 = vpack.c.bf16 %v1576, %v1570
        %v1733 = vpack.c.bf16 %v1583, %v1577
        %v1734 = vpack.c.bf16 %v1584, %v1578
        %v1735 = vpack.c.bf16 %v1585, %v1579
        %v1736 = vpack.c.bf16 %v1586, %v1580
        %v1737 = vpack.c.bf16 %v1587, %v1581
        %v1738 = vpack.c.bf16 %v1588, %v1582
        %v1739 = vpack.c.bf16 %v1595, %v1589
        %v1740 = vpack.c.bf16 %v1596, %v1590
        %v1741 = vpack.c.bf16 %v1597, %v1591
        %v1742 = vpack.c.bf16 %v1598, %v1592
        %v1743 = vpack.c.bf16 %v1599, %v1593
        %v1744 = vpack.c.bf16 %v1600, %v1594
        %v1745 = vpack.c.bf16 %v1607, %v1601
        %v1746 = vpack.c.bf16 %v1608, %v1602
        %v1747 = vpack.c.bf16 %v1609, %v1603
        %v1748 = vpack.c.bf16 %v1610, %v1604
        %v1749 = vpack.c.bf16 %v1611, %v1605
        %v1750 = vpack.c.bf16 %v1612, %v1606
        %v1751 = vpack.c.bf16 %v1619, %v1613
        %v1752 = vpack.c.bf16 %v1620, %v1614
        %v1753 = vpack.c.bf16 %v1621, %v1615
        %v1754 = vpack.c.bf16 %v1622, %v1616
        %v1755 = vpack.c.bf16 %v1623, %v1617
        %v1756 = vpack.c.bf16 %v1624, %v1618
        %v1757 = vpack.c.bf16 %v1631, %v1625
        %v1758 = vpack.c.bf16 %v1632, %v1626
        %v1759 = vpack.c.bf16 %v1633, %v1627
        %v1760 = vpack.c.bf16 %v1634, %v1628
        %v1761 = vpack.c.bf16 %v1635, %v1629
        %v1762 = vpack.c.bf16 %v1636, %v1630
        %v1763 = vpack.c.bf16 %v1643, %v1637
        %v1764 = vpack.c.bf16 %v1644, %v1638
        %v1765 = vpack.c.bf16 %v1645, %v1639
        %v1766 = vpack.c.bf16 %v1646, %v1640
        %v1767 = vpack.c.bf16 %v1647, %v1641
        %v1768 = vpack.c.bf16 %v1648, %v1642
        %v1769 = vpack.c.bf16 %v1655, %v1649
        %v1770 = vpack.c.bf16 %v1656, %v1650
        %v1771 = vpack.c.bf16 %v1657, %v1651
        %v1772 = vpack.c.bf16 %v1658, %v1652
        %v1773 = vpack.c.bf16 %v1659, %v1653
        %v1774 = vpack.c.bf16 %v1660, %v1654
        %v1775 = vpack.c.bf16 %v1667, %v1661
        %v1776 = vpack.c.bf16 %v1668, %v1662
        %v1777 = vpack.c.bf16 %v1669, %v1663
        %v1778 = vpack.c.bf16 %v1670, %v1664
        %v1779 = vpack.c.bf16 %v1671, %v1665
        %v1780 = vpack.c.bf16 %v1672, %v1666
        %v1781 = vpack.c.bf16 %v1679, %v1673
        %v1782 = vpack.c.bf16 %v1680, %v1674
        %v1783 = vpack.c.bf16 %v1681, %v1675
        %v1784 = vpack.c.bf16 %v1682, %v1676
        %v1785 = vpack.c.bf16 %v1683, %v1677
        %v1786 = vpack.c.bf16 %v1684, %v1678
        %v1787 = vpack.c.bf16 %v1691, %v1685
        %v1788 = vpack.c.bf16 %v1692, %v1686
        %v1789 = vpack.c.bf16 %v1693, %v1687
        %v1790 = vpack.c.bf16 %v1694, %v1688
        %v1791 = vpack.c.bf16 %v1695, %v1689
        %v1792 = vpack.c.bf16 %v1696, %v1690
        %v1793 = vld [vmem:[%s5] sm:$0xff]
        %v1794 = vld [vmem:[%s5 + $0x8] sm:$0xff]
        %v1795 = vld [vmem:[%s6] sm:$0xff]
        %v1796 = vld [vmem:[%s6 + $0x8] sm:$0xff]
        %v1797 = vld [vmem:[%s3] sm:$0xff]
        %v1798 = vld [vmem:[%s3 + $0x8] sm:$0xff]
        %v1799 = vld [vmem:[%s3 + $0x10] sm:$0xff]
        %v1800 = vld [vmem:[%s3 + $0x18] sm:$0xff]
        %v1801 = vld [vmem:[%s3 + $0x20] sm:$0xff]
        %v1802 = vld [vmem:[%s3 + $0x28] sm:$0xff]
        %v1803 = vld [vmem:[%s3 + $0x30] sm:$0xff]
        %v1804 = vld [vmem:[%s3 + $0x38] sm:$0xff]
        %v1805 = vld [vmem:[%s3 + $0x40] sm:$0xff]
        %v1806 = vld [vmem:[%s3 + $0x48] sm:$0xff]
        %v1807 = vld [vmem:[%s3 + $0x50] sm:$0xff]
        %v1808 = vld [vmem:[%s3 + $0x58] sm:$0xff]
        %v1809 = vld [vmem:[%s3 + $0x60] sm:$0xff]
        %v1810 = vld [vmem:[%s3 + $0x68] sm:$0xff]
        %v1811 = vld [vmem:[%s3 + $0x70] sm:$0xff]
        %v1812 = vld [vmem:[%s3 + $0x78] sm:$0xff]
        %v1813 = vld [vmem:[%s3 + $0x80] sm:$0xff]
        %v1814 = vld [vmem:[%s3 + $0x88] sm:$0xff]
        %v1815 = vld [vmem:[%s3 + $0x90] sm:$0xff]
        %v1816 = vld [vmem:[%s3 + $0x98] sm:$0xff]
        %v1817 = vld [vmem:[%s3 + $0xa0] sm:$0xff]
        %v1818 = vld [vmem:[%s3 + $0xa8] sm:$0xff]
        %v1819 = vld [vmem:[%s3 + $0xb0] sm:$0xff]
        %v1820 = vld [vmem:[%s3 + $0xb8] sm:$0xff]
        %v1821 = vld [vmem:[%s3 + $0xc0] sm:$0xff]
        %v1822 = vld [vmem:[%s3 + $0xc8] sm:$0xff]
        %v1823 = vld [vmem:[%s3 + $0xd0] sm:$0xff]
        %v1824 = vld [vmem:[%s3 + $0xd8] sm:$0xff]
        %v1825 = vld [vmem:[%s3 + $0xe0] sm:$0xff]
        %v1826 = vld [vmem:[%s3 + $0xe8] sm:$0xff]
        %v1827 = vld [vmem:[%s3 + $0xf0] sm:$0xff]
        %v1828 = vld [vmem:[%s3 + $0xf8] sm:$0xff]
        %v1829 = vld [vmem:[%s4] sm:$0xff]
        %v1830 = vld [vmem:[%s4 + $0x8] sm:$0xff]
        %v1831 = vld [vmem:[%s4 + $0x10] sm:$0xff]
        %v1832 = vld [vmem:[%s4 + $0x18] sm:$0xff]
        %v1833 = vld [vmem:[%s4 + $0x20] sm:$0xff]
        %v1834 = vld [vmem:[%s4 + $0x28] sm:$0xff]
        %v1835 = vld [vmem:[%s4 + $0x30] sm:$0xff]
        %v1836 = vld [vmem:[%s4 + $0x38] sm:$0xff]
        %v1837 = vld [vmem:[%s4 + $0x40] sm:$0xff]
        %v1838 = vld [vmem:[%s4 + $0x48] sm:$0xff]
        %v1839 = vld [vmem:[%s4 + $0x50] sm:$0xff]
        %v1840 = vld [vmem:[%s4 + $0x58] sm:$0xff]
        %v1841 = vld [vmem:[%s4 + $0x60] sm:$0xff]
        %v1842 = vld [vmem:[%s4 + $0x68] sm:$0xff]
        %v1843 = vld [vmem:[%s4 + $0x70] sm:$0xff]
        %v1844 = vld [vmem:[%s4 + $0x78] sm:$0xff]
        %v1845 = vld [vmem:[%s4 + $0x80] sm:$0xff]
        %v1846 = vld [vmem:[%s4 + $0x88] sm:$0xff]
        %v1847 = vld [vmem:[%s4 + $0x90] sm:$0xff]
        %v1848 = vld [vmem:[%s4 + $0x98] sm:$0xff]
        %v1849 = vld [vmem:[%s4 + $0xa0] sm:$0xff]
        %v1850 = vld [vmem:[%s4 + $0xa8] sm:$0xff]
        %v1851 = vld [vmem:[%s4 + $0xb0] sm:$0xff]
        %v1852 = vld [vmem:[%s4 + $0xb8] sm:$0xff]
        %v1853 = vld [vmem:[%s4 + $0xc0] sm:$0xff]
        %v1854 = vld [vmem:[%s4 + $0xc8] sm:$0xff]
        %v1855 = vld [vmem:[%s4 + $0xd0] sm:$0xff]
        %v1856 = vld [vmem:[%s4 + $0xd8] sm:$0xff]
        %v1857 = vld [vmem:[%s4 + $0xe0] sm:$0xff]
        %v1858 = vld [vmem:[%s4 + $0xe8] sm:$0xff]
        %v1859 = vld [vmem:[%s4 + $0xf0] sm:$0xff]
        %v1860 = vld [vmem:[%s4 + $0xf8] sm:$0xff]
        %1862 = vset.pattern.permute.xlu0 0
        %1863 = vperm.xlu0 %1862, %v1829
        %v1864 = vpop.permute.xlu0 %1863
        %1867 = vset.pattern.permute.xlu0 0
        %1868 = vperm.xlu0 %1867, %v1830
        %v1869 = vpop.permute.xlu0 %1868
        %1872 = vset.pattern.permute.xlu0 0
        %1873 = vperm.xlu0 %1872, %v1831
        %v1874 = vpop.permute.xlu0 %1873
        %1877 = vset.pattern.permute.xlu0 0
        %1878 = vperm.xlu0 %1877, %v1832
        %v1879 = vpop.permute.xlu0 %1878
        %1882 = vset.pattern.permute.xlu0 0
        %1883 = vperm.xlu0 %1882, %v1833
        %v1884 = vpop.permute.xlu0 %1883
        %1887 = vset.pattern.permute.xlu0 0
        %1888 = vperm.xlu0 %1887, %v1834
        %v1889 = vpop.permute.xlu0 %1888
        %1892 = vset.pattern.permute.xlu0 0
        %1893 = vperm.xlu0 %1892, %v1835
        %v1894 = vpop.permute.xlu0 %1893
        %1897 = vset.pattern.permute.xlu0 0
        %1898 = vperm.xlu0 %1897, %v1836
        %v1899 = vpop.permute.xlu0 %1898
        %1902 = vset.pattern.permute.xlu0 0
        %1903 = vperm.xlu0 %1902, %v1837
        %v1904 = vpop.permute.xlu0 %1903
        %1907 = vset.pattern.permute.xlu0 0
        %1908 = vperm.xlu0 %1907, %v1838
        %v1909 = vpop.permute.xlu0 %1908
        %1912 = vset.pattern.permute.xlu0 0
        %1913 = vperm.xlu0 %1912, %v1839
        %v1914 = vpop.permute.xlu0 %1913
        %1917 = vset.pattern.permute.xlu0 0
        %1918 = vperm.xlu0 %1917, %v1840
        %v1919 = vpop.permute.xlu0 %1918
        %1922 = vset.pattern.permute.xlu0 0
        %1923 = vperm.xlu0 %1922, %v1841
        %v1924 = vpop.permute.xlu0 %1923
        %1927 = vset.pattern.permute.xlu0 0
        %1928 = vperm.xlu0 %1927, %v1842
        %v1929 = vpop.permute.xlu0 %1928
        %1932 = vset.pattern.permute.xlu0 0
        %1933 = vperm.xlu0 %1932, %v1843
        %v1934 = vpop.permute.xlu0 %1933
        %1937 = vset.pattern.permute.xlu0 0
        %1938 = vperm.xlu0 %1937, %v1844
        %v1939 = vpop.permute.xlu0 %1938
        %1942 = vset.pattern.permute.xlu0 0
        %1943 = vperm.xlu0 %1942, %v1845
        %v1944 = vpop.permute.xlu0 %1943
        %1947 = vset.pattern.permute.xlu0 0
        %1948 = vperm.xlu0 %1947, %v1846
        %v1949 = vpop.permute.xlu0 %1948
        %1952 = vset.pattern.permute.xlu0 0
        %1953 = vperm.xlu0 %1952, %v1847
        %v1954 = vpop.permute.xlu0 %1953
        %1957 = vset.pattern.permute.xlu0 0
        %1958 = vperm.xlu0 %1957, %v1848
        %v1959 = vpop.permute.xlu0 %1958
        %1962 = vset.pattern.permute.xlu0 0
        %1963 = vperm.xlu0 %1962, %v1849
        %v1964 = vpop.permute.xlu0 %1963
        %1967 = vset.pattern.permute.xlu0 0
        %1968 = vperm.xlu0 %1967, %v1850
        %v1969 = vpop.permute.xlu0 %1968
        %1972 = vset.pattern.permute.xlu0 0
        %1973 = vperm.xlu0 %1972, %v1851
        %v1974 = vpop.permute.xlu0 %1973
        %1977 = vset.pattern.permute.xlu0 0
        %1978 = vperm.xlu0 %1977, %v1852
        %v1979 = vpop.permute.xlu0 %1978
        %1982 = vset.pattern.permute.xlu0 0
        %1983 = vperm.xlu0 %1982, %v1853
        %v1984 = vpop.permute.xlu0 %1983
        %1987 = vset.pattern.permute.xlu0 0
        %1988 = vperm.xlu0 %1987, %v1854
        %v1989 = vpop.permute.xlu0 %1988
        %1992 = vset.pattern.permute.xlu0 0
        %1993 = vperm.xlu0 %1992, %v1855
        %v1994 = vpop.permute.xlu0 %1993
        %1997 = vset.pattern.permute.xlu0 0
        %1998 = vperm.xlu0 %1997, %v1856
        %v1999 = vpop.permute.xlu0 %1998
        %2002 = vset.pattern.permute.xlu0 0
        %2003 = vperm.xlu0 %2002, %v1857
        %v2004 = vpop.permute.xlu0 %2003
        %2007 = vset.pattern.permute.xlu0 0
        %2008 = vperm.xlu0 %2007, %v1858
        %v2009 = vpop.permute.xlu0 %2008
        %2012 = vset.pattern.permute.xlu0 0
        %2013 = vperm.xlu0 %2012, %v1859
        %v2014 = vpop.permute.xlu0 %2013
        %2017 = vset.pattern.permute.xlu0 0
        %2018 = vperm.xlu0 %2017, %v1860
        %v2019 = vpop.permute.xlu0 %2018
        %v2053 = vunpack.c.l.b16 %v1797
        %v2054 = vunpack.c.h.b16 %v1797
        %v2055 = vunpack.c.l.b16 %v1798
        %v2056 = vunpack.c.h.b16 %v1798
        %v2057 = vunpack.c.l.b16 %v1799
        %v2058 = vunpack.c.h.b16 %v1799
        %v2059 = vunpack.c.l.b16 %v1800
        %v2060 = vunpack.c.h.b16 %v1800
        %v2061 = vunpack.c.l.b16 %v1801
        %v2062 = vunpack.c.h.b16 %v1801
        %v2063 = vunpack.c.l.b16 %v1802
        %v2064 = vunpack.c.h.b16 %v1802
        %v2065 = vunpack.c.l.b16 %v1803
        %v2066 = vunpack.c.h.b16 %v1803
        %v2067 = vunpack.c.l.b16 %v1804
        %v2068 = vunpack.c.h.b16 %v1804
        %v2069 = vunpack.c.l.b16 %v1805
        %v2070 = vunpack.c.h.b16 %v1805
        %v2071 = vunpack.c.l.b16 %v1806
        %v2072 = vunpack.c.h.b16 %v1806
        %v2073 = vunpack.c.l.b16 %v1807
        %v2074 = vunpack.c.h.b16 %v1807
        %v2075 = vunpack.c.l.b16 %v1808
        %v2076 = vunpack.c.h.b16 %v1808
        %v2077 = vunpack.c.l.b16 %v1809
        %v2078 = vunpack.c.h.b16 %v1809
        %v2079 = vunpack.c.l.b16 %v1810
        %v2080 = vunpack.c.h.b16 %v1810
        %v2081 = vunpack.c.l.b16 %v1811
        %v2082 = vunpack.c.h.b16 %v1811
        %v2083 = vunpack.c.l.b16 %v1812
        %v2084 = vunpack.c.h.b16 %v1812
        %v2085 = vunpack.c.l.b16 %v1813
        %v2086 = vunpack.c.h.b16 %v1813
        %v2087 = vunpack.c.l.b16 %v1814
        %v2088 = vunpack.c.h.b16 %v1814
        %v2089 = vunpack.c.l.b16 %v1815
        %v2090 = vunpack.c.h.b16 %v1815
        %v2091 = vunpack.c.l.b16 %v1816
        %v2092 = vunpack.c.h.b16 %v1816
        %v2093 = vunpack.c.l.b16 %v1817
        %v2094 = vunpack.c.h.b16 %v1817
        %v2095 = vunpack.c.l.b16 %v1818
        %v2096 = vunpack.c.h.b16 %v1818
        %v2097 = vunpack.c.l.b16 %v1819
        %v2098 = vunpack.c.h.b16 %v1819
        %v2099 = vunpack.c.l.b16 %v1820
        %v2100 = vunpack.c.h.b16 %v1820
        %v2101 = vunpack.c.l.b16 %v1821
        %v2102 = vunpack.c.h.b16 %v1821
        %v2103 = vunpack.c.l.b16 %v1822
        %v2104 = vunpack.c.h.b16 %v1822
        %v2105 = vunpack.c.l.b16 %v1823
        %v2106 = vunpack.c.h.b16 %v1823
        %v2107 = vunpack.c.l.b16 %v1824
        %v2108 = vunpack.c.h.b16 %v1824
        %v2109 = vunpack.c.l.b16 %v1825
        %v2110 = vunpack.c.h.b16 %v1825
        %v2111 = vunpack.c.l.b16 %v1826
        %v2112 = vunpack.c.h.b16 %v1826
        %v2113 = vunpack.c.l.b16 %v1827
        %v2114 = vunpack.c.h.b16 %v1827
        %v2115 = vunpack.c.l.b16 %v1828
        %v2116 = vunpack.c.h.b16 %v1828
        %v2117 = vpack.c.b16 %v2055, %v2053
        %v2118 = vpack.c.b16 %v2056, %v2054
        %v2119 = vpack.c.b16 %v2059, %v2057
        %v2120 = vpack.c.b16 %v2060, %v2058
        %v2121 = vpack.c.b16 %v2063, %v2061
        %v2122 = vpack.c.b16 %v2064, %v2062
        %v2123 = vpack.c.b16 %v2067, %v2065
        %v2124 = vpack.c.b16 %v2068, %v2066
        %v2125 = vpack.c.b16 %v2071, %v2069
        %v2126 = vpack.c.b16 %v2072, %v2070
        %v2127 = vpack.c.b16 %v2075, %v2073
        %v2128 = vpack.c.b16 %v2076, %v2074
        %v2129 = vpack.c.b16 %v2079, %v2077
        %v2130 = vpack.c.b16 %v2080, %v2078
        %v2131 = vpack.c.b16 %v2083, %v2081
        %v2132 = vpack.c.b16 %v2084, %v2082
        %v2133 = vpack.c.b16 %v2087, %v2085
        %v2134 = vpack.c.b16 %v2088, %v2086
        %v2135 = vpack.c.b16 %v2091, %v2089
        %v2136 = vpack.c.b16 %v2092, %v2090
        %v2137 = vpack.c.b16 %v2095, %v2093
        %v2138 = vpack.c.b16 %v2096, %v2094
        %v2139 = vpack.c.b16 %v2099, %v2097
        %v2140 = vpack.c.b16 %v2100, %v2098
        %v2141 = vpack.c.b16 %v2103, %v2101
        %v2142 = vpack.c.b16 %v2104, %v2102
        %v2143 = vpack.c.b16 %v2107, %v2105
        %v2144 = vpack.c.b16 %v2108, %v2106
        %v2145 = vpack.c.b16 %v2111, %v2109
        %v2146 = vpack.c.b16 %v2112, %v2110
        %v2147 = vpack.c.b16 %v2115, %v2113
        %v2148 = vpack.c.b16 %v2116, %v2114
        %2181 = vmatprep.subr.bf16.mxu0 %v1740
        %2182 = vmatpush1.bf16.msra.mxu0 %v1739
        %2183 = vmatprep.subr.bf16.mxu0 %v1734
        %2184 = vmatpush1.bf16.msra.mxu0 %v1733
        %2185 = vmatprep.subr.bf16.mxu0 %v1728
        %2186 = vmatpush1.bf16.msra.mxu0 %v1727
        %2187 = vmatprep.subr.bf16.mxu0 %v1722
        %2188 = vmatpush1.bf16.msra.mxu0 %v1721
        %2189 = vmatprep.subr.bf16.mxu0 %v1716
        %2190 = vmatpush1.bf16.msra.mxu0 %v1715
        %2191 = vmatprep.subr.bf16.mxu0 %v1710
        %2192 = vmatpush1.bf16.msra.mxu0 %v1709
        %2193 = vmatprep.subr.bf16.mxu0 %v1704
        %2194 = vmatpush1.bf16.msra.mxu0 %v1703
        %2195 = vmatprep.subr.bf16.mxu0 %v1698
        %2196 = vmatpush1.bf16.msra.mxu0 %v1697
        %2197 = vmatprep.subr.bf16.mxu0 %v1788
        %2198 = vmatpush2.bf16.msra.mxu0 %v1787
        %2199 = vmatprep.subr.bf16.mxu0 %v1782
        %2200 = vmatpush2.bf16.msra.mxu0 %v1781
        %2201 = vmatprep.subr.bf16.mxu0 %v1776
        %2202 = vmatpush2.bf16.msra.mxu0 %v1775
        %2203 = vmatprep.subr.bf16.mxu0 %v1770
        %2204 = vmatpush2.bf16.msra.mxu0 %v1769
        %2205 = vmatprep.subr.bf16.mxu0 %v1764
        %2206 = vmatpush2.bf16.msra.mxu0 %v1763
        %2207 = vmatprep.subr.bf16.mxu0 %v1758
        %2208 = vmatpush2.bf16.msra.mxu0 %v1757
        %2209 = vmatprep.subr.bf16.mxu0 %v1752
        %2210 = vmatpush2.bf16.msra.mxu0 %v1751
        %2211 = vmatprep.subr.bf16.mxu0 %v1746
        %2212 = vmatpush2.bf16.msra.mxu0 %v1745
        %2213 = vmatprep.mubr.bf16.mxu0 %v2118
        %2214 = vmatmul.mubr.bf16.gmra.mxu0 %v2117
        %v2215 = vpop.f32.mrf.mxu0
        %v2216 = vadd.f32 %v1864, %v2215
        %v2217 = vpop.f32.mrf.mxu0
        %v2218 = vadd.f32 %v1864, %v2217
        %v2219 = vpop.f32.mrf.mxu0
        %v2220 = vadd.f32 %v1869, %v2219
        %v2221 = vpop.f32.mrf.mxu0
        %v2222 = vadd.f32 %v1869, %v2221
        %2223 = vmatprep.mubr.bf16.mxu0 %v2120
        %2224 = vmatmul.mubr.bf16.gmra.mxu0 %v2119
        %v2225 = vpop.f32.mrf.mxu0
        %v2226 = vadd.f32 %v1874, %v2225
        %v2227 = vpop.f32.mrf.mxu0
        %v2228 = vadd.f32 %v1874, %v2227
        %v2229 = vpop.f32.mrf.mxu0
        %v2230 = vadd.f32 %v1879, %v2229
        %v2231 = vpop.f32.mrf.mxu0
        %v2232 = vadd.f32 %v1879, %v2231
        %2233 = vmatprep.mubr.bf16.mxu0 %v2122
        %2234 = vmatmul.mubr.bf16.gmra.mxu0 %v2121
        %v2235 = vpop.f32.mrf.mxu0
        %v2236 = vadd.f32 %v1884, %v2235
        %v2237 = vpop.f32.mrf.mxu0
        %v2238 = vadd.f32 %v1884, %v2237
        %v2239 = vpop.f32.mrf.mxu0
        %v2240 = vadd.f32 %v1889, %v2239
        %v2241 = vpop.f32.mrf.mxu0
        %v2242 = vadd.f32 %v1889, %v2241
        %2243 = vmatprep.mubr.bf16.mxu0 %v2124
        %2244 = vmatmul.mubr.bf16.gmra.mxu0 %v2123
        %v2245 = vpop.f32.mrf.mxu0
        %v2246 = vadd.f32 %v1894, %v2245
        %v2247 = vpop.f32.mrf.mxu0
        %v2248 = vadd.f32 %v1894, %v2247
        %v2249 = vpop.f32.mrf.mxu0
        %v2250 = vadd.f32 %v1899, %v2249
        %v2251 = vpop.f32.mrf.mxu0
        %v2252 = vadd.f32 %v1899, %v2251
        %2253 = vmatprep.mubr.bf16.mxu0 %v2126
        %2254 = vmatmul.mubr.bf16.gmra.mxu0 %v2125
        %v2255 = vpop.f32.mrf.mxu0
        %v2256 = vadd.f32 %v1904, %v2255
        %v2257 = vpop.f32.mrf.mxu0
        %v2258 = vadd.f32 %v1904, %v2257
        %v2259 = vpop.f32.mrf.mxu0
        %v2260 = vadd.f32 %v1909, %v2259
        %v2261 = vpop.f32.mrf.mxu0
        %v2262 = vadd.f32 %v1909, %v2261
        %2263 = vmatprep.mubr.bf16.mxu0 %v2128
        %2264 = vmatmul.mubr.bf16.gmra.mxu0 %v2127
        %v2265 = vpop.f32.mrf.mxu0
        %v2266 = vadd.f32 %v1914, %v2265
        %v2267 = vpop.f32.mrf.mxu0
        %v2268 = vadd.f32 %v1914, %v2267
        %v2269 = vpop.f32.mrf.mxu0
        %v2270 = vadd.f32 %v1919, %v2269
        %v2271 = vpop.f32.mrf.mxu0
        %v2272 = vadd.f32 %v1919, %v2271
        %2273 = vmatprep.mubr.bf16.mxu0 %v2130
        %2274 = vmatmul.mubr.bf16.gmra.mxu0 %v2129
        %v2275 = vpop.f32.mrf.mxu0
        %v2276 = vadd.f32 %v1924, %v2275
        %v2277 = vpop.f32.mrf.mxu0
        %v2278 = vadd.f32 %v1924, %v2277
        %v2279 = vpop.f32.mrf.mxu0
        %v2280 = vadd.f32 %v1929, %v2279
        %v2281 = vpop.f32.mrf.mxu0
        %v2282 = vadd.f32 %v1929, %v2281
        %2283 = vmatprep.mubr.bf16.mxu0 %v2132
        %2284 = vmatmul.mubr.bf16.gmra.mxu0 %v2131
        %v2285 = vpop.f32.mrf.mxu0
        %v2286 = vadd.f32 %v1934, %v2285
        %v2287 = vpop.f32.mrf.mxu0
        %v2288 = vadd.f32 %v1934, %v2287
        %v2289 = vpop.f32.mrf.mxu0
        %v2290 = vadd.f32 %v1939, %v2289
        %v2291 = vpop.f32.mrf.mxu0
        %v2292 = vadd.f32 %v1939, %v2291
        %2293 = vmatprep.mubr.bf16.mxu0 %v2134
        %2294 = vmatmul.mubr.bf16.gmra.mxu0 %v2133
        %v2295 = vpop.f32.mrf.mxu0
        %v2296 = vadd.f32 %v1944, %v2295
        %v2297 = vpop.f32.mrf.mxu0
        %v2298 = vadd.f32 %v1944, %v2297
        %v2299 = vpop.f32.mrf.mxu0
        %v2300 = vadd.f32 %v1949, %v2299
        %v2301 = vpop.f32.mrf.mxu0
        %v2302 = vadd.f32 %v1949, %v2301
        %2303 = vmatprep.mubr.bf16.mxu0 %v2136
        %2304 = vmatmul.mubr.bf16.gmra.mxu0 %v2135
        %v2305 = vpop.f32.mrf.mxu0
        %v2306 = vadd.f32 %v1954, %v2305
        %v2307 = vpop.f32.mrf.mxu0
        %v2308 = vadd.f32 %v1954, %v2307
        %v2309 = vpop.f32.mrf.mxu0
        %v2310 = vadd.f32 %v1959, %v2309
        %v2311 = vpop.f32.mrf.mxu0
        %v2312 = vadd.f32 %v1959, %v2311
        %2313 = vmatprep.mubr.bf16.mxu0 %v2138
        %2314 = vmatmul.mubr.bf16.gmra.mxu0 %v2137
        %v2315 = vpop.f32.mrf.mxu0
        %v2316 = vadd.f32 %v1964, %v2315
        %v2317 = vpop.f32.mrf.mxu0
        %v2318 = vadd.f32 %v1964, %v2317
        %v2319 = vpop.f32.mrf.mxu0
        %v2320 = vadd.f32 %v1969, %v2319
        %v2321 = vpop.f32.mrf.mxu0
        %v2322 = vadd.f32 %v1969, %v2321
        %2323 = vmatprep.mubr.bf16.mxu0 %v2140
        %2324 = vmatmul.mubr.bf16.gmra.mxu0 %v2139
        %v2325 = vpop.f32.mrf.mxu0
        %v2326 = vadd.f32 %v1974, %v2325
        %v2327 = vpop.f32.mrf.mxu0
        %v2328 = vadd.f32 %v1974, %v2327
        %v2329 = vpop.f32.mrf.mxu0
        %v2330 = vadd.f32 %v1979, %v2329
        %v2331 = vpop.f32.mrf.mxu0
        %v2332 = vadd.f32 %v1979, %v2331
        %2333 = vmatprep.mubr.bf16.mxu0 %v2142
        %2334 = vmatmul.mubr.bf16.gmra.mxu0 %v2141
        %v2335 = vpop.f32.mrf.mxu0
        %v2336 = vadd.f32 %v1984, %v2335
        %v2337 = vpop.f32.mrf.mxu0
        %v2338 = vadd.f32 %v1984, %v2337
        %v2339 = vpop.f32.mrf.mxu0
        %v2340 = vadd.f32 %v1989, %v2339
        %v2341 = vpop.f32.mrf.mxu0
        %v2342 = vadd.f32 %v1989, %v2341
        %2343 = vmatprep.mubr.bf16.mxu0 %v2144
        %2344 = vmatmul.mubr.bf16.gmra.mxu0 %v2143
        %v2345 = vpop.f32.mrf.mxu0
        %v2346 = vadd.f32 %v1994, %v2345
        %v2347 = vpop.f32.mrf.mxu0
        %v2348 = vadd.f32 %v1994, %v2347
        %v2349 = vpop.f32.mrf.mxu0
        %v2350 = vadd.f32 %v1999, %v2349
        %v2351 = vpop.f32.mrf.mxu0
        %v2352 = vadd.f32 %v1999, %v2351
        %2353 = vmatprep.mubr.bf16.mxu0 %v2146
        %2354 = vmatmul.mubr.bf16.gmra.mxu0 %v2145
        %v2355 = vpop.f32.mrf.mxu0
        %v2356 = vadd.f32 %v2004, %v2355
        %v2357 = vpop.f32.mrf.mxu0
        %v2358 = vadd.f32 %v2004, %v2357
        %v2359 = vpop.f32.mrf.mxu0
        %v2360 = vadd.f32 %v2009, %v2359
        %v2361 = vpop.f32.mrf.mxu0
        %v2362 = vadd.f32 %v2009, %v2361
        %2363 = vmatprep.mubr.bf16.mxu0 %v2148
        %2364 = vmatmul.mubr.bf16.gmra.mxu0 %v2147
        %v2365 = vpop.f32.mrf.mxu0
        %v2366 = vadd.f32 %v2014, %v2365
        %v2367 = vpop.f32.mrf.mxu0
        %v2368 = vadd.f32 %v2014, %v2367
        %v2369 = vpop.f32.mrf.mxu0
        %v2370 = vadd.f32 %v2019, %v2369
        %v2371 = vpop.f32.mrf.mxu0
        %v2372 = vadd.f32 %v2019, %v2371
        %2373 = vdwg.mxu0
        %2374 = vmatprep.subr.bf16.mxu0 %v1742
        %2375 = vmatpush1.bf16.msra.mxu0 %v1741
        %2376 = vmatprep.subr.bf16.mxu0 %v1736
        %2377 = vmatpush1.bf16.msra.mxu0 %v1735
        %2378 = vmatprep.subr.bf16.mxu0 %v1730
        %2379 = vmatpush1.bf16.msra.mxu0 %v1729
        %2380 = vmatprep.subr.bf16.mxu0 %v1724
        %2381 = vmatpush1.bf16.msra.mxu0 %v1723
        %2382 = vmatprep.subr.bf16.mxu0 %v1718
        %2383 = vmatpush1.bf16.msra.mxu0 %v1717
        %2384 = vmatprep.subr.bf16.mxu0 %v1712
        %2385 = vmatpush1.bf16.msra.mxu0 %v1711
        %2386 = vmatprep.subr.bf16.mxu0 %v1706
        %2387 = vmatpush1.bf16.msra.mxu0 %v1705
        %2388 = vmatprep.subr.bf16.mxu0 %v1700
        %2389 = vmatpush1.bf16.msra.mxu0 %v1699
        %2390 = vmatprep.subr.bf16.mxu0 %v1790
        %2391 = vmatpush2.bf16.msra.mxu0 %v1789
        %2392 = vmatprep.subr.bf16.mxu0 %v1784
        %2393 = vmatpush2.bf16.msra.mxu0 %v1783
        %2394 = vmatprep.subr.bf16.mxu0 %v1778
        %2395 = vmatpush2.bf16.msra.mxu0 %v1777
        %2396 = vmatprep.subr.bf16.mxu0 %v1772
        %2397 = vmatpush2.bf16.msra.mxu0 %v1771
        %2398 = vmatprep.subr.bf16.mxu0 %v1766
        %2399 = vmatpush2.bf16.msra.mxu0 %v1765
        %2400 = vmatprep.subr.bf16.mxu0 %v1760
        %2401 = vmatpush2.bf16.msra.mxu0 %v1759
        %2402 = vmatprep.subr.bf16.mxu0 %v1754
        %2403 = vmatpush2.bf16.msra.mxu0 %v1753
        %2404 = vmatprep.subr.bf16.mxu0 %v1748
        %2405 = vmatpush2.bf16.msra.mxu0 %v1747
        %2406 = vmatprep.mubr.bf16.mxu0 %v2118
        %2407 = vmatmul.mubr.bf16.gmra.mxu0 %v2117
        %v2408 = vpop.f32.mrf.mxu0
        %v2409 = vadd.f32 %v1864, %v2408
        %v2410 = vpop.f32.mrf.mxu0
        %v2411 = vadd.f32 %v1864, %v2410
        %v2412 = vpop.f32.mrf.mxu0
        %v2413 = vadd.f32 %v1869, %v2412
        %v2414 = vpop.f32.mrf.mxu0
        %v2415 = vadd.f32 %v1869, %v2414
        %2416 = vmatprep.mubr.bf16.mxu0 %v2120
        %2417 = vmatmul.mubr.bf16.gmra.mxu0 %v2119
        %v2418 = vpop.f32.mrf.mxu0
        %v2419 = vadd.f32 %v1874, %v2418
        %v2420 = vpop.f32.mrf.mxu0
        %v2421 = vadd.f32 %v1874, %v2420
        %v2422 = vpop.f32.mrf.mxu0
        %v2423 = vadd.f32 %v1879, %v2422
        %v2424 = vpop.f32.mrf.mxu0
        %v2425 = vadd.f32 %v1879, %v2424
        %2426 = vmatprep.mubr.bf16.mxu0 %v2122
        %2427 = vmatmul.mubr.bf16.gmra.mxu0 %v2121
        %v2428 = vpop.f32.mrf.mxu0
        %v2429 = vadd.f32 %v1884, %v2428
        %v2430 = vpop.f32.mrf.mxu0
        %v2431 = vadd.f32 %v1884, %v2430
        %v2432 = vpop.f32.mrf.mxu0
        %v2433 = vadd.f32 %v1889, %v2432
        %v2434 = vpop.f32.mrf.mxu0
        %v2435 = vadd.f32 %v1889, %v2434
        %2436 = vmatprep.mubr.bf16.mxu0 %v2124
        %2437 = vmatmul.mubr.bf16.gmra.mxu0 %v2123
        %v2438 = vpop.f32.mrf.mxu0
        %v2439 = vadd.f32 %v1894, %v2438
        %v2440 = vpop.f32.mrf.mxu0
        %v2441 = vadd.f32 %v1894, %v2440
        %v2442 = vpop.f32.mrf.mxu0
        %v2443 = vadd.f32 %v1899, %v2442
        %v2444 = vpop.f32.mrf.mxu0
        %v2445 = vadd.f32 %v1899, %v2444
        %2446 = vmatprep.mubr.bf16.mxu0 %v2126
        %2447 = vmatmul.mubr.bf16.gmra.mxu0 %v2125
        %v2448 = vpop.f32.mrf.mxu0
        %v2449 = vadd.f32 %v1904, %v2448
        %v2450 = vpop.f32.mrf.mxu0
        %v2451 = vadd.f32 %v1904, %v2450
        %v2452 = vpop.f32.mrf.mxu0
        %v2453 = vadd.f32 %v1909, %v2452
        %v2454 = vpop.f32.mrf.mxu0
        %v2455 = vadd.f32 %v1909, %v2454
        %2456 = vmatprep.mubr.bf16.mxu0 %v2128
        %2457 = vmatmul.mubr.bf16.gmra.mxu0 %v2127
        %v2458 = vpop.f32.mrf.mxu0
        %v2459 = vadd.f32 %v1914, %v2458
        %v2460 = vpop.f32.mrf.mxu0
        %v2461 = vadd.f32 %v1914, %v2460
        %v2462 = vpop.f32.mrf.mxu0
        %v2463 = vadd.f32 %v1919, %v2462
        %v2464 = vpop.f32.mrf.mxu0
        %v2465 = vadd.f32 %v1919, %v2464
        %2466 = vmatprep.mubr.bf16.mxu0 %v2130
        %2467 = vmatmul.mubr.bf16.gmra.mxu0 %v2129
        %v2468 = vpop.f32.mrf.mxu0
        %v2469 = vadd.f32 %v1924, %v2468
        %v2470 = vpop.f32.mrf.mxu0
        %v2471 = vadd.f32 %v1924, %v2470
        %v2472 = vpop.f32.mrf.mxu0
        %v2473 = vadd.f32 %v1929, %v2472
        %v2474 = vpop.f32.mrf.mxu0
        %v2475 = vadd.f32 %v1929, %v2474
        %2476 = vmatprep.mubr.bf16.mxu0 %v2132
        %2477 = vmatmul.mubr.bf16.gmra.mxu0 %v2131
        %v2478 = vpop.f32.mrf.mxu0
        %v2479 = vadd.f32 %v1934, %v2478
        %v2480 = vpop.f32.mrf.mxu0
        %v2481 = vadd.f32 %v1934, %v2480
        %v2482 = vpop.f32.mrf.mxu0
        %v2483 = vadd.f32 %v1939, %v2482
        %v2484 = vpop.f32.mrf.mxu0
        %v2485 = vadd.f32 %v1939, %v2484
        %2486 = vmatprep.mubr.bf16.mxu0 %v2134
        %2487 = vmatmul.mubr.bf16.gmra.mxu0 %v2133
        %v2488 = vpop.f32.mrf.mxu0
        %v2489 = vadd.f32 %v1944, %v2488
        %v2490 = vpop.f32.mrf.mxu0
        %v2491 = vadd.f32 %v1944, %v2490
        %v2492 = vpop.f32.mrf.mxu0
        %v2493 = vadd.f32 %v1949, %v2492
        %v2494 = vpop.f32.mrf.mxu0
        %v2495 = vadd.f32 %v1949, %v2494
        %2496 = vmatprep.mubr.bf16.mxu0 %v2136
        %2497 = vmatmul.mubr.bf16.gmra.mxu0 %v2135
        %v2498 = vpop.f32.mrf.mxu0
        %v2499 = vadd.f32 %v1954, %v2498
        %v2500 = vpop.f32.mrf.mxu0
        %v2501 = vadd.f32 %v1954, %v2500
        %v2502 = vpop.f32.mrf.mxu0
        %v2503 = vadd.f32 %v1959, %v2502
        %v2504 = vpop.f32.mrf.mxu0
        %v2505 = vadd.f32 %v1959, %v2504
        %2506 = vmatprep.mubr.bf16.mxu0 %v2138
        %2507 = vmatmul.mubr.bf16.gmra.mxu0 %v2137
        %v2508 = vpop.f32.mrf.mxu0
        %v2509 = vadd.f32 %v1964, %v2508
        %v2510 = vpop.f32.mrf.mxu0
        %v2511 = vadd.f32 %v1964, %v2510
        %v2512 = vpop.f32.mrf.mxu0
        %v2513 = vadd.f32 %v1969, %v2512
        %v2514 = vpop.f32.mrf.mxu0
        %v2515 = vadd.f32 %v1969, %v2514
        %2516 = vmatprep.mubr.bf16.mxu0 %v2140
        %2517 = vmatmul.mubr.bf16.gmra.mxu0 %v2139
        %v2518 = vpop.f32.mrf.mxu0
        %v2519 = vadd.f32 %v1974, %v2518
        %v2520 = vpop.f32.mrf.mxu0
        %v2521 = vadd.f32 %v1974, %v2520
        %v2522 = vpop.f32.mrf.mxu0
        %v2523 = vadd.f32 %v1979, %v2522
        %v2524 = vpop.f32.mrf.mxu0
        %v2525 = vadd.f32 %v1979, %v2524
        %2526 = vmatprep.mubr.bf16.mxu0 %v2142
        %2527 = vmatmul.mubr.bf16.gmra.mxu0 %v2141
        %v2528 = vpop.f32.mrf.mxu0
        %v2529 = vadd.f32 %v1984, %v2528
        %v2530 = vpop.f32.mrf.mxu0
        %v2531 = vadd.f32 %v1984, %v2530
        %v2532 = vpop.f32.mrf.mxu0
        %v2533 = vadd.f32 %v1989, %v2532
        %v2534 = vpop.f32.mrf.mxu0
        %v2535 = vadd.f32 %v1989, %v2534
        %2536 = vmatprep.mubr.bf16.mxu0 %v2144
        %2537 = vmatmul.mubr.bf16.gmra.mxu0 %v2143
        %v2538 = vpop.f32.mrf.mxu0
        %v2539 = vadd.f32 %v1994, %v2538
        %v2540 = vpop.f32.mrf.mxu0
        %v2541 = vadd.f32 %v1994, %v2540
        %v2542 = vpop.f32.mrf.mxu0
        %v2543 = vadd.f32 %v1999, %v2542
        %v2544 = vpop.f32.mrf.mxu0
        %v2545 = vadd.f32 %v1999, %v2544
        %2546 = vmatprep.mubr.bf16.mxu0 %v2146
        %2547 = vmatmul.mubr.bf16.gmra.mxu0 %v2145
        %v2548 = vpop.f32.mrf.mxu0
        %v2549 = vadd.f32 %v2004, %v2548
        %v2550 = vpop.f32.mrf.mxu0
        %v2551 = vadd.f32 %v2004, %v2550
        %v2552 = vpop.f32.mrf.mxu0
        %v2553 = vadd.f32 %v2009, %v2552
        %v2554 = vpop.f32.mrf.mxu0
        %v2555 = vadd.f32 %v2009, %v2554
        %2556 = vmatprep.mubr.bf16.mxu0 %v2148
        %2557 = vmatmul.mubr.bf16.gmra.mxu0 %v2147
        %v2558 = vpop.f32.mrf.mxu0
        %v2559 = vadd.f32 %v2014, %v2558
        %v2560 = vpop.f32.mrf.mxu0
        %v2561 = vadd.f32 %v2014, %v2560
        %v2562 = vpop.f32.mrf.mxu0
        %v2563 = vadd.f32 %v2019, %v2562
        %v2564 = vpop.f32.mrf.mxu0
        %v2565 = vadd.f32 %v2019, %v2564
        %2566 = vdwg.mxu0
        %2567 = vmatprep.subr.bf16.mxu0 %v1744
        %2568 = vmatpush1.bf16.msra.mxu0 %v1743
        %2569 = vmatprep.subr.bf16.mxu0 %v1738
        %2570 = vmatpush1.bf16.msra.mxu0 %v1737
        %2571 = vmatprep.subr.bf16.mxu0 %v1732
        %2572 = vmatpush1.bf16.msra.mxu0 %v1731
        %2573 = vmatprep.subr.bf16.mxu0 %v1726
        %2574 = vmatpush1.bf16.msra.mxu0 %v1725
        %2575 = vmatprep.subr.bf16.mxu0 %v1720
        %2576 = vmatpush1.bf16.msra.mxu0 %v1719
        %2577 = vmatprep.subr.bf16.mxu0 %v1714
        %2578 = vmatpush1.bf16.msra.mxu0 %v1713
        %2579 = vmatprep.subr.bf16.mxu0 %v1708
        %2580 = vmatpush1.bf16.msra.mxu0 %v1707
        %2581 = vmatprep.subr.bf16.mxu0 %v1702
        %2582 = vmatpush1.bf16.msra.mxu0 %v1701
        %2583 = vmatprep.subr.bf16.mxu0 %v1792
        %2584 = vmatpush2.bf16.msra.mxu0 %v1791
        %2585 = vmatprep.subr.bf16.mxu0 %v1786
        %2586 = vmatpush2.bf16.msra.mxu0 %v1785
        %2587 = vmatprep.subr.bf16.mxu0 %v1780
        %2588 = vmatpush2.bf16.msra.mxu0 %v1779
        %2589 = vmatprep.subr.bf16.mxu0 %v1774
        %2590 = vmatpush2.bf16.msra.mxu0 %v1773
        %2591 = vmatprep.subr.bf16.mxu0 %v1768
        %2592 = vmatpush2.bf16.msra.mxu0 %v1767
        %2593 = vmatprep.subr.bf16.mxu0 %v1762
        %2594 = vmatpush2.bf16.msra.mxu0 %v1761
        %2595 = vmatprep.subr.bf16.mxu0 %v1756
        %2596 = vmatpush2.bf16.msra.mxu0 %v1755
        %2597 = vmatprep.subr.bf16.mxu0 %v1750
        %2598 = vmatpush2.bf16.msra.mxu0 %v1749
        %2599 = vmatprep.mubr.bf16.mxu0 %v2118
        %2600 = vmatmul.mubr.bf16.gmra.mxu0 %v2117
        %v2601 = vpop.f32.mrf.mxu0
        %v2602 = vadd.f32 %v1864, %v2601
        %v2603 = vpop.f32.mrf.mxu0
        %v2604 = vadd.f32 %v1864, %v2603
        %v2605 = vpop.f32.mrf.mxu0
        %v2606 = vadd.f32 %v1869, %v2605
        %v2607 = vpop.f32.mrf.mxu0
        %v2608 = vadd.f32 %v1869, %v2607
        %2609 = vmatprep.mubr.bf16.mxu0 %v2120
        %2610 = vmatmul.mubr.bf16.gmra.mxu0 %v2119
        %v2611 = vpop.f32.mrf.mxu0
        %v2612 = vadd.f32 %v1874, %v2611
        %v2613 = vpop.f32.mrf.mxu0
        %v2614 = vadd.f32 %v1874, %v2613
        %v2615 = vpop.f32.mrf.mxu0
        %v2616 = vadd.f32 %v1879, %v2615
        %v2617 = vpop.f32.mrf.mxu0
        %v2618 = vadd.f32 %v1879, %v2617
        %2619 = vmatprep.mubr.bf16.mxu0 %v2122
        %2620 = vmatmul.mubr.bf16.gmra.mxu0 %v2121
        %v2621 = vpop.f32.mrf.mxu0
        %v2622 = vadd.f32 %v1884, %v2621
        %v2623 = vpop.f32.mrf.mxu0
        %v2624 = vadd.f32 %v1884, %v2623
        %v2625 = vpop.f32.mrf.mxu0
        %v2626 = vadd.f32 %v1889, %v2625
        %v2627 = vpop.f32.mrf.mxu0
        %v2628 = vadd.f32 %v1889, %v2627
        %2629 = vmatprep.mubr.bf16.mxu0 %v2124
        %2630 = vmatmul.mubr.bf16.gmra.mxu0 %v2123
        %v2631 = vpop.f32.mrf.mxu0
        %v2632 = vadd.f32 %v1894, %v2631
        %v2633 = vpop.f32.mrf.mxu0
        %v2634 = vadd.f32 %v1894, %v2633
        %v2635 = vpop.f32.mrf.mxu0
        %v2636 = vadd.f32 %v1899, %v2635
        %v2637 = vpop.f32.mrf.mxu0
        %v2638 = vadd.f32 %v1899, %v2637
        %2639 = vmatprep.mubr.bf16.mxu0 %v2126
        %2640 = vmatmul.mubr.bf16.gmra.mxu0 %v2125
        %v2641 = vpop.f32.mrf.mxu0
        %v2642 = vadd.f32 %v1904, %v2641
        %v2643 = vpop.f32.mrf.mxu0
        %v2644 = vadd.f32 %v1904, %v2643
        %v2645 = vpop.f32.mrf.mxu0
        %v2646 = vadd.f32 %v1909, %v2645
        %v2647 = vpop.f32.mrf.mxu0
        %v2648 = vadd.f32 %v1909, %v2647
        %2649 = vmatprep.mubr.bf16.mxu0 %v2128
        %2650 = vmatmul.mubr.bf16.gmra.mxu0 %v2127
        %v2651 = vpop.f32.mrf.mxu0
        %v2652 = vadd.f32 %v1914, %v2651
        %v2653 = vpop.f32.mrf.mxu0
        %v2654 = vadd.f32 %v1914, %v2653
        %v2655 = vpop.f32.mrf.mxu0
        %v2656 = vadd.f32 %v1919, %v2655
        %v2657 = vpop.f32.mrf.mxu0
        %v2658 = vadd.f32 %v1919, %v2657
        %2659 = vmatprep.mubr.bf16.mxu0 %v2130
        %2660 = vmatmul.mubr.bf16.gmra.mxu0 %v2129
        %v2661 = vpop.f32.mrf.mxu0
        %v2662 = vadd.f32 %v1924, %v2661
        %v2663 = vpop.f32.mrf.mxu0
        %v2664 = vadd.f32 %v1924, %v2663
        %v2665 = vpop.f32.mrf.mxu0
        %v2666 = vadd.f32 %v1929, %v2665
        %v2667 = vpop.f32.mrf.mxu0
        %v2668 = vadd.f32 %v1929, %v2667
        %2669 = vmatprep.mubr.bf16.mxu0 %v2132
        %2670 = vmatmul.mubr.bf16.gmra.mxu0 %v2131
        %v2671 = vpop.f32.mrf.mxu0
        %v2672 = vadd.f32 %v1934, %v2671
        %v2673 = vpop.f32.mrf.mxu0
        %v2674 = vadd.f32 %v1934, %v2673
        %v2675 = vpop.f32.mrf.mxu0
        %v2676 = vadd.f32 %v1939, %v2675
        %v2677 = vpop.f32.mrf.mxu0
        %v2678 = vadd.f32 %v1939, %v2677
        %2679 = vmatprep.mubr.bf16.mxu0 %v2134
        %2680 = vmatmul.mubr.bf16.gmra.mxu0 %v2133
        %v2681 = vpop.f32.mrf.mxu0
        %v2682 = vadd.f32 %v1944, %v2681
        %v2683 = vpop.f32.mrf.mxu0
        %v2684 = vadd.f32 %v1944, %v2683
        %v2685 = vpop.f32.mrf.mxu0
        %v2686 = vadd.f32 %v1949, %v2685
        %v2687 = vpop.f32.mrf.mxu0
        %v2688 = vadd.f32 %v1949, %v2687
        %2689 = vmatprep.mubr.bf16.mxu0 %v2136
        %2690 = vmatmul.mubr.bf16.gmra.mxu0 %v2135
        %v2691 = vpop.f32.mrf.mxu0
        %v2692 = vadd.f32 %v1954, %v2691
        %v2693 = vpop.f32.mrf.mxu0
        %v2694 = vadd.f32 %v1954, %v2693
        %v2695 = vpop.f32.mrf.mxu0
        %v2696 = vadd.f32 %v1959, %v2695
        %v2697 = vpop.f32.mrf.mxu0
        %v2698 = vadd.f32 %v1959, %v2697
        %2699 = vmatprep.mubr.bf16.mxu0 %v2138
        %2700 = vmatmul.mubr.bf16.gmra.mxu0 %v2137
        %v2701 = vpop.f32.mrf.mxu0
        %v2702 = vadd.f32 %v1964, %v2701
        %v2703 = vpop.f32.mrf.mxu0
        %v2704 = vadd.f32 %v1964, %v2703
        %v2705 = vpop.f32.mrf.mxu0
        %v2706 = vadd.f32 %v1969, %v2705
        %v2707 = vpop.f32.mrf.mxu0
        %v2708 = vadd.f32 %v1969, %v2707
        %2709 = vmatprep.mubr.bf16.mxu0 %v2140
        %2710 = vmatmul.mubr.bf16.gmra.mxu0 %v2139
        %v2711 = vpop.f32.mrf.mxu0
        %v2712 = vadd.f32 %v1974, %v2711
        %v2713 = vpop.f32.mrf.mxu0
        %v2714 = vadd.f32 %v1974, %v2713
        %v2715 = vpop.f32.mrf.mxu0
        %v2716 = vadd.f32 %v1979, %v2715
        %v2717 = vpop.f32.mrf.mxu0
        %v2718 = vadd.f32 %v1979, %v2717
        %2719 = vmatprep.mubr.bf16.mxu0 %v2142
        %2720 = vmatmul.mubr.bf16.gmra.mxu0 %v2141
        %v2721 = vpop.f32.mrf.mxu0
        %v2722 = vadd.f32 %v1984, %v2721
        %v2723 = vpop.f32.mrf.mxu0
        %v2724 = vadd.f32 %v1984, %v2723
        %v2725 = vpop.f32.mrf.mxu0
        %v2726 = vadd.f32 %v1989, %v2725
        %v2727 = vpop.f32.mrf.mxu0
        %v2728 = vadd.f32 %v1989, %v2727
        %2729 = vmatprep.mubr.bf16.mxu0 %v2144
        %2730 = vmatmul.mubr.bf16.gmra.mxu0 %v2143
        %v2731 = vpop.f32.mrf.mxu0
        %v2732 = vadd.f32 %v1994, %v2731
        %v2733 = vpop.f32.mrf.mxu0
        %v2734 = vadd.f32 %v1994, %v2733
        %v2735 = vpop.f32.mrf.mxu0
        %v2736 = vadd.f32 %v1999, %v2735
        %v2737 = vpop.f32.mrf.mxu0
        %v2738 = vadd.f32 %v1999, %v2737
        %2739 = vmatprep.mubr.bf16.mxu0 %v2146
        %2740 = vmatmul.mubr.bf16.gmra.mxu0 %v2145
        %v2741 = vpop.f32.mrf.mxu0
        %v2742 = vadd.f32 %v2004, %v2741
        %v2743 = vpop.f32.mrf.mxu0
        %v2744 = vadd.f32 %v2004, %v2743
        %v2745 = vpop.f32.mrf.mxu0
        %v2746 = vadd.f32 %v2009, %v2745
        %v2747 = vpop.f32.mrf.mxu0
        %v2748 = vadd.f32 %v2009, %v2747
        %2749 = vmatprep.mubr.bf16.mxu0 %v2148
        %2750 = vmatmul.mubr.bf16.gmra.mxu0 %v2147
        %v2751 = vpop.f32.mrf.mxu0
        %v2752 = vadd.f32 %v2014, %v2751
        %v2753 = vpop.f32.mrf.mxu0
        %v2754 = vadd.f32 %v2014, %v2753
        %v2755 = vpop.f32.mrf.mxu0
        %v2756 = vadd.f32 %v2019, %v2755
        %v2757 = vpop.f32.mrf.mxu0
        %v2758 = vadd.f32 %v2019, %v2757
        %2759 = vdwg.mxu0
        %v2760 = vmax.f32 %v2216, 0.0
        %v2761 = vmax.f32 %v2218, 0.0
        %v2762 = vmax.f32 %v2409, 0.0
        %v2763 = vmax.f32 %v2411, 0.0
        %v2764 = vmax.f32 %v2602, 0.0
        %v2765 = vmax.f32 %v2604, 0.0
        %v2766 = vmax.f32 %v2220, 0.0
        %v2767 = vmax.f32 %v2222, 0.0
        %v2768 = vmax.f32 %v2413, 0.0
        %v2769 = vmax.f32 %v2415, 0.0
        %v2770 = vmax.f32 %v2606, 0.0
        %v2771 = vmax.f32 %v2608, 0.0
        %v2772 = vmax.f32 %v2226, 0.0
        %v2773 = vmax.f32 %v2228, 0.0
        %v2774 = vmax.f32 %v2419, 0.0
        %v2775 = vmax.f32 %v2421, 0.0
        %v2776 = vmax.f32 %v2612, 0.0
        %v2777 = vmax.f32 %v2614, 0.0
        %v2778 = vmax.f32 %v2230, 0.0
        %v2779 = vmax.f32 %v2232, 0.0
        %v2780 = vmax.f32 %v2423, 0.0
        %v2781 = vmax.f32 %v2425, 0.0
        %v2782 = vmax.f32 %v2616, 0.0
        %v2783 = vmax.f32 %v2618, 0.0
        %v2784 = vmax.f32 %v2236, 0.0
        %v2785 = vmax.f32 %v2238, 0.0
        %v2786 = vmax.f32 %v2429, 0.0
        %v2787 = vmax.f32 %v2431, 0.0
        %v2788 = vmax.f32 %v2622, 0.0
        %v2789 = vmax.f32 %v2624, 0.0
        %v2790 = vmax.f32 %v2240, 0.0
        %v2791 = vmax.f32 %v2242, 0.0
        %v2792 = vmax.f32 %v2433, 0.0
        %v2793 = vmax.f32 %v2435, 0.0
        %v2794 = vmax.f32 %v2626, 0.0
        %v2795 = vmax.f32 %v2628, 0.0
        %v2796 = vmax.f32 %v2246, 0.0
        %v2797 = vmax.f32 %v2248, 0.0
        %v2798 = vmax.f32 %v2439, 0.0
        %v2799 = vmax.f32 %v2441, 0.0
        %v2800 = vmax.f32 %v2632, 0.0
        %v2801 = vmax.f32 %v2634, 0.0
        %v2802 = vmax.f32 %v2250, 0.0
        %v2803 = vmax.f32 %v2252, 0.0
        %v2804 = vmax.f32 %v2443, 0.0
        %v2805 = vmax.f32 %v2445, 0.0
        %v2806 = vmax.f32 %v2636, 0.0
        %v2807 = vmax.f32 %v2638, 0.0
        %v2808 = vmax.f32 %v2256, 0.0
        %v2809 = vmax.f32 %v2258, 0.0
        %v2810 = vmax.f32 %v2449, 0.0
        %v2811 = vmax.f32 %v2451, 0.0
        %v2812 = vmax.f32 %v2642, 0.0
        %v2813 = vmax.f32 %v2644, 0.0
        %v2814 = vmax.f32 %v2260, 0.0
        %v2815 = vmax.f32 %v2262, 0.0
        %v2816 = vmax.f32 %v2453, 0.0
        %v2817 = vmax.f32 %v2455, 0.0
        %v2818 = vmax.f32 %v2646, 0.0
        %v2819 = vmax.f32 %v2648, 0.0
        %v2820 = vmax.f32 %v2266, 0.0
        %v2821 = vmax.f32 %v2268, 0.0
        %v2822 = vmax.f32 %v2459, 0.0
        %v2823 = vmax.f32 %v2461, 0.0
        %v2824 = vmax.f32 %v2652, 0.0
        %v2825 = vmax.f32 %v2654, 0.0
        %v2826 = vmax.f32 %v2270, 0.0
        %v2827 = vmax.f32 %v2272, 0.0
        %v2828 = vmax.f32 %v2463, 0.0
        %v2829 = vmax.f32 %v2465, 0.0
        %v2830 = vmax.f32 %v2656, 0.0
        %v2831 = vmax.f32 %v2658, 0.0
        %v2832 = vmax.f32 %v2276, 0.0
        %v2833 = vmax.f32 %v2278, 0.0
        %v2834 = vmax.f32 %v2469, 0.0
        %v2835 = vmax.f32 %v2471, 0.0
        %v2836 = vmax.f32 %v2662, 0.0
        %v2837 = vmax.f32 %v2664, 0.0
        %v2838 = vmax.f32 %v2280, 0.0
        %v2839 = vmax.f32 %v2282, 0.0
        %v2840 = vmax.f32 %v2473, 0.0
        %v2841 = vmax.f32 %v2475, 0.0
        %v2842 = vmax.f32 %v2666, 0.0
        %v2843 = vmax.f32 %v2668, 0.0
        %v2844 = vmax.f32 %v2286, 0.0
        %v2845 = vmax.f32 %v2288, 0.0
        %v2846 = vmax.f32 %v2479, 0.0
        %v2847 = vmax.f32 %v2481, 0.0
        %v2848 = vmax.f32 %v2672, 0.0
        %v2849 = vmax.f32 %v2674, 0.0
        %v2850 = vmax.f32 %v2290, 0.0
        %v2851 = vmax.f32 %v2292, 0.0
        %v2852 = vmax.f32 %v2483, 0.0
        %v2853 = vmax.f32 %v2485, 0.0
        %v2854 = vmax.f32 %v2676, 0.0
        %v2855 = vmax.f32 %v2678, 0.0
        %v2856 = vmax.f32 %v2296, 0.0
        %v2857 = vmax.f32 %v2298, 0.0
        %v2858 = vmax.f32 %v2489, 0.0
        %v2859 = vmax.f32 %v2491, 0.0
        %v2860 = vmax.f32 %v2682, 0.0
        %v2861 = vmax.f32 %v2684, 0.0
        %v2862 = vmax.f32 %v2300, 0.0
        %v2863 = vmax.f32 %v2302, 0.0
        %v2864 = vmax.f32 %v2493, 0.0
        %v2865 = vmax.f32 %v2495, 0.0
        %v2866 = vmax.f32 %v2686, 0.0
        %v2867 = vmax.f32 %v2688, 0.0
        %v2868 = vmax.f32 %v2306, 0.0
        %v2869 = vmax.f32 %v2308, 0.0
        %v2870 = vmax.f32 %v2499, 0.0
        %v2871 = vmax.f32 %v2501, 0.0
        %v2872 = vmax.f32 %v2692, 0.0
        %v2873 = vmax.f32 %v2694, 0.0
        %v2874 = vmax.f32 %v2310, 0.0
        %v2875 = vmax.f32 %v2312, 0.0
        %v2876 = vmax.f32 %v2503, 0.0
        %v2877 = vmax.f32 %v2505, 0.0
        %v2878 = vmax.f32 %v2696, 0.0
        %v2879 = vmax.f32 %v2698, 0.0
        %v2880 = vmax.f32 %v2316, 0.0
        %v2881 = vmax.f32 %v2318, 0.0
        %v2882 = vmax.f32 %v2509, 0.0
        %v2883 = vmax.f32 %v2511, 0.0
        %v2884 = vmax.f32 %v2702, 0.0
        %v2885 = vmax.f32 %v2704, 0.0
        %v2886 = vmax.f32 %v2320, 0.0
        %v2887 = vmax.f32 %v2322, 0.0
        %v2888 = vmax.f32 %v2513, 0.0
        %v2889 = vmax.f32 %v2515, 0.0
        %v2890 = vmax.f32 %v2706, 0.0
        %v2891 = vmax.f32 %v2708, 0.0
        %v2892 = vmax.f32 %v2326, 0.0
        %v2893 = vmax.f32 %v2328, 0.0
        %v2894 = vmax.f32 %v2519, 0.0
        %v2895 = vmax.f32 %v2521, 0.0
        %v2896 = vmax.f32 %v2712, 0.0
        %v2897 = vmax.f32 %v2714, 0.0
        %v2898 = vmax.f32 %v2330, 0.0
        %v2899 = vmax.f32 %v2332, 0.0
        %v2900 = vmax.f32 %v2523, 0.0
        %v2901 = vmax.f32 %v2525, 0.0
        %v2902 = vmax.f32 %v2716, 0.0
        %v2903 = vmax.f32 %v2718, 0.0
        %v2904 = vmax.f32 %v2336, 0.0
        %v2905 = vmax.f32 %v2338, 0.0
        %v2906 = vmax.f32 %v2529, 0.0
        %v2907 = vmax.f32 %v2531, 0.0
        %v2908 = vmax.f32 %v2722, 0.0
        %v2909 = vmax.f32 %v2724, 0.0
        %v2910 = vmax.f32 %v2340, 0.0
        %v2911 = vmax.f32 %v2342, 0.0
        %v2912 = vmax.f32 %v2533, 0.0
        %v2913 = vmax.f32 %v2535, 0.0
        %v2914 = vmax.f32 %v2726, 0.0
        %v2915 = vmax.f32 %v2728, 0.0
        %v2916 = vmax.f32 %v2346, 0.0
        %v2917 = vmax.f32 %v2348, 0.0
        %v2918 = vmax.f32 %v2539, 0.0
        %v2919 = vmax.f32 %v2541, 0.0
        %v2920 = vmax.f32 %v2732, 0.0
        %v2921 = vmax.f32 %v2734, 0.0
        %v2922 = vmax.f32 %v2350, 0.0
        %v2923 = vmax.f32 %v2352, 0.0
        %v2924 = vmax.f32 %v2543, 0.0
        %v2925 = vmax.f32 %v2545, 0.0
        %v2926 = vmax.f32 %v2736, 0.0
        %v2927 = vmax.f32 %v2738, 0.0
        %v2928 = vmax.f32 %v2356, 0.0
        %v2929 = vmax.f32 %v2358, 0.0
        %v2930 = vmax.f32 %v2549, 0.0
        %v2931 = vmax.f32 %v2551, 0.0
        %v2932 = vmax.f32 %v2742, 0.0
        %v2933 = vmax.f32 %v2744, 0.0
        %v2934 = vmax.f32 %v2360, 0.0
        %v2935 = vmax.f32 %v2362, 0.0
        %v2936 = vmax.f32 %v2553, 0.0
        %v2937 = vmax.f32 %v2555, 0.0
        %v2938 = vmax.f32 %v2746, 0.0
        %v2939 = vmax.f32 %v2748, 0.0
        %v2940 = vmax.f32 %v2366, 0.0
        %v2941 = vmax.f32 %v2368, 0.0
        %v2942 = vmax.f32 %v2559, 0.0
        %v2943 = vmax.f32 %v2561, 0.0
        %v2944 = vmax.f32 %v2752, 0.0
        %v2945 = vmax.f32 %v2754, 0.0
        %v2946 = vmax.f32 %v2370, 0.0
        %v2947 = vmax.f32 %v2372, 0.0
        %v2948 = vmax.f32 %v2563, 0.0
        %v2949 = vmax.f32 %v2565, 0.0
        %v2950 = vmax.f32 %v2756, 0.0
        %v2951 = vmax.f32 %v2758, 0.0
        %v2952 = vpack.c.bf16 %v2766, %v2760
        %v2953 = vpack.c.bf16 %v2767, %v2761
        %v2954 = vpack.c.bf16 %v2768, %v2762
        %v2955 = vpack.c.bf16 %v2769, %v2763
        %v2956 = vpack.c.bf16 %v2770, %v2764
        %v2957 = vpack.c.bf16 %v2771, %v2765
        %v2958 = vpack.c.bf16 %v2778, %v2772
        %v2959 = vpack.c.bf16 %v2779, %v2773
        %v2960 = vpack.c.bf16 %v2780, %v2774
        %v2961 = vpack.c.bf16 %v2781, %v2775
        %v2962 = vpack.c.bf16 %v2782, %v2776
        %v2963 = vpack.c.bf16 %v2783, %v2777
        %v2964 = vpack.c.bf16 %v2790, %v2784
        %v2965 = vpack.c.bf16 %v2791, %v2785
        %v2966 = vpack.c.bf16 %v2792, %v2786
        %v2967 = vpack.c.bf16 %v2793, %v2787
        %v2968 = vpack.c.bf16 %v2794, %v2788
        %v2969 = vpack.c.bf16 %v2795, %v2789
        %v2970 = vpack.c.bf16 %v2802, %v2796
        %v2971 = vpack.c.bf16 %v2803, %v2797
        %v2972 = vpack.c.bf16 %v2804, %v2798
        %v2973 = vpack.c.bf16 %v2805, %v2799
        %v2974 = vpack.c.bf16 %v2806, %v2800
        %v2975 = vpack.c.bf16 %v2807, %v2801
        %v2976 = vpack.c.bf16 %v2814, %v2808
        %v2977 = vpack.c.bf16 %v2815, %v2809
        %v2978 = vpack.c.bf16 %v2816, %v2810
        %v2979 = vpack.c.bf16 %v2817, %v2811
        %v2980 = vpack.c.bf16 %v2818, %v2812
        %v2981 = vpack.c.bf16 %v2819, %v2813
        %v2982 = vpack.c.bf16 %v2826, %v2820
        %v2983 = vpack.c.bf16 %v2827, %v2821
        %v2984 = vpack.c.bf16 %v2828, %v2822
        %v2985 = vpack.c.bf16 %v2829, %v2823
        %v2986 = vpack.c.bf16 %v2830, %v2824
        %v2987 = vpack.c.bf16 %v2831, %v2825
        %v2988 = vpack.c.bf16 %v2838, %v2832
        %v2989 = vpack.c.bf16 %v2839, %v2833
        %v2990 = vpack.c.bf16 %v2840, %v2834
        %v2991 = vpack.c.bf16 %v2841, %v2835
        %v2992 = vpack.c.bf16 %v2842, %v2836
        %v2993 = vpack.c.bf16 %v2843, %v2837
        %v2994 = vpack.c.bf16 %v2850, %v2844
        %v2995 = vpack.c.bf16 %v2851, %v2845
        %v2996 = vpack.c.bf16 %v2852, %v2846
        %v2997 = vpack.c.bf16 %v2853, %v2847
        %v2998 = vpack.c.bf16 %v2854, %v2848
        %v2999 = vpack.c.bf16 %v2855, %v2849
        %v3000 = vpack.c.bf16 %v2862, %v2856
        %v3001 = vpack.c.bf16 %v2863, %v2857
        %v3002 = vpack.c.bf16 %v2864, %v2858
        %v3003 = vpack.c.bf16 %v2865, %v2859
        %v3004 = vpack.c.bf16 %v2866, %v2860
        %v3005 = vpack.c.bf16 %v2867, %v2861
        %v3006 = vpack.c.bf16 %v2874, %v2868
        %v3007 = vpack.c.bf16 %v2875, %v2869
        %v3008 = vpack.c.bf16 %v2876, %v2870
        %v3009 = vpack.c.bf16 %v2877, %v2871
        %v3010 = vpack.c.bf16 %v2878, %v2872
        %v3011 = vpack.c.bf16 %v2879, %v2873
        %v3012 = vpack.c.bf16 %v2886, %v2880
        %v3013 = vpack.c.bf16 %v2887, %v2881
        %v3014 = vpack.c.bf16 %v2888, %v2882
        %v3015 = vpack.c.bf16 %v2889, %v2883
        %v3016 = vpack.c.bf16 %v2890, %v2884
        %v3017 = vpack.c.bf16 %v2891, %v2885
        %v3018 = vpack.c.bf16 %v2898, %v2892
        %v3019 = vpack.c.bf16 %v2899, %v2893
        %v3020 = vpack.c.bf16 %v2900, %v2894
        %v3021 = vpack.c.bf16 %v2901, %v2895
        %v3022 = vpack.c.bf16 %v2902, %v2896
        %v3023 = vpack.c.bf16 %v2903, %v2897
        %v3024 = vpack.c.bf16 %v2910, %v2904
        %v3025 = vpack.c.bf16 %v2911, %v2905
        %v3026 = vpack.c.bf16 %v2912, %v2906
        %v3027 = vpack.c.bf16 %v2913, %v2907
        %v3028 = vpack.c.bf16 %v2914, %v2908
        %v3029 = vpack.c.bf16 %v2915, %v2909
        %v3030 = vpack.c.bf16 %v2922, %v2916
        %v3031 = vpack.c.bf16 %v2923, %v2917
        %v3032 = vpack.c.bf16 %v2924, %v2918
        %v3033 = vpack.c.bf16 %v2925, %v2919
        %v3034 = vpack.c.bf16 %v2926, %v2920
        %v3035 = vpack.c.bf16 %v2927, %v2921
        %v3036 = vpack.c.bf16 %v2934, %v2928
        %v3037 = vpack.c.bf16 %v2935, %v2929
        %v3038 = vpack.c.bf16 %v2936, %v2930
        %v3039 = vpack.c.bf16 %v2937, %v2931
        %v3040 = vpack.c.bf16 %v2938, %v2932
        %v3041 = vpack.c.bf16 %v2939, %v2933
        %v3042 = vpack.c.bf16 %v2946, %v2940
        %v3043 = vpack.c.bf16 %v2947, %v2941
        %v3044 = vpack.c.bf16 %v2948, %v2942
        %v3045 = vpack.c.bf16 %v2949, %v2943
        %v3046 = vpack.c.bf16 %v2950, %v2944
        %v3047 = vpack.c.bf16 %v2951, %v2945
        %3049 = vset.pattern.permute.xlu0 0
        %3050 = vperm.xlu0 %3049, %v1795
        %v3051 = vpop.permute.xlu0 %3050
        %3054 = vset.pattern.permute.xlu0 0
        %3055 = vperm.xlu0 %3054, %v1796
        %v3056 = vpop.permute.xlu0 %3055
        %v3060 = vunpack.c.l.b16 %v1793
        %v3061 = vunpack.c.h.b16 %v1793
        %v3062 = vunpack.c.l.b16 %v1794
        %v3063 = vunpack.c.h.b16 %v1794
        %v3064 = vpack.c.b16 %v3062, %v3060
        %v3065 = vpack.c.b16 %v3063, %v3061
        %3068 = vmatprep.subr.bf16.mxu0 %v2995
        %3069 = vmatpush1.bf16.msra.mxu0 %v2994
        %3070 = vmatprep.subr.bf16.mxu0 %v2989
        %3071 = vmatpush1.bf16.msra.mxu0 %v2988
        %3072 = vmatprep.subr.bf16.mxu0 %v2983
        %3073 = vmatpush1.bf16.msra.mxu0 %v2982
        %3074 = vmatprep.subr.bf16.mxu0 %v2977
        %3075 = vmatpush1.bf16.msra.mxu0 %v2976
        %3076 = vmatprep.subr.bf16.mxu0 %v2971
        %3077 = vmatpush1.bf16.msra.mxu0 %v2970
        %3078 = vmatprep.subr.bf16.mxu0 %v2965
        %3079 = vmatpush1.bf16.msra.mxu0 %v2964
        %3080 = vmatprep.subr.bf16.mxu0 %v2959
        %3081 = vmatpush1.bf16.msra.mxu0 %v2958
        %3082 = vmatprep.subr.bf16.mxu0 %v2953
        %3083 = vmatpush1.bf16.msra.mxu0 %v2952
        %3084 = vmatprep.subr.bf16.mxu0 %v3043
        %3085 = vmatpush2.bf16.msra.mxu0 %v3042
        %3086 = vmatprep.subr.bf16.mxu0 %v3037
        %3087 = vmatpush2.bf16.msra.mxu0 %v3036
        %3088 = vmatprep.subr.bf16.mxu0 %v3031
        %3089 = vmatpush2.bf16.msra.mxu0 %v3030
        %3090 = vmatprep.subr.bf16.mxu0 %v3025
        %3091 = vmatpush2.bf16.msra.mxu0 %v3024
        %3092 = vmatprep.subr.bf16.mxu0 %v3019
        %3093 = vmatpush2.bf16.msra.mxu0 %v3018
        %3094 = vmatprep.subr.bf16.mxu0 %v3013
        %3095 = vmatpush2.bf16.msra.mxu0 %v3012
        %3096 = vmatprep.subr.bf16.mxu0 %v3007
        %3097 = vmatpush2.bf16.msra.mxu0 %v3006
        %3098 = vmatprep.subr.bf16.mxu0 %v3001
        %3099 = vmatpush2.bf16.msra.mxu0 %v3000
        %3100 = vmatprep.mubr.bf16.mxu0 %v3065
        %3101 = vmatmul.mubr.bf16.gmra.mxu0 %v3064
        %v3102 = vpop.f32.mrf.mxu0
        %v3103 = vadd.f32 %v3051, %v3102
        %v3104 = vpop.f32.mrf.mxu0
        %v3105 = vadd.f32 %v3051, %v3104
        %v3106 = vpop.f32.mrf.mxu0
        %v3107 = vadd.f32 %v3056, %v3106
        %v3108 = vpop.f32.mrf.mxu0
        %v3109 = vadd.f32 %v3056, %v3108
        %3110 = vdwg.mxu0
        %3111 = vmatprep.subr.bf16.mxu0 %v2997
        %3112 = vmatpush1.bf16.msra.mxu0 %v2996
        %3113 = vmatprep.subr.bf16.mxu0 %v2991
        %3114 = vmatpush1.bf16.msra.mxu0 %v2990
        %3115 = vmatprep.subr.bf16.mxu0 %v2985
        %3116 = vmatpush1.bf16.msra.mxu0 %v2984
        %3117 = vmatprep.subr.bf16.mxu0 %v2979
        %3118 = vmatpush1.bf16.msra.mxu0 %v2978
        %3119 = vmatprep.subr.bf16.mxu0 %v2973
        %3120 = vmatpush1.bf16.msra.mxu0 %v2972
        %3121 = vmatprep.subr.bf16.mxu0 %v2967
        %3122 = vmatpush1.bf16.msra.mxu0 %v2966
        %3123 = vmatprep.subr.bf16.mxu0 %v2961
        %3124 = vmatpush1.bf16.msra.mxu0 %v2960
        %3125 = vmatprep.subr.bf16.mxu0 %v2955
        %3126 = vmatpush1.bf16.msra.mxu0 %v2954
        %3127 = vmatprep.subr.bf16.mxu0 %v3045
        %3128 = vmatpush2.bf16.msra.mxu0 %v3044
        %3129 = vmatprep.subr.bf16.mxu0 %v3039
        %3130 = vmatpush2.bf16.msra.mxu0 %v3038
        %3131 = vmatprep.subr.bf16.mxu0 %v3033
        %3132 = vmatpush2.bf16.msra.mxu0 %v3032
        %3133 = vmatprep.subr.bf16.mxu0 %v3027
        %3134 = vmatpush2.bf16.msra.mxu0 %v3026
        %3135 = vmatprep.subr.bf16.mxu0 %v3021
        %3136 = vmatpush2.bf16.msra.mxu0 %v3020
        %3137 = vmatprep.subr.bf16.mxu0 %v3015
        %3138 = vmatpush2.bf16.msra.mxu0 %v3014
        %3139 = vmatprep.subr.bf16.mxu0 %v3009
        %3140 = vmatpush2.bf16.msra.mxu0 %v3008
        %3141 = vmatprep.subr.bf16.mxu0 %v3003
        %3142 = vmatpush2.bf16.msra.mxu0 %v3002
        %3143 = vmatprep.mubr.bf16.mxu0 %v3065
        %3144 = vmatmul.mubr.bf16.gmra.mxu0 %v3064
        %v3145 = vpop.f32.mrf.mxu0
        %v3146 = vadd.f32 %v3051, %v3145
        %v3147 = vpop.f32.mrf.mxu0
        %v3148 = vadd.f32 %v3051, %v3147
        %v3149 = vpop.f32.mrf.mxu0
        %v3150 = vadd.f32 %v3056, %v3149
        %v3151 = vpop.f32.mrf.mxu0
        %v3152 = vadd.f32 %v3056, %v3151
        %3153 = vdwg.mxu0
        %3154 = vmatprep.subr.bf16.mxu0 %v2999
        %3155 = vmatpush1.bf16.msra.mxu0 %v2998
        %3156 = vmatprep.subr.bf16.mxu0 %v2993
        %3157 = vmatpush1.bf16.msra.mxu0 %v2992
        %3158 = vmatprep.subr.bf16.mxu0 %v2987
        %3159 = vmatpush1.bf16.msra.mxu0 %v2986
        %3160 = vmatprep.subr.bf16.mxu0 %v2981
        %3161 = vmatpush1.bf16.msra.mxu0 %v2980
        %3162 = vmatprep.subr.bf16.mxu0 %v2975
        %3163 = vmatpush1.bf16.msra.mxu0 %v2974
        %3164 = vmatprep.subr.bf16.mxu0 %v2969
        %3165 = vmatpush1.bf16.msra.mxu0 %v2968
        %3166 = vmatprep.subr.bf16.mxu0 %v2963
        %3167 = vmatpush1.bf16.msra.mxu0 %v2962
        %3168 = vmatprep.subr.bf16.mxu0 %v2957
        %3169 = vmatpush1.bf16.msra.mxu0 %v2956
        %3170 = vmatprep.subr.bf16.mxu0 %v3047
        %3171 = vmatpush2.bf16.msra.mxu0 %v3046
        %3172 = vmatprep.subr.bf16.mxu0 %v3041
        %3173 = vmatpush2.bf16.msra.mxu0 %v3040
        %3174 = vmatprep.subr.bf16.mxu0 %v3035
        %3175 = vmatpush2.bf16.msra.mxu0 %v3034
        %3176 = vmatprep.subr.bf16.mxu0 %v3029
        %3177 = vmatpush2.bf16.msra.mxu0 %v3028
        %3178 = vmatprep.subr.bf16.mxu0 %v3023
        %3179 = vmatpush2.bf16.msra.mxu0 %v3022
        %3180 = vmatprep.subr.bf16.mxu0 %v3017
        %3181 = vmatpush2.bf16.msra.mxu0 %v3016
        %3182 = vmatprep.subr.bf16.mxu0 %v3011
        %3183 = vmatpush2.bf16.msra.mxu0 %v3010
        %3184 = vmatprep.subr.bf16.mxu0 %v3005
        %3185 = vmatpush2.bf16.msra.mxu0 %v3004
        %3186 = vmatprep.mubr.bf16.mxu0 %v3065
        %3187 = vmatmul.mubr.bf16.gmra.mxu0 %v3064
        %v3188 = vpop.f32.mrf.mxu0
        %v3189 = vadd.f32 %v3051, %v3188
        %v3190 = vpop.f32.mrf.mxu0
        %v3191 = vadd.f32 %v3051, %v3190
        %v3192 = vpop.f32.mrf.mxu0
        %v3193 = vadd.f32 %v3056, %v3192
        %v3194 = vpop.f32.mrf.mxu0
        %v3195 = vadd.f32 %v3056, %v3194
        %3196 = vdwg.mxu0
        %3197 = vst [vmem:[%s314] sm:$0xff] %v3103
        %3198 = vst [vmem:[%s314 + $0x8] sm:$0xff] %v3105
        %3199 = vst [vmem:[%s314 + $0x10] sm:$0xff] %v3146
        %3200 = vst [vmem:[%s314 + $0x18] sm:$0xff] %v3148
        %3201 = vst [vmem:[%s314 + $0x20] sm:$0xff] %v3189
        %3202 = vst [vmem:[%s314 + $0x28] sm:$0xff] %v3191
        %3203 = vst [vmem:[%s314 + $0x30] sm:$0xff] %v3107
        %3204 = vst [vmem:[%s314 + $0x38] sm:$0xff] %v3109
        %3205 = vst [vmem:[%s314 + $0x40] sm:$0xff] %v3150
        %3206 = vst [vmem:[%s314 + $0x48] sm:$0xff] %v3152
        %3207 = vst [vmem:[%s314 + $0x50] sm:$0xff] %v3193
        %3208 = vst [vmem:[%s314 + $0x58] sm:$0xff] %v3195
        %s3209 = sand.u32 %s200, 1
        %s3210 = scalar_lea.sflag [#allocation4], %s3209
        %s3211 = sand.u32 %s200, 1
        %s3212 = smul.addr %s3211, 96
        %s3213 = scalar_lea.vmem [#allocation5], %s3212
        // Predicated region
        $region53: #{tpu_custom_call.1} parent=47 // pred_check
          %p3214 = pneg %p210
        $region54: #{tpu_custom_call.1} parent=47 // pred_check_branch
          %3216 = sbr.rel (%p3214) target = $region56
        $region55: #{tpu_custom_call.1} parent=47 // pred_region
          %s3217 = smul.u32 6, %s29
          %s3219 = ssub.s32 1536, 1536
          %3220 = vsyncadd %s3210, %s3219
          %s3221 = smul.addr %s28, 12
          %s3222 = sadd.s32 %s3217, %s3221
          %s3223 = smul.addr %s3222, 128
          %s3224 = scalar_lea.hbm %s7, %s3223
          %s3225 = sshll.u32 %s3213, 4
          %s3226 = int_to_ptr.vmem [resolvable:$true] %s3225
          %3231 = dma.vmem_to_hbm [thread:$0]  %s3226, 1536, %s3224, %s3210, 768, 768, 48
        $region56: #{tpu_custom_call.1} parent=47 // pred_fallthru
          _
      $region48: #{tpu_custom_call.1} parent=5 // pred_fallthru
        _
      %p3232 = scmp.le.s32.totalorder 2, %s19
      // Predicated region
      $region57: #{tpu_custom_call.1} parent=5 // pred_check
        %p3233 = pneg %p3232
      $region58: #{tpu_custom_call.1} parent=5 // pred_check_branch
        %3235 = sbr.rel (%p3233) target = $region60
      $region59: #{tpu_custom_call.1} parent=5 // pred_region
        %s3236 = ssub.s32 %s19, 2
        // Predicated region
        $region61: #{tpu_custom_call.1} parent=59 // pred_check
          %p3237 = pneg %p216
        $region62: #{tpu_custom_call.1} parent=59 // pred_check_branch
          %3239 = sbr.rel (%p3237) target = $region64
        $region63: #{tpu_custom_call.1} parent=59 // pred_region
          %s3240 = sand.u32 %s201, 1
          %s3241 = scalar_lea.sflag [#allocation4], %s3240
          %s3242 = sand.u32 %s201, 1
          %s3243 = smul.addr %s3242, 96
          %s3244 = scalar_lea.vmem [#allocation5], %s3243
          %3245 = dma.done %s3241, 1536
        $region64: #{tpu_custom_call.1} parent=59 // pred_fallthru
          _
      $region60: #{tpu_custom_call.1} parent=5 // pred_fallthru
        _
    $region6: #{tpu_custom_call.1} parent=1 // loop_footer
      %s23 = sadd.s32 1, %s19
    $region7: #{tpu_custom_call.1} parent=1 // loop_footer_branch
      %18 = sbr.rel target = $region3
    $region8: #{tpu_custom_call.1} parent=1 // loop_exit
      _
    %3246 = vsyncpa [#allocation3], 1
    %s3247 = scalar_lea.sflag [#allocation3], 1
    %3248 = vsyncpa %s3247, 1
    %3249 = vsyncpa [#allocation4], 1
    %s3250 = scalar_lea.sflag [#allocation4], 1
    %3251 = vsyncpa %s3250, 1

</llo_original>
